<compile_context>
chip_gen: v6e
topology: v6e:2x2x1
jax: 0.10.0
libtpu: 0.0.40
codegen_flags: <defaults>
</compile_context>

<pallas_src>
import jax
import jax.numpy as jnp
from jax.experimental import pallas as pl
from jax.experimental.pallas import tpu as pltpu

_EPS = 1e-5
_LANE = 128
_SUBLANE = 8
_WEIGHT_KEYS = ("w1", "b1", "w2", "b2", "w3", "b3", "w4", "b4")


def _round_up(x, m):
    return ((x + m - 1) // m) * m


def _mlp_kernel(x_ref,
                w1_ref, b1_ref,
                w2_ref, b2_ref,
                w3_ref, b3_ref,
                w4_ref, b4_ref,
                o_ref):
    # Layers 1-3: Linear (BN folded into W/b) -> ReLU.  Dropout is identity (eval mode).
    h = x_ref[...].astype(jnp.bfloat16)
    h = jnp.dot(h, w1_ref[...], preferred_element_type=jnp.float32) + b1_ref[...]
    h = jnp.maximum(h, 0.0).astype(jnp.bfloat16)
    h = jnp.dot(h, w2_ref[...], preferred_element_type=jnp.float32) + b2_ref[...]
    h = jnp.maximum(h, 0.0).astype(jnp.bfloat16)
    h = jnp.dot(h, w3_ref[...], preferred_element_type=jnp.float32) + b3_ref[...]
    h = jnp.maximum(h, 0.0).astype(jnp.bfloat16)
    # Output layer: Linear only (columns zero-padded to a lane-dense multiple of 128).
    o_ref[...] = (jnp.dot(h, w4_ref[...], preferred_element_type=jnp.float32)
                  + b4_ref[...]).astype(o_ref.dtype)


def fold_params(params):
    """Fold eval-mode BatchNorm1d into the preceding Linear; cast weights to bf16;
    pad the output layer columns to a multiple of 128 lanes."""
    folded = {}
    for i in (1, 2, 3):
        w, b = params[f"w{i}"], params[f"b{i}"]
        scale = params[f"gamma{i}"] / jnp.sqrt(params[f"var{i}"] + _EPS)   # (1, dout)
        folded[f"w{i}"] = (w * scale).astype(jnp.bfloat16)
        folded[f"b{i}"] = (b - params[f"mean{i}"]) * scale + params[f"beta{i}"]  # f32
    w4, b4 = params["w4"], params["b4"]
    pad = (-w4.shape[1]) % _LANE
    folded["w4"] = jnp.pad(w4, ((0, 0), (0, pad))).astype(jnp.bfloat16)
    folded["b4"] = jnp.pad(b4, ((0, 0), (0, pad)))
    return folded


def _vmem_capacity_bytes():
    """Per-generation VMEM capacity; conservative (v7x = 64 MiB) if the query fails."""
    try:
        return int(pltpu.get_tpu_info().vmem_capacity_bytes)
    except Exception:
        return 64 << 20


def dnn_model_forward(x, folded, num_class, *, block_b=None, out_dtype=jnp.float32,
                      min_grid_steps=2):
    """x: [B, input_dim] (f32 or bf16). folded: output of fold_params.
    Returns [B, num_class] out_dtype."""
    B, din = x.shape
    n_pad = folded["w4"].shape[1]                                  # 128-padded class dim
    hdims = tuple(int(folded[f"w{i}"].shape[1]) for i in (1, 2, 3))
    x_isize = jnp.dtype(x.dtype).itemsize
    o_isize = jnp.dtype(out_dtype).itemsize

    vmem_cap = _vmem_capacity_bytes()
    vmem_budget = int(0.70 * vmem_cap)                             # headroom vs physical VMEM
    if block_b is None:
        # Bigger tiles on 128 MiB-VMEM chips (v5e/v6e), smaller on 64 MiB v7x.
        block_b = 1024 if vmem_cap >= (96 << 20) else 512

    weight_bytes = sum(int(folded[k].size) * folded[k].dtype.itemsize for k in _WEIGHT_KEYS)

    def footprint(tb, weight_bufs):
        stream = 2 * tb * din * x_isize + 2 * tb * n_pad * o_isize   # double-buffered x / out
        interm = tb * sum(hdims) * 6                                 # f32 result + bf16 copy
        return weight_bufs * weight_bytes + stream + interm

    # Batch tile: multiple of 8 sublanes, capped at block_b, and split so the parallel
    # batch axis has >= min_grid_steps steps (feeds both v7x TensorCores; no-op on v5e/v6e).
    TB = min(block_b, _round_up(B, _SUBLANE))
    if B > _SUBLANE * min_grid_steps:
        TB = min(TB, _round_up(pl.cdiv(B, min_grid_steps), _SUBLANE))
    while TB > _SUBLANE and footprint(TB, 1) > vmem_budget:
        TB = max(_SUBLANE, _round_up(TB // 2, _SUBLANE))
    Bp = _round_up(B, TB)
    if Bp != B:
        x = jnp.pad(x, ((0, Bp - B), (0, 0)))
    grid = (Bp // TB,)

    const_map = lambda i: (0, 0)      # weights/biases: one resident block for all grid steps
    flops = 2 * Bp * sum(int(folded[f"w{i}"].shape[0]) * int(folded[f"w{i}"].shape[1])
                         for i in (1, 2, 3, 4))
    bytes_accessed = (weight_bytes + int(x.size) * x_isize + Bp * n_pad * o_isize)

    def build_call(single_buffer_weights):
        w_kwargs = ({"pipeline_mode": pl.Buffered(1)} if single_buffer_weights else {})
        operands = [x]
        in_specs = [pl.BlockSpec((TB, din), lambda i: (i, 0))]
        for wk, bk in (("w1", "b1"), ("w2", "b2"), ("w3", "b3"), ("w4", "b4")):
            operands += [folded[wk], folded[bk]]
            in_specs += [pl.BlockSpec(folded[wk].shape, const_map, **w_kwargs),
                         pl.BlockSpec(folded[bk].shape, const_map, **w_kwargs)]
        fp = footprint(TB, 1 if single_buffer_weights else 2)
        vmem_limit = max(16 << 20, min(int(fp * 1.3) + (2 << 20), vmem_budget))
        call = pl.pallas_call(
            _mlp_kernel,
            out_shape=jax.ShapeDtypeStruct((Bp, n_pad), out_dtype),
            grid=grid,
            in_specs=in_specs,
            out_specs=pl.BlockSpec((TB, n_pad), lambda i: (i, 0)),
            compiler_params=pltpu.CompilerParams(
                dimension_semantics=("parallel",),
                vmem_limit_bytes=vmem_limit),
            cost_estimate=pl.CostEstimate(flops=int(flops), transcendentals=0,
                                          bytes_accessed=int(bytes_accessed)),
        )
        return call, operands

    try:
        call, operands = build_call(True)          # single-buffered constant weight blocks
        out = call(*operands)
    except Exception:
        call, operands = build_call(False)         # fallback: default double buffering
        out = call(*operands)

    return out[:B, :num_class]


def init_params(key, input_dim, num_class):
    """Deterministic synthetic parameters mirroring the PyTorch module (eval mode)."""
    dims = [(input_dim, 1024), (1024, 256), (256, 128), (128, num_class)]
    keys = jax.random.split(key, 32)
    ki = iter(range(32))
    params = {}
    for idx, (din, dout) in enumerate(dims, start=1):
        bound = 1.0 / jnp.sqrt(din)
        params[f"w{idx}"] = jax.random.uniform(
            keys[next(ki)], (din, dout), jnp.float32, -bound, bound)
        params[f"b{idx}"] = jax.random.uniform(
            keys[next(ki)], (1, dout), jnp.float32, -bound, bound)
        if idx < 4:
            params[f"gamma{idx}"] = 1.0 + 0.1 * jax.random.normal(
                keys[next(ki)], (1, dout), jnp.float32)
            params[f"beta{idx}"] = 0.1 * jax.random.normal(
                keys[next(ki)], (1, dout), jnp.float32)
            params[f"mean{idx}"] = 0.05 * jax.random.normal(
                keys[next(ki)], (1, dout), jnp.float32)
            params[f"var{idx}"] = 1.0 + 0.1 * jnp.abs(
                jax.random.normal(keys[next(ki)], (1, dout), jnp.float32))
    # TODO(synk): Dropout(0.3) is identity here (eval mode); training-mode dropout would need
    # pltpu.prng_seed/prng_random_bits masking inside the kernel.
    return params


def _reference_f32(x, p):
    """Pure-f32 eval-mode forward of the original module."""
    h = x
    for i in (1, 2, 3):
        h = h @ p[f"w{i}"] + p[f"b{i}"]
        h = (h - p[f"mean{i}"]) / jnp.sqrt(p[f"var{i}"] + _EPS) * p[f"gamma{i}"] + p[f"beta{i}"]
        h = jnp.maximum(h, 0.0)
    return h @ p["w4"] + p["b4"]


def _reference_folded_bf16(x, fp, num_class):
    """Same precision recipe as the kernel (bf16 operands, f32 accumulation)."""
    h = x.astype(jnp.bfloat16)
    for i in (1, 2, 3):
        h = jnp.dot(h, fp[f"w{i}"], preferred_element_type=jnp.float32) + fp[f"b{i}"]
        h = jnp.maximum(h, 0.0).astype(jnp.bfloat16)
    out = jnp.dot(h, fp["w4"], preferred_element_type=jnp.float32) + fp["b4"]
    return out[:, :num_class]


if __name__ == "__main__":
    key = jax.random.PRNGKey(0)
    k_param, k_x, k_x2 = jax.random.split(key, 3)

    B, input_dim, num_class = 8, 32, 10
    params = init_params(k_param, input_dim, num_class)
    folded = fold_params(params)

    # Small demo batch (single grid step).
    x = jax.random.normal(k_x, (B, input_dim), jnp.float32)
    out = jax.block_until_ready(dnn_model_forward(x, folded, num_class))
    assert out.shape == (B, num_class)
    ref_bf16 = _reference_folded_bf16(x, folded, num_class)
    assert jnp.allclose(out, ref_bf16, atol=2e-3, rtol=2e-3), "mismatch vs bf16 reference"
    ref_f32 = _reference_f32(x, params)
    assert jnp.allclose(out, ref_f32, atol=1e-1, rtol=1e-1), "mismatch vs f32 reference"

    # Non-multiple batch exercising padding + the >=2-step parallel grid (megacore path).
    B2 = 300
    x2 = jax.random.normal(k_x2, (B2, input_dim), jnp.float32)
    out2 = jax.block_until_ready(dnn_model_forward(x2, folded, num_class))
    assert out2.shape == (B2, num_class)
    ref2 = _reference_folded_bf16(x2, folded, num_class)
    assert jnp.allclose(out2, ref2, atol=2e-3, rtol=2e-3), "mismatch vs bf16 reference (B=300)"

    print("KERNEL_OK")
</pallas_src>

<mosaic_0001>
module attributes {stable_mosaic.version = 11 : i64} {
  func.func @_mlp_kernel(%arg0: i32, %arg1: memref<8x32xf32, #tpu.memory_space<vmem>>, %arg2: memref<32x1024xbf16, #tpu.memory_space<vmem>>, %arg3: memref<1x1024xf32, #tpu.memory_space<vmem>>, %arg4: memref<1024x256xbf16, #tpu.memory_space<vmem>>, %arg5: memref<1x256xf32, #tpu.memory_space<vmem>>, %arg6: memref<256x128xbf16, #tpu.memory_space<vmem>>, %arg7: memref<1x128xf32, #tpu.memory_space<vmem>>, %arg8: memref<128x128xbf16, #tpu.memory_space<vmem>>, %arg9: memref<1x128xf32, #tpu.memory_space<vmem>>, %arg10: memref<8x128xf32, #tpu.memory_space<vmem>>) attributes {dimension_semantics = [#tpu.dimension_semantics<parallel>], iteration_bounds = array<i64: 1>, scalar_prefetch = 0 : i64, scratch_operands = 0 : i64, tpu.core_type = #tpu.core_type<tc>, window_params = [{transform_indices = @transform_0, window_bounds = array<i64: 8, 32>}, {pipeline_mode = #tpu.pipeline_mode<synchronous>, transform_indices = @transform_1, window_bounds = array<i64: 32, 1024>}, {pipeline_mode = #tpu.pipeline_mode<synchronous>, transform_indices = @transform_2, window_bounds = array<i64: 1, 1024>}, {pipeline_mode = #tpu.pipeline_mode<synchronous>, transform_indices = @transform_3, window_bounds = array<i64: 1024, 256>}, {pipeline_mode = #tpu.pipeline_mode<synchronous>, transform_indices = @transform_4, window_bounds = array<i64: 1, 256>}, {pipeline_mode = #tpu.pipeline_mode<synchronous>, transform_indices = @transform_5, window_bounds = array<i64: 256, 128>}, {pipeline_mode = #tpu.pipeline_mode<synchronous>, transform_indices = @transform_6, window_bounds = array<i64: 1, 128>}, {pipeline_mode = #tpu.pipeline_mode<synchronous>, transform_indices = @transform_7, window_bounds = array<i64: 128, 128>}, {pipeline_mode = #tpu.pipeline_mode<synchronous>, transform_indices = @transform_8, window_bounds = array<i64: 1, 128>}, {transform_indices = @transform_9, window_bounds = array<i64: 8, 128>}]} {
    %c0 = arith.constant 0 : index
    %c0_0 = arith.constant 0 : index
    %0 = vector.load %arg1[%c0, %c0_0] : memref<8x32xf32, #tpu.memory_space<vmem>>, vector<8x32xf32>
    %1 = arith.truncf %0 : vector<8x32xf32> to vector<8x32xbf16>
    %c0_1 = arith.constant 0 : index
    %c0_2 = arith.constant 0 : index
    %2 = vector.load %arg2[%c0_1, %c0_2] : memref<32x1024xbf16, #tpu.memory_space<vmem>>, vector<32x1024xbf16>
    %cst = arith.constant dense<0.000000e+00> : vector<8x1024xf32>
    %3 = tpu.matmul %1, %2, %cst {dimension_numbers = #tpu.dot_dimension_numbers<[1], [0], [0], [1], [0, 0, 1, 1], [], []>} : vector<8x32xbf16>, vector<32x1024xbf16>, vector<8x1024xf32> -> vector<8x1024xf32>
    %c0_3 = arith.constant 0 : index
    %c0_4 = arith.constant 0 : index
    %4 = vector.load %arg3[%c0_3, %c0_4] : memref<1x1024xf32, #tpu.memory_space<vmem>>, vector<1x1024xf32>
    %5 = vector.broadcast %4 : vector<1x1024xf32> to vector<8x1024xf32>
    %6 = arith.addf %3, %5 : vector<8x1024xf32>
    %cst_5 = arith.constant 0.000000e+00 : f32
    %7 = vector.broadcast %cst_5 : f32 to vector<8x1024xf32>
    %8 = arith.maximumf %6, %7 : vector<8x1024xf32>
    %9 = arith.truncf %8 : vector<8x1024xf32> to vector<8x1024xbf16>
    %c0_6 = arith.constant 0 : index
    %c0_7 = arith.constant 0 : index
    %10 = vector.load %arg4[%c0_6, %c0_7] : memref<1024x256xbf16, #tpu.memory_space<vmem>>, vector<1024x256xbf16>
    %cst_8 = arith.constant dense<0.000000e+00> : vector<8x256xf32>
    %11 = tpu.matmul %9, %10, %cst_8 {dimension_numbers = #tpu.dot_dimension_numbers<[1], [0], [0], [1], [0, 0, 1, 1], [], []>} : vector<8x1024xbf16>, vector<1024x256xbf16>, vector<8x256xf32> -> vector<8x256xf32>
    %c0_9 = arith.constant 0 : index
    %c0_10 = arith.constant 0 : index
    %12 = vector.load %arg5[%c0_9, %c0_10] : memref<1x256xf32, #tpu.memory_space<vmem>>, vector<1x256xf32>
    %13 = vector.broadcast %12 : vector<1x256xf32> to vector<8x256xf32>
    %14 = arith.addf %11, %13 : vector<8x256xf32>
    %cst_11 = arith.constant 0.000000e+00 : f32
    %15 = vector.broadcast %cst_11 : f32 to vector<8x256xf32>
    %16 = arith.maximumf %14, %15 : vector<8x256xf32>
    %17 = arith.truncf %16 : vector<8x256xf32> to vector<8x256xbf16>
    %c0_12 = arith.constant 0 : index
    %c0_13 = arith.constant 0 : index
    %18 = vector.load %arg6[%c0_12, %c0_13] : memref<256x128xbf16, #tpu.memory_space<vmem>>, vector<256x128xbf16>
    %cst_14 = arith.constant dense<0.000000e+00> : vector<8x128xf32>
    %19 = tpu.matmul %17, %18, %cst_14 {dimension_numbers = #tpu.dot_dimension_numbers<[1], [0], [0], [1], [0, 0, 1, 1], [], []>} : vector<8x256xbf16>, vector<256x128xbf16>, vector<8x128xf32> -> vector<8x128xf32>
    %c0_15 = arith.constant 0 : index
    %c0_16 = arith.constant 0 : index
    %20 = vector.load %arg7[%c0_15, %c0_16] : memref<1x128xf32, #tpu.memory_space<vmem>>, vector<1x128xf32>
    %21 = vector.broadcast %20 : vector<1x128xf32> to vector<8x128xf32>
    %22 = arith.addf %19, %21 : vector<8x128xf32>
    %cst_17 = arith.constant 0.000000e+00 : f32
    %23 = vector.broadcast %cst_17 : f32 to vector<8x128xf32>
    %24 = arith.maximumf %22, %23 : vector<8x128xf32>
    %25 = arith.truncf %24 : vector<8x128xf32> to vector<8x128xbf16>
    %c0_18 = arith.constant 0 : index
    %c0_19 = arith.constant 0 : index
    %26 = vector.load %arg8[%c0_18, %c0_19] : memref<128x128xbf16, #tpu.memory_space<vmem>>, vector<128x128xbf16>
    %cst_20 = arith.constant dense<0.000000e+00> : vector<8x128xf32>
    %27 = tpu.matmul %25, %26, %cst_20 {dimension_numbers = #tpu.dot_dimension_numbers<[1], [0], [0], [1], [0, 0, 1, 1], [], []>} : vector<8x128xbf16>, vector<128x128xbf16>, vector<8x128xf32> -> vector<8x128xf32>
    %c0_21 = arith.constant 0 : index
    %c0_22 = arith.constant 0 : index
    %28 = vector.load %arg9[%c0_21, %c0_22] : memref<1x128xf32, #tpu.memory_space<vmem>>, vector<1x128xf32>
    %29 = vector.broadcast %28 : vector<1x128xf32> to vector<8x128xf32>
    %30 = arith.addf %27, %29 : vector<8x128xf32>
    %c0_23 = arith.constant 0 : index
    %c0_24 = arith.constant 0 : index
    %31 = vector.load %arg10[%c0_23, %c0_24] : memref<8x128xf32, #tpu.memory_space<vmem>>, vector<8x128xf32>
    tpu.vector_store %arg10[%c0_23, %c0_24], %30 {strides = array<i32>} : memref<8x128xf32, #tpu.memory_space<vmem>>, vector<8x128xf32>,
    return
  }
  func.func @transform_0(%arg0: i32) -> (i32, i32) {
    %c0_i32 = arith.constant 0 : i32
    %c0_i32_0 = arith.constant 0 : i32
    return %arg0, %c0_i32 : i32, i32
  }
  func.func @transform_1(%arg0: i32) -> (i32, i32) {
    %c0_i32 = arith.constant 0 : i32
    %c0_i32_0 = arith.constant 0 : i32
    %c0_i32_1 = arith.constant 0 : i32
    return %c0_i32, %c0_i32_0 : i32, i32
  }
  func.func @transform_2(%arg0: i32) -> (i32, i32) {
    %c0_i32 = arith.constant 0 : i32
    %c0_i32_0 = arith.constant 0 : i32
    %c0_i32_1 = arith.constant 0 : i32
    return %c0_i32, %c0_i32_0 : i32, i32
  }
  func.func @transform_3(%arg0: i32) -> (i32, i32) {
    %c0_i32 = arith.constant 0 : i32
    %c0_i32_0 = arith.constant 0 : i32
    %c0_i32_1 = arith.constant 0 : i32
    return %c0_i32, %c0_i32_0 : i32, i32
  }
  func.func @transform_4(%arg0: i32) -> (i32, i32) {
    %c0_i32 = arith.constant 0 : i32
    %c0_i32_0 = arith.constant 0 : i32
    %c0_i32_1 = arith.constant 0 : i32
    return %c0_i32, %c0_i32_0 : i32, i32
  }
  func.func @transform_5(%arg0: i32) -> (i32, i32) {
    %c0_i32 = arith.constant 0 : i32
    %c0_i32_0 = arith.constant 0 : i32
    %c0_i32_1 = arith.constant 0 : i32
    return %c0_i32, %c0_i32_0 : i32, i32
  }
  func.func @transform_6(%arg0: i32) -> (i32, i32) {
    %c0_i32 = arith.constant 0 : i32
    %c0_i32_0 = arith.constant 0 : i32
    %c0_i32_1 = arith.constant 0 : i32
    return %c0_i32, %c0_i32_0 : i32, i32
  }
  func.func @transform_7(%arg0: i32) -> (i32, i32) {
    %c0_i32 = arith.constant 0 : i32
    %c0_i32_0 = arith.constant 0 : i32
    %c0_i32_1 = arith.constant 0 : i32
    return %c0_i32, %c0_i32_0 : i32, i32
  }
  func.func @transform_8(%arg0: i32) -> (i32, i32) {
    %c0_i32 = arith.constant 0 : i32
    %c0_i32_0 = arith.constant 0 : i32
    %c0_i32_1 = arith.constant 0 : i32
    return %c0_i32, %c0_i32_0 : i32, i32
  }
  func.func @transform_9(%arg0: i32) -> (i32, i32) {
    %c0_i32 = arith.constant 0 : i32
    %c0_i32_0 = arith.constant 0 : i32
    return %arg0, %c0_i32 : i32, i32
  }
}

module attributes {stable_mosaic.version = 11 : i64} {
  func.func @_mlp_kernel(%arg0: i32, %arg1: memref<8x32xf32, #tpu.memory_space<vmem>>, %arg2: memref<32x1024xbf16, #tpu.memory_space<vmem>>, %arg3: memref<1x1024xf32, #tpu.memory_space<vmem>>, %arg4: memref<1024x256xbf16, #tpu.memory_space<vmem>>, %arg5: memref<1x256xf32, #tpu.memory_space<vmem>>, %arg6: memref<256x128xbf16, #tpu.memory_space<vmem>>, %arg7: memref<1x128xf32, #tpu.memory_space<vmem>>, %arg8: memref<128x128xbf16, #tpu.memory_space<vmem>>, %arg9: memref<1x128xf32, #tpu.memory_space<vmem>>, %arg10: memref<8x128xf32, #tpu.memory_space<vmem>>) attributes {dimension_semantics = [#tpu.dimension_semantics<parallel>], iteration_bounds = array<i64: 1>, scalar_prefetch = 0 : i64, scratch_operands = 0 : i64, tpu.core_type = #tpu.core_type<tc>, window_params = [{transform_indices = @transform_0, window_bounds = array<i64: 8, 32>}, {pipeline_mode = #tpu.pipeline_mode<synchronous>, transform_indices = @transform_1, window_bounds = array<i64: 32, 1024>}, {pipeline_mode = #tpu.pipeline_mode<synchronous>, transform_indices = @transform_2, window_bounds = array<i64: 1, 1024>}, {pipeline_mode = #tpu.pipeline_mode<synchronous>, transform_indices = @transform_3, window_bounds = array<i64: 1024, 256>}, {pipeline_mode = #tpu.pipeline_mode<synchronous>, transform_indices = @transform_4, window_bounds = array<i64: 1, 256>}, {pipeline_mode = #tpu.pipeline_mode<synchronous>, transform_indices = @transform_5, window_bounds = array<i64: 256, 128>}, {pipeline_mode = #tpu.pipeline_mode<synchronous>, transform_indices = @transform_6, window_bounds = array<i64: 1, 128>}, {pipeline_mode = #tpu.pipeline_mode<synchronous>, transform_indices = @transform_7, window_bounds = array<i64: 128, 128>}, {pipeline_mode = #tpu.pipeline_mode<synchronous>, transform_indices = @transform_8, window_bounds = array<i64: 1, 128>}, {transform_indices = @transform_9, window_bounds = array<i64: 8, 128>}]} {
    %c0 = arith.constant 0 : index
    %c0_0 = arith.constant 0 : index
    %0 = vector.load %arg1[%c0, %c0_0] : memref<8x32xf32, #tpu.memory_space<vmem>>, vector<8x32xf32>
    %1 = arith.truncf %0 : vector<8x32xf32> to vector<8x32xbf16>
    %c0_1 = arith.constant 0 : index
    %c0_2 = arith.constant 0 : index
    %2 = vector.load %arg2[%c0_1, %c0_2] : memref<32x1024xbf16, #tpu.memory_space<vmem>>, vector<32x1024xbf16>
    %cst = arith.constant dense<0.000000e+00> : vector<8x1024xf32>
    %3 = tpu.matmul %1, %2, %cst {dimension_numbers = #tpu.dot_dimension_numbers<[1], [0], [0], [1], [0, 0, 1, 1], [], []>} : vector<8x32xbf16>, vector<32x1024xbf16>, vector<8x1024xf32> -> vector<8x1024xf32>
    %c0_3 = arith.constant 0 : index
    %c0_4 = arith.constant 0 : index
    %4 = vector.load %arg3[%c0_3, %c0_4] : memref<1x1024xf32, #tpu.memory_space<vmem>>, vector<1x1024xf32>
    %5 = vector.broadcast %4 : vector<1x1024xf32> to vector<8x1024xf32>
    %6 = arith.addf %3, %5 : vector<8x1024xf32>
    %cst_5 = arith.constant 0.000000e+00 : f32
    %7 = vector.broadcast %cst_5 : f32 to vector<8x1024xf32>
    %8 = arith.maximumf %6, %7 : vector<8x1024xf32>
    %9 = arith.truncf %8 : vector<8x1024xf32> to vector<8x1024xbf16>
    %c0_6 = arith.constant 0 : index
    %c0_7 = arith.constant 0 : index
    %10 = vector.load %arg4[%c0_6, %c0_7] : memref<1024x256xbf16, #tpu.memory_space<vmem>>, vector<1024x256xbf16>
    %cst_8 = arith.constant dense<0.000000e+00> : vector<8x256xf32>
    %11 = tpu.matmul %9, %10, %cst_8 {dimension_numbers = #tpu.dot_dimension_numbers<[1], [0], [0], [1], [0, 0, 1, 1], [], []>} : vector<8x1024xbf16>, vector<1024x256xbf16>, vector<8x256xf32> -> vector<8x256xf32>
    %c0_9 = arith.constant 0 : index
    %c0_10 = arith.constant 0 : index
    %12 = vector.load %arg5[%c0_9, %c0_10] : memref<1x256xf32, #tpu.memory_space<vmem>>, vector<1x256xf32>
    %13 = vector.broadcast %12 : vector<1x256xf32> to vector<8x256xf32>
    %14 = arith.addf %11, %13 : vector<8x256xf32>
    %cst_11 = arith.constant 0.000000e+00 : f32
    %15 = vector.broadcast %cst_11 : f32 to vector<8x256xf32>
    %16 = arith.maximumf %14, %15 : vector<8x256xf32>
    %17 = arith.truncf %16 : vector<8x256xf32> to vector<8x256xbf16>
    %c0_12 = arith.constant 0 : index
    %c0_13 = arith.constant 0 : index
    %18 = vector.load %arg6[%c0_12, %c0_13] : memref<256x128xbf16, #tpu.memory_space<vmem>>, vector<256x128xbf16>
    %cst_14 = arith.constant dense<0.000000e+00> : vector<8x128xf32>
    %19 = tpu.matmul %17, %18, %cst_14 {dimension_numbers = #tpu.dot_dimension_numbers<[1], [0], [0], [1], [0, 0, 1, 1], [], []>} : vector<8x256xbf16>, vector<256x128xbf16>, vector<8x128xf32> -> vector<8x128xf32>
    %c0_15 = arith.constant 0 : index
    %c0_16 = arith.constant 0 : index
    %20 = vector.load %arg7[%c0_15, %c0_16] : memref<1x128xf32, #tpu.memory_space<vmem>>, vector<1x128xf32>
    %21 = vector.broadcast %20 : vector<1x128xf32> to vector<8x128xf32>
    %22 = arith.addf %19, %21 : vector<8x128xf32>
    %cst_17 = arith.constant 0.000000e+00 : f32
    %23 = vector.broadcast %cst_17 : f32 to vector<8x128xf32>
    %24 = arith.maximumf %22, %23 : vector<8x128xf32>
    %25 = arith.truncf %24 : vector<8x128xf32> to vector<8x128xbf16>
    %c0_18 = arith.constant 0 : index
    %c0_19 = arith.constant 0 : index
    %26 = vector.load %arg8[%c0_18, %c0_19] : memref<128x128xbf16, #tpu.memory_space<vmem>>, vector<128x128xbf16>
    %cst_20 = arith.constant dense<0.000000e+00> : vector<8x128xf32>
    %27 = tpu.matmul %25, %26, %cst_20 {dimension_numbers = #tpu.dot_dimension_numbers<[1], [0], [0], [1], [0, 0, 1, 1], [], []>} : vector<8x128xbf16>, vector<128x128xbf16>, vector<8x128xf32> -> vector<8x128xf32>
    %c0_21 = arith.constant 0 : index
    %c0_22 = arith.constant 0 : index
    %28 = vector.load %arg9[%c0_21, %c0_22] : memref<1x128xf32, #tpu.memory_space<vmem>>, vector<1x128xf32>
    %29 = vector.broadcast %28 : vector<1x128xf32> to vector<8x128xf32>
    %30 = arith.addf %27, %29 : vector<8x128xf32>
    %c0_23 = arith.constant 0 : index
    %c0_24 = arith.constant 0 : index
    %31 = vector.load %arg10[%c0_23, %c0_24] : memref<8x128xf32, #tpu.memory_space<vmem>>, vector<8x128xf32>
    tpu.vector_store %arg10[%c0_23, %c0_24], %30 {strides = array<i32>} : memref<8x128xf32, #tpu.memory_space<vmem>>, vector<8x128xf32>,
    return
  }
  func.func @transform_0(%arg0: i32) -> (i32, i32) {
    %c0_i32 = arith.constant 0 : i32
    %c0_i32_0 = arith.constant 0 : i32
    return %arg0, %c0_i32 : i32, i32
  }
  func.func @transform_1(%arg0: i32) -> (i32, i32) {
    %c0_i32 = arith.constant 0 : i32
    %c0_i32_0 = arith.constant 0 : i32
    %c0_i32_1 = arith.constant 0 : i32
    return %c0_i32, %c0_i32_0 : i32, i32
  }
  func.func @transform_2(%arg0: i32) -> (i32, i32) {
    %c0_i32 = arith.constant 0 : i32
    %c0_i32_0 = arith.constant 0 : i32
    %c0_i32_1 = arith.constant 0 : i32
    return %c0_i32, %c0_i32_0 : i32, i32
  }
  func.func @transform_3(%arg0: i32) -> (i32, i32) {
    %c0_i32 = arith.constant 0 : i32
    %c0_i32_0 = arith.constant 0 : i32
    %c0_i32_1 = arith.constant 0 : i32
    return %c0_i32, %c0_i32_0 : i32, i32
  }
  func.func @transform_4(%arg0: i32) -> (i32, i32) {
    %c0_i32 = arith.constant 0 : i32
    %c0_i32_0 = arith.constant 0 : i32
    %c0_i32_1 = arith.constant 0 : i32
    return %c0_i32, %c0_i32_0 : i32, i32
  }
  func.func @transform_5(%arg0: i32) -> (i32, i32) {
    %c0_i32 = arith.constant 0 : i32
    %c0_i32_0 = arith.constant 0 : i32
    %c0_i32_1 = arith.constant 0 : i32
    return %c0_i32, %c0_i32_0 : i32, i32
  }
  func.func @transform_6(%arg0: i32) -> (i32, i32) {
    %c0_i32 = arith.constant 0 : i32
    %c0_i32_0 = arith.constant 0 : i32
    %c0_i32_1 = arith.constant 0 : i32
    return %c0_i32, %c0_i32_0 : i32, i32
  }
  func.func @transform_7(%arg0: i32) -> (i32, i32) {
    %c0_i32 = arith.constant 0 : i32
    %c0_i32_0 = arith.constant 0 : i32
    %c0_i32_1 = arith.constant 0 : i32
    return %c0_i32, %c0_i32_0 : i32, i32
  }
  func.func @transform_8(%arg0: i32) -> (i32, i32) {
    %c0_i32 = arith.constant 0 : i32
    %c0_i32_0 = arith.constant 0 : i32
    %c0_i32_1 = arith.constant 0 : i32
    return %c0_i32, %c0_i32_0 : i32, i32
  }
  func.func @transform_9(%arg0: i32) -> (i32, i32) {
    %c0_i32 = arith.constant 0 : i32
    %c0_i32_0 = arith.constant 0 : i32
    return %arg0, %c0_i32 : i32, i32
  }
}

</mosaic_0001>

<llo_original>
// kernel: tpu_custom_call.1
$region0: #{tpu_custom_call.1}
  #allocation0 [shape = 'u32[]', space=smem, size = 0x4, offset = 0x4, fixed_abs, tag = 'smem constant byte address 0x4 - core index']
  #allocation1 [shape = 'u32[144,128]{1,0:T(1,128)}', space=vmem, size = 0x12000, scoped, tag = 'internal scratch']
  %s0 = inlined_call_operand.hbm [shape: f32[8,32], index: 0, kind: input, shape index: {}]
  %s1 = inlined_call_operand.hbm [shape: bf16[32,1024], index: 1, kind: input, shape index: {}]
  %s2 = inlined_call_operand.hbm [shape: f32[1,1024], index: 2, kind: input, shape index: {}]
  %s3 = inlined_call_operand.hbm [shape: bf16[1024,256], index: 3, kind: input, shape index: {}]
  %s4 = inlined_call_operand.vmem [shape: f32[1,256], index: 4, kind: input, shape index: {}]
  %s5 = inlined_call_operand.hbm [shape: bf16[256,128], index: 5, kind: input, shape index: {}]
  %s6 = inlined_call_operand.vmem [shape: f32[1,128], index: 6, kind: input, shape index: {}]
  %s7 = inlined_call_operand.hbm [shape: bf16[128,128], index: 7, kind: input, shape index: {}]
  %s8 = inlined_call_operand.vmem [shape: f32[1,128], index: 8, kind: input, shape index: {}]
  %s9 = inlined_call_operand.hbm [shape: f32[8,128], index: 9, kind: output, shape index: {}]
  %s10 = sld [smem:[#allocation0]]
  $region70: #{tpu_custom_call.1} parent=0
    _
  %s12 = ssub.s32 1, %s10
  %s13 = scalar_select 0, %s12, %s10
  $region1: #{tpu_custom_call.1} parent=0
    #allocation2 [shape = 'u8[4096]{0}', space=vmem, size = 0x1000, scoped, tag = 'input window, operand 0, single buffered']
    #allocation3 [shape = 's32[1]{0}', space=sflag, size = 0x4, scoped, tag = 'scoped memory for tpu_custom_call.1']
    #allocation4 [shape = 's32[1]{0}', space=sflag, size = 0x4, scoped, tag = 'scoped memory for tpu_custom_call.1']
    #allocation5 [shape = 'u8[65536]{0}', space=vmem, size = 0x10000, scoped, tag = 'input window, operand 1, single buffered']
    #allocation6 [shape = 's32[1]{0}', space=sflag, size = 0x4, scoped, tag = 'scoped memory for tpu_custom_call.1']
    #allocation7 [shape = 'u8[4096]{0}', space=vmem, size = 0x1000, scoped, tag = 'input window, operand 2, single buffered']
    #allocation8 [shape = 'u8[524288]{0}', space=vmem, size = 0x80000, scoped, tag = 'input window, operand 3, single buffered']
    #allocation9 [shape = 's32[1]{0}', space=sflag, size = 0x4, scoped, tag = 'scoped memory for tpu_custom_call.1']
    #allocation10 [shape = 'u8[65536]{0}', space=vmem, size = 0x10000, scoped, tag = 'input window, operand 5, single buffered']
    #allocation11 [shape = 'u8[32768]{0}', space=vmem, size = 0x8000, scoped, tag = 'input window, operand 7, single buffered']
    #allocation12 [shape = 's32[1]{0}', space=sflag, size = 0x4, scoped, tag = 'scoped memory for tpu_custom_call.1']
    #allocation13 [shape = 'u8[4096]{0}', space=vmem, size = 0x1000, scoped, tag = 'output window, operand 0, single buffered']
    %14 = vsyncpa [#allocation3], 0
    %15 = vsyncpa [#allocation6], 0
    %16 = vsyncpa [#allocation9], 0
    %17 = vsyncpa [#allocation12], 0
    %18 = vsyncpa [#allocation4], 0
    // Predicated region
    $region2: #{tpu_custom_call.1} parent=1 // pred_check
      _
    $region3: #{tpu_custom_call.1} parent=1 // pred_check_branch
      %20 = sbr.rel (0) target = $region5
    $region4: #{tpu_custom_call.1} parent=1 // pred_region
      %s22 = ssub.s32 128, 128
      %23 = vsyncadd [#allocation3], %s22
      %s25 = sshll.u32 [#allocation2], 4
      %s26 = int_to_ptr.vmem [resolvable:$true] %s25
      %28 = dma.hbm_to_vmem [thread:$0]  %s0, 128, %s26, [#allocation3]
    $region5: #{tpu_custom_call.1} parent=1 // pred_fallthru
      _
    // Predicated region
    $region6: #{tpu_custom_call.1} parent=1 // pred_check
      _
    $region7: #{tpu_custom_call.1} parent=1 // pred_check_branch
      %30 = sbr.rel (0) target = $region9
    $region8: #{tpu_custom_call.1} parent=1 // pred_region
      %s32 = ssub.s32 2048, 2048
      %33 = vsyncadd [#allocation6], %s32
      %s34 = sshll.u32 [#allocation5], 4
      %s35 = int_to_ptr.vmem [resolvable:$true] %s34
      %40 = dma.hbm_to_vmem [thread:$0]  %s1, 2048, %s35, [#allocation6], 512, 512, 32
    $region9: #{tpu_custom_call.1} parent=1 // pred_fallthru
      _
    // Predicated region
    $region10: #{tpu_custom_call.1} parent=1 // pred_check
      _
    $region11: #{tpu_custom_call.1} parent=1 // pred_check_branch
      %42 = sbr.rel (0) target = $region13
    $region12: #{tpu_custom_call.1} parent=1 // pred_region
      %s44 = ssub.s32 128, 128
      %45 = vsyncadd [#allocation6], %s44
      %s47 = sshll.u32 [#allocation7], 4
      %s48 = int_to_ptr.vmem [resolvable:$true] %s47
      %50 = dma.hbm_to_vmem [thread:$0]  %s2, 128, %s48, [#allocation6]
    $region13: #{tpu_custom_call.1} parent=1 // pred_fallthru
      _
    // Predicated region
    $region14: #{tpu_custom_call.1} parent=1 // pred_check
      _
    $region15: #{tpu_custom_call.1} parent=1 // pred_check_branch
      %52 = sbr.rel (0) target = $region17
    $region16: #{tpu_custom_call.1} parent=1 // pred_region
      %s54 = ssub.s32 16384, 16384
      %55 = vsyncadd [#allocation9], %s54
      %s56 = sshll.u32 [#allocation8], 4
      %s57 = int_to_ptr.vmem [resolvable:$true] %s56
      %62 = dma.hbm_to_vmem [thread:$0]  %s3, 16384, %s57, [#allocation9], 128, 128, 8
    $region17: #{tpu_custom_call.1} parent=1 // pred_fallthru
      _
    // Predicated region
    $region18: #{tpu_custom_call.1} parent=1 // pred_check
      _
    $region19: #{tpu_custom_call.1} parent=1 // pred_check_branch
      %64 = sbr.rel (0) target = $region21
    $region20: #{tpu_custom_call.1} parent=1 // pred_region
      _
    $region21: #{tpu_custom_call.1} parent=1 // pred_fallthru
      _
    // Predicated region
    $region22: #{tpu_custom_call.1} parent=1 // pred_check
      _
    $region23: #{tpu_custom_call.1} parent=1 // pred_check_branch
      %66 = sbr.rel (0) target = $region25
    $region24: #{tpu_custom_call.1} parent=1 // pred_region
      %s68 = ssub.s32 2048, 2048
      %69 = vsyncadd [#allocation9], %s68
      %s70 = sshll.u32 [#allocation10], 4
      %s71 = int_to_ptr.vmem [resolvable:$true] %s70
      %76 = dma.hbm_to_vmem [thread:$0]  %s5, 2048, %s71, [#allocation9], 64, 64, 4
    $region25: #{tpu_custom_call.1} parent=1 // pred_fallthru
      _
    // Predicated region
    $region26: #{tpu_custom_call.1} parent=1 // pred_check
      _
    $region27: #{tpu_custom_call.1} parent=1 // pred_check_branch
      %78 = sbr.rel (0) target = $region29
    $region28: #{tpu_custom_call.1} parent=1 // pred_region
      _
    $region29: #{tpu_custom_call.1} parent=1 // pred_fallthru
      _
    // Predicated region
    $region30: #{tpu_custom_call.1} parent=1 // pred_check
      _
    $region31: #{tpu_custom_call.1} parent=1 // pred_check_branch
      %80 = sbr.rel (0) target = $region33
    $region32: #{tpu_custom_call.1} parent=1 // pred_region
      %s82 = ssub.s32 1024, 1024
      %83 = vsyncadd [#allocation12], %s82
      %s84 = sshll.u32 [#allocation11], 4
      %s85 = int_to_ptr.vmem [resolvable:$true] %s84
      %90 = dma.hbm_to_vmem [thread:$0]  %s7, 1024, %s85, [#allocation12], 64, 64, 4
    $region33: #{tpu_custom_call.1} parent=1 // pred_fallthru
      _
    // Predicated region
    $region34: #{tpu_custom_call.1} parent=1 // pred_check
      _
    $region35: #{tpu_custom_call.1} parent=1 // pred_check_branch
      %92 = sbr.rel (0) target = $region37
    $region36: #{tpu_custom_call.1} parent=1 // pred_region
      _
    $region37: #{tpu_custom_call.1} parent=1 // pred_fallthru
      _
    // Predicated region
    $region38: #{tpu_custom_call.1} parent=1 // pred_check
      _
    $region39: #{tpu_custom_call.1} parent=1 // pred_check_branch
      %94 = sbr.rel (0) target = $region41
    $region40: #{tpu_custom_call.1} parent=1 // pred_region
      %95 = dma.done [#allocation3], 128
    $region41: #{tpu_custom_call.1} parent=1 // pred_fallthru
      _
    // Predicated region
    $region42: #{tpu_custom_call.1} parent=1 // pred_check
      _
    $region43: #{tpu_custom_call.1} parent=1 // pred_check_branch
      %97 = sbr.rel (0) target = $region45
    $region44: #{tpu_custom_call.1} parent=1 // pred_region
      %98 = dma.done [#allocation6], 2048
    $region45: #{tpu_custom_call.1} parent=1 // pred_fallthru
      _
    // Predicated region
    $region46: #{tpu_custom_call.1} parent=1 // pred_check
      _
    $region47: #{tpu_custom_call.1} parent=1 // pred_check_branch
      %100 = sbr.rel (0) target = $region49
    $region48: #{tpu_custom_call.1} parent=1 // pred_region
      %101 = dma.done [#allocation6], 128
    $region49: #{tpu_custom_call.1} parent=1 // pred_fallthru
      _
    // Predicated region
    $region50: #{tpu_custom_call.1} parent=1 // pred_check
      _
    $region51: #{tpu_custom_call.1} parent=1 // pred_check_branch
      %103 = sbr.rel (0) target = $region53
    $region52: #{tpu_custom_call.1} parent=1 // pred_region
      %104 = dma.done [#allocation9], 16384
    $region53: #{tpu_custom_call.1} parent=1 // pred_fallthru
      _
    // Predicated region
    $region54: #{tpu_custom_call.1} parent=1 // pred_check
      _
    $region55: #{tpu_custom_call.1} parent=1 // pred_check_branch
      %106 = sbr.rel (0) target = $region57
    $region56: #{tpu_custom_call.1} parent=1 // pred_region
      %107 = dma.done [#allocation9], 2048
    $region57: #{tpu_custom_call.1} parent=1 // pred_fallthru
      _
    // Predicated region
    $region58: #{tpu_custom_call.1} parent=1 // pred_check
      _
    $region59: #{tpu_custom_call.1} parent=1 // pred_check_branch
      %109 = sbr.rel (0) target = $region61
    $region60: #{tpu_custom_call.1} parent=1 // pred_region
      %110 = dma.done [#allocation12], 1024
    $region61: #{tpu_custom_call.1} parent=1 // pred_fallthru
      _
    %v112 = vld [vmem:[#allocation2] sm:$0xff]
    %v113 = vpack.c.bf16 %v112, %v112
    %v114 = vld [vmem:[#allocation5] sm:$0xff]
    %v115 = vld [vmem:[#allocation5 + $0x8] sm:$0xff]
    %v116 = vld [vmem:[#allocation5 + $0x10] sm:$0xff]
    %v117 = vld [vmem:[#allocation5 + $0x18] sm:$0xff]
    %v118 = vld [vmem:[#allocation5 + $0x20] sm:$0xff]
    %v119 = vld [vmem:[#allocation5 + $0x28] sm:$0xff]
    %v120 = vld [vmem:[#allocation5 + $0x30] sm:$0xff]
    %v121 = vld [vmem:[#allocation5 + $0x38] sm:$0xff]
    %v122 = vld [vmem:[#allocation5 + $0x40] sm:$0xff]
    %v123 = vld [vmem:[#allocation5 + $0x48] sm:$0xff]
    %v124 = vld [vmem:[#allocation5 + $0x50] sm:$0xff]
    %v125 = vld [vmem:[#allocation5 + $0x58] sm:$0xff]
    %v126 = vld [vmem:[#allocation5 + $0x60] sm:$0xff]
    %v127 = vld [vmem:[#allocation5 + $0x68] sm:$0xff]
    %v128 = vld [vmem:[#allocation5 + $0x70] sm:$0xff]
    %v129 = vld [vmem:[#allocation5 + $0x78] sm:$0xff]
    %v130 = vld [vmem:[#allocation7] sm:$0xff]
    %v132 = vlaneseq
    %v133 = vshrl.u32 %v132, 7
    %v134 = vsub.s32 0, %v133
    %v135 = vrot.slane %v130, %v134
    %v136 = vlaneseq
    %v137 = vshrl.u32 %v136, 7
    %v138 = vsub.s32 1, %v137
    %v139 = vrot.slane %v130, %v138
    %v140 = vlaneseq
    %v141 = vshrl.u32 %v140, 7
    %v142 = vsub.s32 2, %v141
    %v143 = vrot.slane %v130, %v142
    %v144 = vlaneseq
    %v145 = vshrl.u32 %v144, 7
    %v146 = vsub.s32 3, %v145
    %v147 = vrot.slane %v130, %v146
    %v148 = vlaneseq
    %v149 = vshrl.u32 %v148, 7
    %v150 = vsub.s32 4, %v149
    %v151 = vrot.slane %v130, %v150
    %v152 = vlaneseq
    %v153 = vshrl.u32 %v152, 7
    %v154 = vsub.s32 5, %v153
    %v155 = vrot.slane %v130, %v154
    %v156 = vlaneseq
    %v157 = vshrl.u32 %v156, 7
    %v158 = vsub.s32 6, %v157
    %v159 = vrot.slane %v130, %v158
    %v160 = vlaneseq
    %v161 = vshrl.u32 %v160, 7
    %v162 = vsub.s32 7, %v161
    %v163 = vrot.slane %v130, %v162
    %v188 = vunpack.c.l.b16 %v114
    %v189 = vunpack.c.h.b16 %v114
    %v190 = vunpack.c.l.b16 %v115
    %v191 = vunpack.c.h.b16 %v115
    %v192 = vunpack.c.l.b16 %v116
    %v193 = vunpack.c.h.b16 %v116
    %v194 = vunpack.c.l.b16 %v117
    %v195 = vunpack.c.h.b16 %v117
    %v196 = vunpack.c.l.b16 %v118
    %v197 = vunpack.c.h.b16 %v118
    %v198 = vunpack.c.l.b16 %v119
    %v199 = vunpack.c.h.b16 %v119
    %v200 = vunpack.c.l.b16 %v120
    %v201 = vunpack.c.h.b16 %v120
    %v202 = vunpack.c.l.b16 %v121
    %v203 = vunpack.c.h.b16 %v121
    %v204 = vunpack.c.l.b16 %v122
    %v205 = vunpack.c.h.b16 %v122
    %v206 = vunpack.c.l.b16 %v123
    %v207 = vunpack.c.h.b16 %v123
    %v208 = vunpack.c.l.b16 %v124
    %v209 = vunpack.c.h.b16 %v124
    %v210 = vunpack.c.l.b16 %v125
    %v211 = vunpack.c.h.b16 %v125
    %v212 = vunpack.c.l.b16 %v126
    %v213 = vunpack.c.h.b16 %v126
    %v214 = vunpack.c.l.b16 %v127
    %v215 = vunpack.c.h.b16 %v127
    %v216 = vunpack.c.l.b16 %v128
    %v217 = vunpack.c.h.b16 %v128
    %v218 = vunpack.c.l.b16 %v129
    %v219 = vunpack.c.h.b16 %v129
    %v220 = vpack.c.b16 %v196, %v188
    %v221 = vpack.c.b16 %v197, %v189
    %v222 = vpack.c.b16 %v198, %v190
    %v223 = vpack.c.b16 %v199, %v191
    %v224 = vpack.c.b16 %v200, %v192
    %v225 = vpack.c.b16 %v201, %v193
    %v226 = vpack.c.b16 %v202, %v194
    %v227 = vpack.c.b16 %v203, %v195
    %v228 = vpack.c.b16 %v212, %v204
    %v229 = vpack.c.b16 %v213, %v205
    %v230 = vpack.c.b16 %v214, %v206
    %v231 = vpack.c.b16 %v215, %v207
    %v232 = vpack.c.b16 %v216, %v208
    %v233 = vpack.c.b16 %v217, %v209
    %v234 = vpack.c.b16 %v218, %v210
    %v235 = vpack.c.b16 %v219, %v211
    %vm252 = vcmask 261120
    %v254 = vsel %vm252, %v113, 0
    %256 = vmatprep.subr.bf16.mxu0 0
    %257 = vmatpush1.bf16.msra.mxu0 0
    %258 = vmatprep.subr.bf16.mxu0 0
    %259 = vmatpush1.bf16.msra.mxu0 0
    %260 = vmatprep.subr.bf16.mxu0 0
    %261 = vmatpush1.bf16.msra.mxu0 0
    %262 = vmatprep.subr.bf16.mxu0 0
    %263 = vmatpush1.bf16.msra.mxu0 0
    %264 = vmatprep.subr.bf16.mxu0 0
    %265 = vmatpush1.bf16.msra.mxu0 0
    %266 = vmatprep.subr.bf16.mxu0 0
    %267 = vmatpush1.bf16.msra.mxu0 0
    %268 = vmatprep.subr.bf16.mxu0 %v229
    %269 = vmatpush1.bf16.msra.mxu0 %v228
    %270 = vmatprep.subr.bf16.mxu0 %v221
    %271 = vmatpush1.bf16.msra.mxu0 %v220
    %272 = vmatprep.subr.bf16.mxu0 0
    %273 = vmatpush2.bf16.msra.mxu0 0
    %274 = vmatprep.subr.bf16.mxu0 0
    %275 = vmatpush2.bf16.msra.mxu0 0
    %276 = vmatprep.subr.bf16.mxu0 0
    %277 = vmatpush2.bf16.msra.mxu0 0
    %278 = vmatprep.subr.bf16.mxu0 0
    %279 = vmatpush2.bf16.msra.mxu0 0
    %280 = vmatprep.subr.bf16.mxu0 0
    %281 = vmatpush2.bf16.msra.mxu0 0
    %282 = vmatprep.subr.bf16.mxu0 0
    %283 = vmatpush2.bf16.msra.mxu0 0
    %284 = vmatprep.subr.bf16.mxu0 0
    %285 = vmatpush2.bf16.msra.mxu0 0
    %286 = vmatprep.subr.bf16.mxu0 0
    %287 = vmatpush2.bf16.msra.mxu0 0
    %288 = vmatprep.mubr.bf16.mxu0 0
    %289 = vmatmul.mubr.bf16.gmra.mxu0 %v254
    %v290 = vpop.f32.mrf.mxu0
    %v291 = vadd.f32 %v135, %v290
    %v292 = vpop.f32.mrf.mxu0
    %v293 = vadd.f32 %v139, %v292
    %v294 = vpop.f32.mrf.mxu0
    %v295 = vpop.f32.mrf.mxu0
    %296 = vdwg.mxu0
    %297 = vmatprep.subr.bf16.mxu0 0
    %298 = vmatpush1.bf16.msra.mxu0 0
    %299 = vmatprep.subr.bf16.mxu0 0
    %300 = vmatpush1.bf16.msra.mxu0 0
    %301 = vmatprep.subr.bf16.mxu0 0
    %302 = vmatpush1.bf16.msra.mxu0 0
    %303 = vmatprep.subr.bf16.mxu0 0
    %304 = vmatpush1.bf16.msra.mxu0 0
    %305 = vmatprep.subr.bf16.mxu0 0
    %306 = vmatpush1.bf16.msra.mxu0 0
    %307 = vmatprep.subr.bf16.mxu0 0
    %308 = vmatpush1.bf16.msra.mxu0 0
    %309 = vmatprep.subr.bf16.mxu0 %v231
    %310 = vmatpush1.bf16.msra.mxu0 %v230
    %311 = vmatprep.subr.bf16.mxu0 %v223
    %312 = vmatpush1.bf16.msra.mxu0 %v222
    %313 = vmatprep.subr.bf16.mxu0 0
    %314 = vmatpush2.bf16.msra.mxu0 0
    %315 = vmatprep.subr.bf16.mxu0 0
    %316 = vmatpush2.bf16.msra.mxu0 0
    %317 = vmatprep.subr.bf16.mxu0 0
    %318 = vmatpush2.bf16.msra.mxu0 0
    %319 = vmatprep.subr.bf16.mxu0 0
    %320 = vmatpush2.bf16.msra.mxu0 0
    %321 = vmatprep.subr.bf16.mxu0 0
    %322 = vmatpush2.bf16.msra.mxu0 0
    %323 = vmatprep.subr.bf16.mxu0 0
    %324 = vmatpush2.bf16.msra.mxu0 0
    %325 = vmatprep.subr.bf16.mxu0 0
    %326 = vmatpush2.bf16.msra.mxu0 0
    %327 = vmatprep.subr.bf16.mxu0 0
    %328 = vmatpush2.bf16.msra.mxu0 0
    %329 = vmatprep.mubr.bf16.mxu0 0
    %330 = vmatmul.mubr.bf16.gmra.mxu0 %v254
    %v331 = vpop.f32.mrf.mxu0
    %v332 = vadd.f32 %v143, %v331
    %v333 = vpop.f32.mrf.mxu0
    %v334 = vadd.f32 %v147, %v333
    %v335 = vpop.f32.mrf.mxu0
    %v336 = vpop.f32.mrf.mxu0
    %337 = vdwg.mxu0
    %338 = vmatprep.subr.bf16.mxu0 0
    %339 = vmatpush1.bf16.msra.mxu0 0
    %340 = vmatprep.subr.bf16.mxu0 0
    %341 = vmatpush1.bf16.msra.mxu0 0
    %342 = vmatprep.subr.bf16.mxu0 0
    %343 = vmatpush1.bf16.msra.mxu0 0
    %344 = vmatprep.subr.bf16.mxu0 0
    %345 = vmatpush1.bf16.msra.mxu0 0
    %346 = vmatprep.subr.bf16.mxu0 0
    %347 = vmatpush1.bf16.msra.mxu0 0
    %348 = vmatprep.subr.bf16.mxu0 0
    %349 = vmatpush1.bf16.msra.mxu0 0
    %350 = vmatprep.subr.bf16.mxu0 %v233
    %351 = vmatpush1.bf16.msra.mxu0 %v232
    %352 = vmatprep.subr.bf16.mxu0 %v225
    %353 = vmatpush1.bf16.msra.mxu0 %v224
    %354 = vmatprep.subr.bf16.mxu0 0
    %355 = vmatpush2.bf16.msra.mxu0 0
    %356 = vmatprep.subr.bf16.mxu0 0
    %357 = vmatpush2.bf16.msra.mxu0 0
    %358 = vmatprep.subr.bf16.mxu0 0
    %359 = vmatpush2.bf16.msra.mxu0 0
    %360 = vmatprep.subr.bf16.mxu0 0
    %361 = vmatpush2.bf16.msra.mxu0 0
    %362 = vmatprep.subr.bf16.mxu0 0
    %363 = vmatpush2.bf16.msra.mxu0 0
    %364 = vmatprep.subr.bf16.mxu0 0
    %365 = vmatpush2.bf16.msra.mxu0 0
    %366 = vmatprep.subr.bf16.mxu0 0
    %367 = vmatpush2.bf16.msra.mxu0 0
    %368 = vmatprep.subr.bf16.mxu0 0
    %369 = vmatpush2.bf16.msra.mxu0 0
    %370 = vmatprep.mubr.bf16.mxu0 0
    %371 = vmatmul.mubr.bf16.gmra.mxu0 %v254
    %v372 = vpop.f32.mrf.mxu0
    %v373 = vadd.f32 %v151, %v372
    %v374 = vpop.f32.mrf.mxu0
    %v375 = vadd.f32 %v155, %v374
    %v376 = vpop.f32.mrf.mxu0
    %v377 = vpop.f32.mrf.mxu0
    %378 = vdwg.mxu0
    %379 = vmatprep.subr.bf16.mxu0 0
    %380 = vmatpush1.bf16.msra.mxu0 0
    %381 = vmatprep.subr.bf16.mxu0 0
    %382 = vmatpush1.bf16.msra.mxu0 0
    %383 = vmatprep.subr.bf16.mxu0 0
    %384 = vmatpush1.bf16.msra.mxu0 0
    %385 = vmatprep.subr.bf16.mxu0 0
    %386 = vmatpush1.bf16.msra.mxu0 0
    %387 = vmatprep.subr.bf16.mxu0 0
    %388 = vmatpush1.bf16.msra.mxu0 0
    %389 = vmatprep.subr.bf16.mxu0 0
    %390 = vmatpush1.bf16.msra.mxu0 0
    %391 = vmatprep.subr.bf16.mxu0 %v235
    %392 = vmatpush1.bf16.msra.mxu0 %v234
    %393 = vmatprep.subr.bf16.mxu0 %v227
    %394 = vmatpush1.bf16.msra.mxu0 %v226
    %395 = vmatprep.subr.bf16.mxu0 0
    %396 = vmatpush2.bf16.msra.mxu0 0
    %397 = vmatprep.subr.bf16.mxu0 0
    %398 = vmatpush2.bf16.msra.mxu0 0
    %399 = vmatprep.subr.bf16.mxu0 0
    %400 = vmatpush2.bf16.msra.mxu0 0
    %401 = vmatprep.subr.bf16.mxu0 0
    %402 = vmatpush2.bf16.msra.mxu0 0
    %403 = vmatprep.subr.bf16.mxu0 0
    %404 = vmatpush2.bf16.msra.mxu0 0
    %405 = vmatprep.subr.bf16.mxu0 0
    %406 = vmatpush2.bf16.msra.mxu0 0
    %407 = vmatprep.subr.bf16.mxu0 0
    %408 = vmatpush2.bf16.msra.mxu0 0
    %409 = vmatprep.subr.bf16.mxu0 0
    %410 = vmatpush2.bf16.msra.mxu0 0
    %411 = vmatprep.mubr.bf16.mxu0 0
    %412 = vmatmul.mubr.bf16.gmra.mxu0 %v254
    %v413 = vpop.f32.mrf.mxu0
    %v414 = vadd.f32 %v159, %v413
    %v415 = vpop.f32.mrf.mxu0
    %v416 = vadd.f32 %v163, %v415
    %v417 = vpop.f32.mrf.mxu0
    %v418 = vpop.f32.mrf.mxu0
    %419 = vdwg.mxu0
    %v420 = vmax.f32 %v291, 0.0
    %v421 = vmax.f32 %v293, 0.0
    %v422 = vmax.f32 %v332, 0.0
    %v423 = vmax.f32 %v334, 0.0
    %v424 = vmax.f32 %v373, 0.0
    %v425 = vmax.f32 %v375, 0.0
    %v426 = vmax.f32 %v414, 0.0
    %v427 = vmax.f32 %v416, 0.0
    %v428 = vpack.c.bf16 %v420, %v420
    %v429 = vpack.c.bf16 %v421, %v421
    %v430 = vpack.c.bf16 %v422, %v422
    %v431 = vpack.c.bf16 %v423, %v423
    %v432 = vpack.c.bf16 %v424, %v424
    %v433 = vpack.c.bf16 %v425, %v425
    %v434 = vpack.c.bf16 %v426, %v426
    %v435 = vpack.c.bf16 %v427, %v427
    %v436 = vld [vmem:[#allocation8] sm:$0xff]
    %v437 = vld [vmem:[#allocation8 + $0x8] sm:$0xff]
    %v438 = vld [vmem:[#allocation8 + $0x10] sm:$0xff]
    %v439 = vld [vmem:[#allocation8 + $0x18] sm:$0xff]
    %v440 = vld [vmem:[#allocation8 + $0x20] sm:$0xff]
    %v441 = vld [vmem:[#allocation8 + $0x28] sm:$0xff]
    %v442 = vld [vmem:[#allocation8 + $0x30] sm:$0xff]
    %v443 = vld [vmem:[#allocation8 + $0x38] sm:$0xff]
    %v444 = vld [vmem:[#allocation8 + $0x40] sm:$0xff]
    %v445 = vld [vmem:[#allocation8 + $0x48] sm:$0xff]
    %v446 = vld [vmem:[#allocation8 + $0x50] sm:$0xff]
    %v447 = vld [vmem:[#allocation8 + $0x58] sm:$0xff]
    %v448 = vld [vmem:[#allocation8 + $0x60] sm:$0xff]
    %v449 = vld [vmem:[#allocation8 + $0x68] sm:$0xff]
    %v450 = vld [vmem:[#allocation8 + $0x70] sm:$0xff]
    %v451 = vld [vmem:[#allocation8 + $0x78] sm:$0xff]
    %v452 = vld [vmem:[#allocation8 + $0x80] sm:$0xff]
    %v453 = vld [vmem:[#allocation8 + $0x88] sm:$0xff]
    %v454 = vld [vmem:[#allocation8 + $0x90] sm:$0xff]
    %v455 = vld [vmem:[#allocation8 + $0x98] sm:$0xff]
    %v456 = vld [vmem:[#allocation8 + $0xa0] sm:$0xff]
    %v457 = vld [vmem:[#allocation8 + $0xa8] sm:$0xff]
    %v458 = vld [vmem:[#allocation8 + $0xb0] sm:$0xff]
    %v459 = vld [vmem:[#allocation8 + $0xb8] sm:$0xff]
    %v460 = vld [vmem:[#allocation8 + $0xc0] sm:$0xff]
    %v461 = vld [vmem:[#allocation8 + $0xc8] sm:$0xff]
    %v462 = vld [vmem:[#allocation8 + $0xd0] sm:$0xff]
    %v463 = vld [vmem:[#allocation8 + $0xd8] sm:$0xff]
    %v464 = vld [vmem:[#allocation8 + $0xe0] sm:$0xff]
    %v465 = vld [vmem:[#allocation8 + $0xe8] sm:$0xff]
    %v466 = vld [vmem:[#allocation8 + $0xf0] sm:$0xff]
    %v467 = vld [vmem:[#allocation8 + $0xf8] sm:$0xff]
    %v468 = vld [vmem:[#allocation8 + $0x100] sm:$0xff]
    %v469 = vld [vmem:[#allocation8 + $0x108] sm:$0xff]
    %v470 = vld [vmem:[#allocation8 + $0x110] sm:$0xff]
    %v471 = vld [vmem:[#allocation8 + $0x118] sm:$0xff]
    %v472 = vld [vmem:[#allocation8 + $0x120] sm:$0xff]
    %v473 = vld [vmem:[#allocation8 + $0x128] sm:$0xff]
    %v474 = vld [vmem:[#allocation8 + $0x130] sm:$0xff]
    %v475 = vld [vmem:[#allocation8 + $0x138] sm:$0xff]
    %v476 = vld [vmem:[#allocation8 + $0x140] sm:$0xff]
    %v477 = vld [vmem:[#allocation8 + $0x148] sm:$0xff]
    %v478 = vld [vmem:[#allocation8 + $0x150] sm:$0xff]
    %v479 = vld [vmem:[#allocation8 + $0x158] sm:$0xff]
    %v480 = vld [vmem:[#allocation8 + $0x160] sm:$0xff]
    %v481 = vld [vmem:[#allocation8 + $0x168] sm:$0xff]
    %v482 = vld [vmem:[#allocation8 + $0x170] sm:$0xff]
    %v483 = vld [vmem:[#allocation8 + $0x178] sm:$0xff]
    %v484 = vld [vmem:[#allocation8 + $0x180] sm:$0xff]
    %v485 = vld [vmem:[#allocation8 + $0x188] sm:$0xff]
    %v486 = vld [vmem:[#allocation8 + $0x190] sm:$0xff]
    %v487 = vld [vmem:[#allocation8 + $0x198] sm:$0xff]
    %v488 = vld [vmem:[#allocation8 + $0x1a0] sm:$0xff]
    %v489 = vld [vmem:[#allocation8 + $0x1a8] sm:$0xff]
    %v490 = vld [vmem:[#allocation8 + $0x1b0] sm:$0xff]
    %v491 = vld [vmem:[#allocation8 + $0x1b8] sm:$0xff]
    %v492 = vld [vmem:[#allocation8 + $0x1c0] sm:$0xff]
    %v493 = vld [vmem:[#allocation8 + $0x1c8] sm:$0xff]
    %v494 = vld [vmem:[#allocation8 + $0x1d0] sm:$0xff]
    %v495 = vld [vmem:[#allocation8 + $0x1d8] sm:$0xff]
    %v496 = vld [vmem:[#allocation8 + $0x1e0] sm:$0xff]
    %v497 = vld [vmem:[#allocation8 + $0x1e8] sm:$0xff]
    %v498 = vld [vmem:[#allocation8 + $0x1f0] sm:$0xff]
    %v499 = vld [vmem:[#allocation8 + $0x1f8] sm:$0xff]
    %v500 = vld [vmem:[#allocation8 + $0x200] sm:$0xff]
    %v501 = vld [vmem:[#allocation8 + $0x208] sm:$0xff]
    %v502 = vld [vmem:[#allocation8 + $0x210] sm:$0xff]
    %v503 = vld [vmem:[#allocation8 + $0x218] sm:$0xff]
    %v504 = vld [vmem:[#allocation8 + $0x220] sm:$0xff]
    %v505 = vld [vmem:[#allocation8 + $0x228] sm:$0xff]
    %v506 = vld [vmem:[#allocation8 + $0x230] sm:$0xff]
    %v507 = vld [vmem:[#allocation8 + $0x238] sm:$0xff]
    %v508 = vld [vmem:[#allocation8 + $0x240] sm:$0xff]
    %v509 = vld [vmem:[#allocation8 + $0x248] sm:$0xff]
    %v510 = vld [vmem:[#allocation8 + $0x250] sm:$0xff]
    %v511 = vld [vmem:[#allocation8 + $0x258] sm:$0xff]
    %v512 = vld [vmem:[#allocation8 + $0x260] sm:$0xff]
    %v513 = vld [vmem:[#allocation8 + $0x268] sm:$0xff]
    %v514 = vld [vmem:[#allocation8 + $0x270] sm:$0xff]
    %v515 = vld [vmem:[#allocation8 + $0x278] sm:$0xff]
    %v516 = vld [vmem:[#allocation8 + $0x280] sm:$0xff]
    %v517 = vld [vmem:[#allocation8 + $0x288] sm:$0xff]
    %v518 = vld [vmem:[#allocation8 + $0x290] sm:$0xff]
    %v519 = vld [vmem:[#allocation8 + $0x298] sm:$0xff]
    %v520 = vld [vmem:[#allocation8 + $0x2a0] sm:$0xff]
    %v521 = vld [vmem:[#allocation8 + $0x2a8] sm:$0xff]
    %v522 = vld [vmem:[#allocation8 + $0x2b0] sm:$0xff]
    %v523 = vld [vmem:[#allocation8 + $0x2b8] sm:$0xff]
    %v524 = vld [vmem:[#allocation8 + $0x2c0] sm:$0xff]
    %v525 = vld [vmem:[#allocation8 + $0x2c8] sm:$0xff]
    %v526 = vld [vmem:[#allocation8 + $0x2d0] sm:$0xff]
    %v527 = vld [vmem:[#allocation8 + $0x2d8] sm:$0xff]
    %v528 = vld [vmem:[#allocation8 + $0x2e0] sm:$0xff]
    %v529 = vld [vmem:[#allocation8 + $0x2e8] sm:$0xff]
    %v530 = vld [vmem:[#allocation8 + $0x2f0] sm:$0xff]
    %v531 = vld [vmem:[#allocation8 + $0x2f8] sm:$0xff]
    %v532 = vld [vmem:[#allocation8 + $0x300] sm:$0xff]
    %v533 = vld [vmem:[#allocation8 + $0x308] sm:$0xff]
    %v534 = vld [vmem:[#allocation8 + $0x310] sm:$0xff]
    %v535 = vld [vmem:[#allocation8 + $0x318] sm:$0xff]
    %v536 = vld [vmem:[#allocation8 + $0x320] sm:$0xff]
    %v537 = vld [vmem:[#allocation8 + $0x328] sm:$0xff]
    %v538 = vld [vmem:[#allocation8 + $0x330] sm:$0xff]
    %v539 = vld [vmem:[#allocation8 + $0x338] sm:$0xff]
    %v540 = vld [vmem:[#allocation8 + $0x340] sm:$0xff]
    %v541 = vld [vmem:[#allocation8 + $0x348] sm:$0xff]
    %v542 = vld [vmem:[#allocation8 + $0x350] sm:$0xff]
    %v543 = vld [vmem:[#allocation8 + $0x358] sm:$0xff]
    %v544 = vld [vmem:[#allocation8 + $0x360] sm:$0xff]
    %v545 = vld [vmem:[#allocation8 + $0x368] sm:$0xff]
    %v546 = vld [vmem:[#allocation8 + $0x370] sm:$0xff]
    %v547 = vld [vmem:[#allocation8 + $0x378] sm:$0xff]
    %v548 = vld [vmem:[#allocation8 + $0x380] sm:$0xff]
    %v549 = vld [vmem:[#allocation8 + $0x388] sm:$0xff]
    %v550 = vld [vmem:[#allocation8 + $0x390] sm:$0xff]
    %v551 = vld [vmem:[#allocation8 + $0x398] sm:$0xff]
    %v552 = vld [vmem:[#allocation8 + $0x3a0] sm:$0xff]
    %v553 = vld [vmem:[#allocation8 + $0x3a8] sm:$0xff]
    %v554 = vld [vmem:[#allocation8 + $0x3b0] sm:$0xff]
    %v555 = vld [vmem:[#allocation8 + $0x3b8] sm:$0xff]
    %v556 = vld [vmem:[#allocation8 + $0x3c0] sm:$0xff]
    %v557 = vld [vmem:[#allocation8 + $0x3c8] sm:$0xff]
    %v558 = vld [vmem:[#allocation8 + $0x3d0] sm:$0xff]
    %v559 = vld [vmem:[#allocation8 + $0x3d8] sm:$0xff]
    %v560 = vld [vmem:[#allocation8 + $0x3e0] sm:$0xff]
    %v561 = vld [vmem:[#allocation8 + $0x3e8] sm:$0xff]
    %v562 = vld [vmem:[#allocation8 + $0x3f0] sm:$0xff]
    %v563 = vld [vmem:[#allocation8 + $0x3f8] sm:$0xff]
    %v564 = vld [vmem:[%s4] sm:$0x3]
    %v566 = vlaneseq
    %v567 = vshrl.u32 %v566, 7
    %v568 = vsub.s32 0, %v567
    %v569 = vrot.slane %v564, %v568
    %v570 = vlaneseq
    %v571 = vshrl.u32 %v570, 7
    %v572 = vsub.s32 1, %v571
    %v573 = vrot.slane %v564, %v572
    %v704 = vunpack.c.l.b16 %v436
    %v705 = vunpack.c.h.b16 %v436
    %v706 = vunpack.c.l.b16 %v437
    %v707 = vunpack.c.h.b16 %v437
    %v708 = vunpack.c.l.b16 %v438
    %v709 = vunpack.c.h.b16 %v438
    %v710 = vunpack.c.l.b16 %v439
    %v711 = vunpack.c.h.b16 %v439
    %v712 = vunpack.c.l.b16 %v440
    %v713 = vunpack.c.h.b16 %v440
    %v714 = vunpack.c.l.b16 %v441
    %v715 = vunpack.c.h.b16 %v441
    %v716 = vunpack.c.l.b16 %v442
    %v717 = vunpack.c.h.b16 %v442
    %v718 = vunpack.c.l.b16 %v443
    %v719 = vunpack.c.h.b16 %v443
    %v720 = vunpack.c.l.b16 %v444
    %v721 = vunpack.c.h.b16 %v444
    %v722 = vunpack.c.l.b16 %v445
    %v723 = vunpack.c.h.b16 %v445
    %v724 = vunpack.c.l.b16 %v446
    %v725 = vunpack.c.h.b16 %v446
    %v726 = vunpack.c.l.b16 %v447
    %v727 = vunpack.c.h.b16 %v447
    %v728 = vunpack.c.l.b16 %v448
    %v729 = vunpack.c.h.b16 %v448
    %v730 = vunpack.c.l.b16 %v449
    %v731 = vunpack.c.h.b16 %v449
    %v732 = vunpack.c.l.b16 %v450
    %v733 = vunpack.c.h.b16 %v450
    %v734 = vunpack.c.l.b16 %v451
    %v735 = vunpack.c.h.b16 %v451
    %v736 = vunpack.c.l.b16 %v452
    %v737 = vunpack.c.h.b16 %v452
    %v738 = vunpack.c.l.b16 %v453
    %v739 = vunpack.c.h.b16 %v453
    %v740 = vunpack.c.l.b16 %v454
    %v741 = vunpack.c.h.b16 %v454
    %v742 = vunpack.c.l.b16 %v455
    %v743 = vunpack.c.h.b16 %v455
    %v744 = vunpack.c.l.b16 %v456
    %v745 = vunpack.c.h.b16 %v456
    %v746 = vunpack.c.l.b16 %v457
    %v747 = vunpack.c.h.b16 %v457
    %v748 = vunpack.c.l.b16 %v458
    %v749 = vunpack.c.h.b16 %v458
    %v750 = vunpack.c.l.b16 %v459
    %v751 = vunpack.c.h.b16 %v459
    %v752 = vunpack.c.l.b16 %v460
    %v753 = vunpack.c.h.b16 %v460
    %v754 = vunpack.c.l.b16 %v461
    %v755 = vunpack.c.h.b16 %v461
    %v756 = vunpack.c.l.b16 %v462
    %v757 = vunpack.c.h.b16 %v462
    %v758 = vunpack.c.l.b16 %v463
    %v759 = vunpack.c.h.b16 %v463
    %v760 = vunpack.c.l.b16 %v464
    %v761 = vunpack.c.h.b16 %v464
    %v762 = vunpack.c.l.b16 %v465
    %v763 = vunpack.c.h.b16 %v465
    %v764 = vunpack.c.l.b16 %v466
    %v765 = vunpack.c.h.b16 %v466
    %v766 = vunpack.c.l.b16 %v467
    %v767 = vunpack.c.h.b16 %v467
    %v768 = vunpack.c.l.b16 %v468
    %v769 = vunpack.c.h.b16 %v468
    %v770 = vunpack.c.l.b16 %v469
    %v771 = vunpack.c.h.b16 %v469
    %v772 = vunpack.c.l.b16 %v470
    %v773 = vunpack.c.h.b16 %v470
    %v774 = vunpack.c.l.b16 %v471
    %v775 = vunpack.c.h.b16 %v471
    %v776 = vunpack.c.l.b16 %v472
    %v777 = vunpack.c.h.b16 %v472
    %v778 = vunpack.c.l.b16 %v473
    %v779 = vunpack.c.h.b16 %v473
    %v780 = vunpack.c.l.b16 %v474
    %v781 = vunpack.c.h.b16 %v474
    %v782 = vunpack.c.l.b16 %v475
    %v783 = vunpack.c.h.b16 %v475
    %v784 = vunpack.c.l.b16 %v476
    %v785 = vunpack.c.h.b16 %v476
    %v786 = vunpack.c.l.b16 %v477
    %v787 = vunpack.c.h.b16 %v477
    %v788 = vunpack.c.l.b16 %v478
    %v789 = vunpack.c.h.b16 %v478
    %v790 = vunpack.c.l.b16 %v479
    %v791 = vunpack.c.h.b16 %v479
    %v792 = vunpack.c.l.b16 %v480
    %v793 = vunpack.c.h.b16 %v480
    %v794 = vunpack.c.l.b16 %v481
    %v795 = vunpack.c.h.b16 %v481
    %v796 = vunpack.c.l.b16 %v482
    %v797 = vunpack.c.h.b16 %v482
    %v798 = vunpack.c.l.b16 %v483
    %v799 = vunpack.c.h.b16 %v483
    %v800 = vunpack.c.l.b16 %v484
    %v801 = vunpack.c.h.b16 %v484
    %v802 = vunpack.c.l.b16 %v485
    %v803 = vunpack.c.h.b16 %v485
    %v804 = vunpack.c.l.b16 %v486
    %v805 = vunpack.c.h.b16 %v486
    %v806 = vunpack.c.l.b16 %v487
    %v807 = vunpack.c.h.b16 %v487
    %v808 = vunpack.c.l.b16 %v488
    %v809 = vunpack.c.h.b16 %v488
    %v810 = vunpack.c.l.b16 %v489
    %v811 = vunpack.c.h.b16 %v489
    %v812 = vunpack.c.l.b16 %v490
    %v813 = vunpack.c.h.b16 %v490
    %v814 = vunpack.c.l.b16 %v491
    %v815 = vunpack.c.h.b16 %v491
    %v816 = vunpack.c.l.b16 %v492
    %v817 = vunpack.c.h.b16 %v492
    %v818 = vunpack.c.l.b16 %v493
    %v819 = vunpack.c.h.b16 %v493
    %v820 = vunpack.c.l.b16 %v494
    %v821 = vunpack.c.h.b16 %v494
    %v822 = vunpack.c.l.b16 %v495
    %v823 = vunpack.c.h.b16 %v495
    %v824 = vunpack.c.l.b16 %v496
    %v825 = vunpack.c.h.b16 %v496
    %v826 = vunpack.c.l.b16 %v497
    %v827 = vunpack.c.h.b16 %v497
    %v828 = vunpack.c.l.b16 %v498
    %v829 = vunpack.c.h.b16 %v498
    %v830 = vunpack.c.l.b16 %v499
    %v831 = vunpack.c.h.b16 %v499
    %v832 = vunpack.c.l.b16 %v500
    %v833 = vunpack.c.h.b16 %v500
    %v834 = vunpack.c.l.b16 %v501
    %v835 = vunpack.c.h.b16 %v501
    %v836 = vunpack.c.l.b16 %v502
    %v837 = vunpack.c.h.b16 %v502
    %v838 = vunpack.c.l.b16 %v503
    %v839 = vunpack.c.h.b16 %v503
    %v840 = vunpack.c.l.b16 %v504
    %v841 = vunpack.c.h.b16 %v504
    %v842 = vunpack.c.l.b16 %v505
    %v843 = vunpack.c.h.b16 %v505
    %v844 = vunpack.c.l.b16 %v506
    %v845 = vunpack.c.h.b16 %v506
    %v846 = vunpack.c.l.b16 %v507
    %v847 = vunpack.c.h.b16 %v507
    %v848 = vunpack.c.l.b16 %v508
    %v849 = vunpack.c.h.b16 %v508
    %v850 = vunpack.c.l.b16 %v509
    %v851 = vunpack.c.h.b16 %v509
    %v852 = vunpack.c.l.b16 %v510
    %v853 = vunpack.c.h.b16 %v510
    %v854 = vunpack.c.l.b16 %v511
    %v855 = vunpack.c.h.b16 %v511
    %v856 = vunpack.c.l.b16 %v512
    %v857 = vunpack.c.h.b16 %v512
    %v858 = vunpack.c.l.b16 %v513
    %v859 = vunpack.c.h.b16 %v513
    %v860 = vunpack.c.l.b16 %v514
    %v861 = vunpack.c.h.b16 %v514
    %v862 = vunpack.c.l.b16 %v515
    %v863 = vunpack.c.h.b16 %v515
    %v864 = vunpack.c.l.b16 %v516
    %v865 = vunpack.c.h.b16 %v516
    %v866 = vunpack.c.l.b16 %v517
    %v867 = vunpack.c.h.b16 %v517
    %v868 = vunpack.c.l.b16 %v518
    %v869 = vunpack.c.h.b16 %v518
    %v870 = vunpack.c.l.b16 %v519
    %v871 = vunpack.c.h.b16 %v519
    %v872 = vunpack.c.l.b16 %v520
    %v873 = vunpack.c.h.b16 %v520
    %v874 = vunpack.c.l.b16 %v521
    %v875 = vunpack.c.h.b16 %v521
    %v876 = vunpack.c.l.b16 %v522
    %v877 = vunpack.c.h.b16 %v522
    %v878 = vunpack.c.l.b16 %v523
    %v879 = vunpack.c.h.b16 %v523
    %v880 = vunpack.c.l.b16 %v524
    %v881 = vunpack.c.h.b16 %v524
    %v882 = vunpack.c.l.b16 %v525
    %v883 = vunpack.c.h.b16 %v525
    %v884 = vunpack.c.l.b16 %v526
    %v885 = vunpack.c.h.b16 %v526
    %v886 = vunpack.c.l.b16 %v527
    %v887 = vunpack.c.h.b16 %v527
    %v888 = vunpack.c.l.b16 %v528
    %v889 = vunpack.c.h.b16 %v528
    %v890 = vunpack.c.l.b16 %v529
    %v891 = vunpack.c.h.b16 %v529
    %v892 = vunpack.c.l.b16 %v530
    %v893 = vunpack.c.h.b16 %v530
    %v894 = vunpack.c.l.b16 %v531
    %v895 = vunpack.c.h.b16 %v531
    %v896 = vunpack.c.l.b16 %v532
    %v897 = vunpack.c.h.b16 %v532
    %v898 = vunpack.c.l.b16 %v533
    %v899 = vunpack.c.h.b16 %v533
    %v900 = vunpack.c.l.b16 %v534
    %v901 = vunpack.c.h.b16 %v534
    %v902 = vunpack.c.l.b16 %v535
    %v903 = vunpack.c.h.b16 %v535
    %v904 = vunpack.c.l.b16 %v536
    %v905 = vunpack.c.h.b16 %v536
    %v906 = vunpack.c.l.b16 %v537
    %v907 = vunpack.c.h.b16 %v537
    %v908 = vunpack.c.l.b16 %v538
    %v909 = vunpack.c.h.b16 %v538
    %v910 = vunpack.c.l.b16 %v539
    %v911 = vunpack.c.h.b16 %v539
    %v912 = vunpack.c.l.b16 %v540
    %v913 = vunpack.c.h.b16 %v540
    %v914 = vunpack.c.l.b16 %v541
    %v915 = vunpack.c.h.b16 %v541
    %v916 = vunpack.c.l.b16 %v542
    %v917 = vunpack.c.h.b16 %v542
    %v918 = vunpack.c.l.b16 %v543
    %v919 = vunpack.c.h.b16 %v543
    %v920 = vunpack.c.l.b16 %v544
    %v921 = vunpack.c.h.b16 %v544
    %v922 = vunpack.c.l.b16 %v545
    %v923 = vunpack.c.h.b16 %v545
    %v924 = vunpack.c.l.b16 %v546
    %v925 = vunpack.c.h.b16 %v546
    %v926 = vunpack.c.l.b16 %v547
    %v927 = vunpack.c.h.b16 %v547
    %v928 = vunpack.c.l.b16 %v548
    %v929 = vunpack.c.h.b16 %v548
    %v930 = vunpack.c.l.b16 %v549
    %v931 = vunpack.c.h.b16 %v549
    %v932 = vunpack.c.l.b16 %v550
    %v933 = vunpack.c.h.b16 %v550
    %v934 = vunpack.c.l.b16 %v551
    %v935 = vunpack.c.h.b16 %v551
    %v936 = vunpack.c.l.b16 %v552
    %v937 = vunpack.c.h.b16 %v552
    %v938 = vunpack.c.l.b16 %v553
    %v939 = vunpack.c.h.b16 %v553
    %v940 = vunpack.c.l.b16 %v554
    %v941 = vunpack.c.h.b16 %v554
    %v942 = vunpack.c.l.b16 %v555
    %v943 = vunpack.c.h.b16 %v555
    %v944 = vunpack.c.l.b16 %v556
    %v945 = vunpack.c.h.b16 %v556
    %v946 = vunpack.c.l.b16 %v557
    %v947 = vunpack.c.h.b16 %v557
    %v948 = vunpack.c.l.b16 %v558
    %v949 = vunpack.c.h.b16 %v558
    %v950 = vunpack.c.l.b16 %v559
    %v951 = vunpack.c.h.b16 %v559
    %v952 = vunpack.c.l.b16 %v560
    %v953 = vunpack.c.h.b16 %v560
    %v954 = vunpack.c.l.b16 %v561
    %v955 = vunpack.c.h.b16 %v561
    %v956 = vunpack.c.l.b16 %v562
    %v957 = vunpack.c.h.b16 %v562
    %v958 = vunpack.c.l.b16 %v563
    %v959 = vunpack.c.h.b16 %v563
    %v960 = vpack.c.b16 %v706, %v704
    %v961 = vpack.c.b16 %v707, %v705
    %v962 = vpack.c.b16 %v710, %v708
    %v963 = vpack.c.b16 %v711, %v709
    %v964 = vpack.c.b16 %v714, %v712
    %v965 = vpack.c.b16 %v715, %v713
    %v966 = vpack.c.b16 %v718, %v716
    %v967 = vpack.c.b16 %v719, %v717
    %v968 = vpack.c.b16 %v722, %v720
    %v969 = vpack.c.b16 %v723, %v721
    %v970 = vpack.c.b16 %v726, %v724
    %v971 = vpack.c.b16 %v727, %v725
    %v972 = vpack.c.b16 %v730, %v728
    %v973 = vpack.c.b16 %v731, %v729
    %v974 = vpack.c.b16 %v734, %v732
    %v975 = vpack.c.b16 %v735, %v733
    %v976 = vpack.c.b16 %v738, %v736
    %v977 = vpack.c.b16 %v739, %v737
    %v978 = vpack.c.b16 %v742, %v740
    %v979 = vpack.c.b16 %v743, %v741
    %v980 = vpack.c.b16 %v746, %v744
    %v981 = vpack.c.b16 %v747, %v745
    %v982 = vpack.c.b16 %v750, %v748
    %v983 = vpack.c.b16 %v751, %v749
    %v984 = vpack.c.b16 %v754, %v752
    %v985 = vpack.c.b16 %v755, %v753
    %v986 = vpack.c.b16 %v758, %v756
    %v987 = vpack.c.b16 %v759, %v757
    %v988 = vpack.c.b16 %v762, %v760
    %v989 = vpack.c.b16 %v763, %v761
    %v990 = vpack.c.b16 %v766, %v764
    %v991 = vpack.c.b16 %v767, %v765
    %v992 = vpack.c.b16 %v770, %v768
    %v993 = vpack.c.b16 %v771, %v769
    %v994 = vpack.c.b16 %v774, %v772
    %v995 = vpack.c.b16 %v775, %v773
    %v996 = vpack.c.b16 %v778, %v776
    %v997 = vpack.c.b16 %v779, %v777
    %v998 = vpack.c.b16 %v782, %v780
    %v999 = vpack.c.b16 %v783, %v781
    %v1000 = vpack.c.b16 %v786, %v784
    %v1001 = vpack.c.b16 %v787, %v785
    %v1002 = vpack.c.b16 %v790, %v788
    %v1003 = vpack.c.b16 %v791, %v789
    %v1004 = vpack.c.b16 %v794, %v792
    %v1005 = vpack.c.b16 %v795, %v793
    %v1006 = vpack.c.b16 %v798, %v796
    %v1007 = vpack.c.b16 %v799, %v797
    %v1008 = vpack.c.b16 %v802, %v800
    %v1009 = vpack.c.b16 %v803, %v801
    %v1010 = vpack.c.b16 %v806, %v804
    %v1011 = vpack.c.b16 %v807, %v805
    %v1012 = vpack.c.b16 %v810, %v808
    %v1013 = vpack.c.b16 %v811, %v809
    %v1014 = vpack.c.b16 %v814, %v812
    %v1015 = vpack.c.b16 %v815, %v813
    %v1016 = vpack.c.b16 %v818, %v816
    %v1017 = vpack.c.b16 %v819, %v817
    %v1018 = vpack.c.b16 %v822, %v820
    %v1019 = vpack.c.b16 %v823, %v821
    %v1020 = vpack.c.b16 %v826, %v824
    %v1021 = vpack.c.b16 %v827, %v825
    %v1022 = vpack.c.b16 %v830, %v828
    %v1023 = vpack.c.b16 %v831, %v829
    %v1024 = vpack.c.b16 %v834, %v832
    %v1025 = vpack.c.b16 %v835, %v833
    %v1026 = vpack.c.b16 %v838, %v836
    %v1027 = vpack.c.b16 %v839, %v837
    %v1028 = vpack.c.b16 %v842, %v840
    %v1029 = vpack.c.b16 %v843, %v841
    %v1030 = vpack.c.b16 %v846, %v844
    %v1031 = vpack.c.b16 %v847, %v845
    %v1032 = vpack.c.b16 %v850, %v848
    %v1033 = vpack.c.b16 %v851, %v849
    %v1034 = vpack.c.b16 %v854, %v852
    %v1035 = vpack.c.b16 %v855, %v853
    %v1036 = vpack.c.b16 %v858, %v856
    %v1037 = vpack.c.b16 %v859, %v857
    %v1038 = vpack.c.b16 %v862, %v860
    %v1039 = vpack.c.b16 %v863, %v861
    %v1040 = vpack.c.b16 %v866, %v864
    %v1041 = vpack.c.b16 %v867, %v865
    %v1042 = vpack.c.b16 %v870, %v868
    %v1043 = vpack.c.b16 %v871, %v869
    %v1044 = vpack.c.b16 %v874, %v872
    %v1045 = vpack.c.b16 %v875, %v873
    %v1046 = vpack.c.b16 %v878, %v876
    %v1047 = vpack.c.b16 %v879, %v877
    %v1048 = vpack.c.b16 %v882, %v880
    %v1049 = vpack.c.b16 %v883, %v881
    %v1050 = vpack.c.b16 %v886, %v884
    %v1051 = vpack.c.b16 %v887, %v885
    %v1052 = vpack.c.b16 %v890, %v888
    %v1053 = vpack.c.b16 %v891, %v889
    %v1054 = vpack.c.b16 %v894, %v892
    %v1055 = vpack.c.b16 %v895, %v893
    %v1056 = vpack.c.b16 %v898, %v896
    %v1057 = vpack.c.b16 %v899, %v897
    %v1058 = vpack.c.b16 %v902, %v900
    %v1059 = vpack.c.b16 %v903, %v901
    %v1060 = vpack.c.b16 %v906, %v904
    %v1061 = vpack.c.b16 %v907, %v905
    %v1062 = vpack.c.b16 %v910, %v908
    %v1063 = vpack.c.b16 %v911, %v909
    %v1064 = vpack.c.b16 %v914, %v912
    %v1065 = vpack.c.b16 %v915, %v913
    %v1066 = vpack.c.b16 %v918, %v916
    %v1067 = vpack.c.b16 %v919, %v917
    %v1068 = vpack.c.b16 %v922, %v920
    %v1069 = vpack.c.b16 %v923, %v921
    %v1070 = vpack.c.b16 %v926, %v924
    %v1071 = vpack.c.b16 %v927, %v925
    %v1072 = vpack.c.b16 %v930, %v928
    %v1073 = vpack.c.b16 %v931, %v929
    %v1074 = vpack.c.b16 %v934, %v932
    %v1075 = vpack.c.b16 %v935, %v933
    %v1076 = vpack.c.b16 %v938, %v936
    %v1077 = vpack.c.b16 %v939, %v937
    %v1078 = vpack.c.b16 %v942, %v940
    %v1079 = vpack.c.b16 %v943, %v941
    %v1080 = vpack.c.b16 %v946, %v944
    %v1081 = vpack.c.b16 %v947, %v945
    %v1082 = vpack.c.b16 %v950, %v948
    %v1083 = vpack.c.b16 %v951, %v949
    %v1084 = vpack.c.b16 %v954, %v952
    %v1085 = vpack.c.b16 %v955, %v953
    %v1086 = vpack.c.b16 %v958, %v956
    %v1087 = vpack.c.b16 %v959, %v957
    %1216 = vmatprep.subr.bf16.mxu0 %v975
    %1217 = vmatpush1.bf16.msra.mxu0 %v974
    %1218 = vmatprep.subr.bf16.mxu0 %v973
    %1219 = vmatpush1.bf16.msra.mxu0 %v972
    %1220 = vmatprep.subr.bf16.mxu0 %v971
    %1221 = vmatpush1.bf16.msra.mxu0 %v970
    %1222 = vmatprep.subr.bf16.mxu0 %v969
    %1223 = vmatpush1.bf16.msra.mxu0 %v968
    %1224 = vmatprep.subr.bf16.mxu0 %v967
    %1225 = vmatpush1.bf16.msra.mxu0 %v966
    %1226 = vmatprep.subr.bf16.mxu0 %v965
    %1227 = vmatpush1.bf16.msra.mxu0 %v964
    %1228 = vmatprep.subr.bf16.mxu0 %v963
    %1229 = vmatpush1.bf16.msra.mxu0 %v962
    %1230 = vmatprep.subr.bf16.mxu0 %v961
    %1231 = vmatpush1.bf16.msra.mxu0 %v960
    %1232 = vmatprep.subr.bf16.mxu0 %v991
    %1233 = vmatpush2.bf16.msra.mxu0 %v990
    %1234 = vmatprep.subr.bf16.mxu0 %v989
    %1235 = vmatpush2.bf16.msra.mxu0 %v988
    %1236 = vmatprep.subr.bf16.mxu0 %v987
    %1237 = vmatpush2.bf16.msra.mxu0 %v986
    %1238 = vmatprep.subr.bf16.mxu0 %v985
    %1239 = vmatpush2.bf16.msra.mxu0 %v984
    %1240 = vmatprep.subr.bf16.mxu0 %v983
    %1241 = vmatpush2.bf16.msra.mxu0 %v982
    %1242 = vmatprep.subr.bf16.mxu0 %v981
    %1243 = vmatpush2.bf16.msra.mxu0 %v980
    %1244 = vmatprep.subr.bf16.mxu0 %v979
    %1245 = vmatpush2.bf16.msra.mxu0 %v978
    %1246 = vmatprep.subr.bf16.mxu0 %v977
    %1247 = vmatpush2.bf16.msra.mxu0 %v976
    %1248 = vmatprep.mubr.bf16.mxu0 %v429
    %1249 = vmatmul.mubr.bf16.gmra.mxu0 %v428
    %v1250 = vpop.f32.mrf.mxu0
    %v1251 = vadd.f32 %v569, %v1250
    %v1252 = vpop.f32.mrf.mxu0
    %v1253 = vadd.f32 %v573, %v1252
    %v1254 = vpop.f32.mrf.mxu0
    %v1255 = vpop.f32.mrf.mxu0
    %1256 = vdwg.mxu0
    %1257 = vmatprep.subr.bf16.mxu0 %v1007
    %1258 = vmatpush1.bf16.msra.mxu0 %v1006
    %1259 = vmatprep.subr.bf16.mxu0 %v1005
    %1260 = vmatpush1.bf16.msra.mxu0 %v1004
    %1261 = vmatprep.subr.bf16.mxu0 %v1003
    %1262 = vmatpush1.bf16.msra.mxu0 %v1002
    %1263 = vmatprep.subr.bf16.mxu0 %v1001
    %1264 = vmatpush1.bf16.msra.mxu0 %v1000
    %1265 = vmatprep.subr.bf16.mxu0 %v999
    %1266 = vmatpush1.bf16.msra.mxu0 %v998
    %1267 = vmatprep.subr.bf16.mxu0 %v997
    %1268 = vmatpush1.bf16.msra.mxu0 %v996
    %1269 = vmatprep.subr.bf16.mxu0 %v995
    %1270 = vmatpush1.bf16.msra.mxu0 %v994
    %1271 = vmatprep.subr.bf16.mxu0 %v993
    %1272 = vmatpush1.bf16.msra.mxu0 %v992
    %1273 = vmatprep.subr.bf16.mxu0 %v1023
    %1274 = vmatpush2.bf16.msra.mxu0 %v1022
    %1275 = vmatprep.subr.bf16.mxu0 %v1021
    %1276 = vmatpush2.bf16.msra.mxu0 %v1020
    %1277 = vmatprep.subr.bf16.mxu0 %v1019
    %1278 = vmatpush2.bf16.msra.mxu0 %v1018
    %1279 = vmatprep.subr.bf16.mxu0 %v1017
    %1280 = vmatpush2.bf16.msra.mxu0 %v1016
    %1281 = vmatprep.subr.bf16.mxu0 %v1015
    %1282 = vmatpush2.bf16.msra.mxu0 %v1014
    %1283 = vmatprep.subr.bf16.mxu0 %v1013
    %1284 = vmatpush2.bf16.msra.mxu0 %v1012
    %1285 = vmatprep.subr.bf16.mxu0 %v1011
    %1286 = vmatpush2.bf16.msra.mxu0 %v1010
    %1287 = vmatprep.subr.bf16.mxu0 %v1009
    %1288 = vmatpush2.bf16.msra.mxu0 %v1008
    %1289 = vmatprep.mubr.bf16.mxu0 %v431
    %1290 = vmatmul.mubr.bf16.gmra.mxu0 %v430
    %v1291 = vpop.f32.mrf.mxu0
    %v1292 = vadd.f32 %v1251, %v1291
    %v1293 = vpop.f32.mrf.mxu0
    %v1294 = vadd.f32 %v1253, %v1293
    %v1295 = vpop.f32.mrf.mxu0
    %v1296 = vpop.f32.mrf.mxu0
    %1297 = vdwg.mxu0
    %1298 = vmatprep.subr.bf16.mxu0 %v1039
    %1299 = vmatpush1.bf16.msra.mxu0 %v1038
    %1300 = vmatprep.subr.bf16.mxu0 %v1037
    %1301 = vmatpush1.bf16.msra.mxu0 %v1036
    %1302 = vmatprep.subr.bf16.mxu0 %v1035
    %1303 = vmatpush1.bf16.msra.mxu0 %v1034
    %1304 = vmatprep.subr.bf16.mxu0 %v1033
    %1305 = vmatpush1.bf16.msra.mxu0 %v1032
    %1306 = vmatprep.subr.bf16.mxu0 %v1031
    %1307 = vmatpush1.bf16.msra.mxu0 %v1030
    %1308 = vmatprep.subr.bf16.mxu0 %v1029
    %1309 = vmatpush1.bf16.msra.mxu0 %v1028
    %1310 = vmatprep.subr.bf16.mxu0 %v1027
    %1311 = vmatpush1.bf16.msra.mxu0 %v1026
    %1312 = vmatprep.subr.bf16.mxu0 %v1025
    %1313 = vmatpush1.bf16.msra.mxu0 %v1024
    %1314 = vmatprep.subr.bf16.mxu0 %v1055
    %1315 = vmatpush2.bf16.msra.mxu0 %v1054
    %1316 = vmatprep.subr.bf16.mxu0 %v1053
    %1317 = vmatpush2.bf16.msra.mxu0 %v1052
    %1318 = vmatprep.subr.bf16.mxu0 %v1051
    %1319 = vmatpush2.bf16.msra.mxu0 %v1050
    %1320 = vmatprep.subr.bf16.mxu0 %v1049
    %1321 = vmatpush2.bf16.msra.mxu0 %v1048
    %1322 = vmatprep.subr.bf16.mxu0 %v1047
    %1323 = vmatpush2.bf16.msra.mxu0 %v1046
    %1324 = vmatprep.subr.bf16.mxu0 %v1045
    %1325 = vmatpush2.bf16.msra.mxu0 %v1044
    %1326 = vmatprep.subr.bf16.mxu0 %v1043
    %1327 = vmatpush2.bf16.msra.mxu0 %v1042
    %1328 = vmatprep.subr.bf16.mxu0 %v1041
    %1329 = vmatpush2.bf16.msra.mxu0 %v1040
    %1330 = vmatprep.mubr.bf16.mxu0 %v433
    %1331 = vmatmul.mubr.bf16.gmra.mxu0 %v432
    %v1332 = vpop.f32.mrf.mxu0
    %v1333 = vadd.f32 %v1292, %v1332
    %v1334 = vpop.f32.mrf.mxu0
    %v1335 = vadd.f32 %v1294, %v1334
    %v1336 = vpop.f32.mrf.mxu0
    %v1337 = vpop.f32.mrf.mxu0
    %1338 = vdwg.mxu0
    %1339 = vmatprep.subr.bf16.mxu0 %v1071
    %1340 = vmatpush1.bf16.msra.mxu0 %v1070
    %1341 = vmatprep.subr.bf16.mxu0 %v1069
    %1342 = vmatpush1.bf16.msra.mxu0 %v1068
    %1343 = vmatprep.subr.bf16.mxu0 %v1067
    %1344 = vmatpush1.bf16.msra.mxu0 %v1066
    %1345 = vmatprep.subr.bf16.mxu0 %v1065
    %1346 = vmatpush1.bf16.msra.mxu0 %v1064
    %1347 = vmatprep.subr.bf16.mxu0 %v1063
    %1348 = vmatpush1.bf16.msra.mxu0 %v1062
    %1349 = vmatprep.subr.bf16.mxu0 %v1061
    %1350 = vmatpush1.bf16.msra.mxu0 %v1060
    %1351 = vmatprep.subr.bf16.mxu0 %v1059
    %1352 = vmatpush1.bf16.msra.mxu0 %v1058
    %1353 = vmatprep.subr.bf16.mxu0 %v1057
    %1354 = vmatpush1.bf16.msra.mxu0 %v1056
    %1355 = vmatprep.subr.bf16.mxu0 %v1087
    %1356 = vmatpush2.bf16.msra.mxu0 %v1086
    %1357 = vmatprep.subr.bf16.mxu0 %v1085
    %1358 = vmatpush2.bf16.msra.mxu0 %v1084
    %1359 = vmatprep.subr.bf16.mxu0 %v1083
    %1360 = vmatpush2.bf16.msra.mxu0 %v1082
    %1361 = vmatprep.subr.bf16.mxu0 %v1081
    %1362 = vmatpush2.bf16.msra.mxu0 %v1080
    %1363 = vmatprep.subr.bf16.mxu0 %v1079
    %1364 = vmatpush2.bf16.msra.mxu0 %v1078
    %1365 = vmatprep.subr.bf16.mxu0 %v1077
    %1366 = vmatpush2.bf16.msra.mxu0 %v1076
    %1367 = vmatprep.subr.bf16.mxu0 %v1075
    %1368 = vmatpush2.bf16.msra.mxu0 %v1074
    %1369 = vmatprep.subr.bf16.mxu0 %v1073
    %1370 = vmatpush2.bf16.msra.mxu0 %v1072
    %1371 = vmatprep.mubr.bf16.mxu0 %v435
    %1372 = vmatmul.mubr.bf16.gmra.mxu0 %v434
    %v1373 = vpop.f32.mrf.mxu0
    %v1374 = vadd.f32 %v1333, %v1373
    %v1375 = vpop.f32.mrf.mxu0
    %v1376 = vadd.f32 %v1335, %v1375
    %v1377 = vpop.f32.mrf.mxu0
    %v1378 = vpop.f32.mrf.mxu0
    %1379 = vdwg.mxu0
    %v1380 = vmax.f32 %v1374, 0.0
    %v1381 = vmax.f32 %v1376, 0.0
    %v1382 = vpack.c.bf16 %v1380, %v1380
    %v1383 = vpack.c.bf16 %v1381, %v1381
    %v1384 = vld [vmem:[#allocation10] sm:$0xf]
    %v1385 = vld [vmem:[#allocation10 + $0x4] sm:$0xf]
    %v1386 = vld [vmem:[#allocation10 + $0x8] sm:$0xf]
    %v1387 = vld [vmem:[#allocation10 + $0xc] sm:$0xf]
    %v1388 = vld [vmem:[#allocation10 + $0x10] sm:$0xf]
    %v1389 = vld [vmem:[#allocation10 + $0x14] sm:$0xf]
    %v1390 = vld [vmem:[#allocation10 + $0x18] sm:$0xf]
    %v1391 = vld [vmem:[#allocation10 + $0x1c] sm:$0xf]
    %v1392 = vld [vmem:[#allocation10 + $0x20] sm:$0xf]
    %v1393 = vld [vmem:[#allocation10 + $0x24] sm:$0xf]
    %v1394 = vld [vmem:[#allocation10 + $0x28] sm:$0xf]
    %v1395 = vld [vmem:[#allocation10 + $0x2c] sm:$0xf]
    %v1396 = vld [vmem:[#allocation10 + $0x30] sm:$0xf]
    %v1397 = vld [vmem:[#allocation10 + $0x34] sm:$0xf]
    %v1398 = vld [vmem:[#allocation10 + $0x38] sm:$0xf]
    %v1399 = vld [vmem:[#allocation10 + $0x3c] sm:$0xf]
    %v1400 = vld [vmem:[#allocation10 + $0x40] sm:$0xf]
    %v1401 = vld [vmem:[#allocation10 + $0x44] sm:$0xf]
    %v1402 = vld [vmem:[#allocation10 + $0x48] sm:$0xf]
    %v1403 = vld [vmem:[#allocation10 + $0x4c] sm:$0xf]
    %v1404 = vld [vmem:[#allocation10 + $0x50] sm:$0xf]
    %v1405 = vld [vmem:[#allocation10 + $0x54] sm:$0xf]
    %v1406 = vld [vmem:[#allocation10 + $0x58] sm:$0xf]
    %v1407 = vld [vmem:[#allocation10 + $0x5c] sm:$0xf]
    %v1408 = vld [vmem:[#allocation10 + $0x60] sm:$0xf]
    %v1409 = vld [vmem:[#allocation10 + $0x64] sm:$0xf]
    %v1410 = vld [vmem:[#allocation10 + $0x68] sm:$0xf]
    %v1411 = vld [vmem:[#allocation10 + $0x6c] sm:$0xf]
    %v1412 = vld [vmem:[#allocation10 + $0x70] sm:$0xf]
    %v1413 = vld [vmem:[#allocation10 + $0x74] sm:$0xf]
    %v1414 = vld [vmem:[#allocation10 + $0x78] sm:$0xf]
    %v1415 = vld [vmem:[#allocation10 + $0x7c] sm:$0xf]
    %v1416 = vld [vmem:[%s6] sm:$0x1]
    %v1418 = vlaneseq
    %v1419 = vshrl.u32 %v1418, 7
    %v1420 = vsub.s32 0, %v1419
    %v1421 = vrot.slane %v1416, %v1420
    %v1455 = vunpack.c.l.b16 %v1384
    %v1456 = vunpack.c.l.b16 %v1385
    %v1457 = vunpack.c.l.b16 %v1386
    %v1458 = vunpack.c.l.b16 %v1387
    %v1459 = vunpack.c.l.b16 %v1388
    %v1460 = vunpack.c.l.b16 %v1389
    %v1461 = vunpack.c.l.b16 %v1390
    %v1462 = vunpack.c.l.b16 %v1391
    %v1463 = vunpack.c.l.b16 %v1392
    %v1464 = vunpack.c.l.b16 %v1393
    %v1465 = vunpack.c.l.b16 %v1394
    %v1466 = vunpack.c.l.b16 %v1395
    %v1467 = vunpack.c.l.b16 %v1396
    %v1468 = vunpack.c.l.b16 %v1397
    %v1469 = vunpack.c.l.b16 %v1398
    %v1470 = vunpack.c.l.b16 %v1399
    %v1471 = vunpack.c.l.b16 %v1400
    %v1472 = vunpack.c.l.b16 %v1401
    %v1473 = vunpack.c.l.b16 %v1402
    %v1474 = vunpack.c.l.b16 %v1403
    %v1475 = vunpack.c.l.b16 %v1404
    %v1476 = vunpack.c.l.b16 %v1405
    %v1477 = vunpack.c.l.b16 %v1406
    %v1478 = vunpack.c.l.b16 %v1407
    %v1479 = vunpack.c.l.b16 %v1408
    %v1480 = vunpack.c.l.b16 %v1409
    %v1481 = vunpack.c.l.b16 %v1410
    %v1482 = vunpack.c.l.b16 %v1411
    %v1483 = vunpack.c.l.b16 %v1412
    %v1484 = vunpack.c.l.b16 %v1413
    %v1485 = vunpack.c.l.b16 %v1414
    %v1486 = vunpack.c.l.b16 %v1415
    %v1487 = vpack.c.b16 %v1456, %v1455
    %v1488 = vpack.c.b16 %v1458, %v1457
    %v1489 = vpack.c.b16 %v1460, %v1459
    %v1490 = vpack.c.b16 %v1462, %v1461
    %v1491 = vpack.c.b16 %v1464, %v1463
    %v1492 = vpack.c.b16 %v1466, %v1465
    %v1493 = vpack.c.b16 %v1468, %v1467
    %v1494 = vpack.c.b16 %v1470, %v1469
    %v1495 = vpack.c.b16 %v1472, %v1471
    %v1496 = vpack.c.b16 %v1474, %v1473
    %v1497 = vpack.c.b16 %v1476, %v1475
    %v1498 = vpack.c.b16 %v1478, %v1477
    %v1499 = vpack.c.b16 %v1480, %v1479
    %v1500 = vpack.c.b16 %v1482, %v1481
    %v1501 = vpack.c.b16 %v1484, %v1483
    %v1502 = vpack.c.b16 %v1486, %v1485
    %1519 = vmatprep.subr.bf16.mxu0 0
    %1520 = vmatpush1.bf16.msra.mxu0 %v1494
    %1521 = vmatprep.subr.bf16.mxu0 0
    %1522 = vmatpush1.bf16.msra.mxu0 %v1493
    %1523 = vmatprep.subr.bf16.mxu0 0
    %1524 = vmatpush1.bf16.msra.mxu0 %v1492
    %1525 = vmatprep.subr.bf16.mxu0 0
    %1526 = vmatpush1.bf16.msra.mxu0 %v1491
    %1527 = vmatprep.subr.bf16.mxu0 0
    %1528 = vmatpush1.bf16.msra.mxu0 %v1490
    %1529 = vmatprep.subr.bf16.mxu0 0
    %1530 = vmatpush1.bf16.msra.mxu0 %v1489
    %1531 = vmatprep.subr.bf16.mxu0 0
    %1532 = vmatpush1.bf16.msra.mxu0 %v1488
    %1533 = vmatprep.subr.bf16.mxu0 0
    %1534 = vmatpush1.bf16.msra.mxu0 %v1487
    %1535 = vmatprep.subr.bf16.mxu0 0
    %1536 = vmatpush2.bf16.msra.mxu0 %v1502
    %1537 = vmatprep.subr.bf16.mxu0 0
    %1538 = vmatpush2.bf16.msra.mxu0 %v1501
    %1539 = vmatprep.subr.bf16.mxu0 0
    %1540 = vmatpush2.bf16.msra.mxu0 %v1500
    %1541 = vmatprep.subr.bf16.mxu0 0
    %1542 = vmatpush2.bf16.msra.mxu0 %v1499
    %1543 = vmatprep.subr.bf16.mxu0 0
    %1544 = vmatpush2.bf16.msra.mxu0 %v1498
    %1545 = vmatprep.subr.bf16.mxu0 0
    %1546 = vmatpush2.bf16.msra.mxu0 %v1497
    %1547 = vmatprep.subr.bf16.mxu0 0
    %1548 = vmatpush2.bf16.msra.mxu0 %v1496
    %1549 = vmatprep.subr.bf16.mxu0 0
    %1550 = vmatpush2.bf16.msra.mxu0 %v1495
    %1551 = vmatprep.mubr.bf16.mxu0 %v1383
    %1552 = vmatmul.mubr.bf16.gmra.mxu0 %v1382
    %v1553 = vpop.f32.mrf.mxu0
    %v1554 = vadd.f32 %v1421, %v1553
    %v1555 = vpop.f32.mrf.mxu0
    %v1556 = vpop.f32.mrf.mxu0
    %v1557 = vpop.f32.mrf.mxu0
    %1558 = vdwg.mxu0
    %v1559 = vmax.f32 %v1554, 0.0
    %v1560 = vpack.c.bf16 %v1559, %v1559
    %v1561 = vld [vmem:[#allocation11] sm:$0xf]
    %v1562 = vld [vmem:[#allocation11 + $0x4] sm:$0xf]
    %v1563 = vld [vmem:[#allocation11 + $0x8] sm:$0xf]
    %v1564 = vld [vmem:[#allocation11 + $0xc] sm:$0xf]
    %v1565 = vld [vmem:[#allocation11 + $0x10] sm:$0xf]
    %v1566 = vld [vmem:[#allocation11 + $0x14] sm:$0xf]
    %v1567 = vld [vmem:[#allocation11 + $0x18] sm:$0xf]
    %v1568 = vld [vmem:[#allocation11 + $0x1c] sm:$0xf]
    %v1569 = vld [vmem:[#allocation11 + $0x20] sm:$0xf]
    %v1570 = vld [vmem:[#allocation11 + $0x24] sm:$0xf]
    %v1571 = vld [vmem:[#allocation11 + $0x28] sm:$0xf]
    %v1572 = vld [vmem:[#allocation11 + $0x2c] sm:$0xf]
    %v1573 = vld [vmem:[#allocation11 + $0x30] sm:$0xf]
    %v1574 = vld [vmem:[#allocation11 + $0x34] sm:$0xf]
    %v1575 = vld [vmem:[#allocation11 + $0x38] sm:$0xf]
    %v1576 = vld [vmem:[#allocation11 + $0x3c] sm:$0xf]
    %v1577 = vld [vmem:[%s8] sm:$0x1]
    %v1579 = vlaneseq
    %v1580 = vshrl.u32 %v1579, 7
    %v1581 = vsub.s32 0, %v1580
    %v1582 = vrot.slane %v1577, %v1581
    %v1600 = vunpack.c.l.b16 %v1561
    %v1601 = vunpack.c.l.b16 %v1562
    %v1602 = vunpack.c.l.b16 %v1563
    %v1603 = vunpack.c.l.b16 %v1564
    %v1604 = vunpack.c.l.b16 %v1565
    %v1605 = vunpack.c.l.b16 %v1566
    %v1606 = vunpack.c.l.b16 %v1567
    %v1607 = vunpack.c.l.b16 %v1568
    %v1608 = vunpack.c.l.b16 %v1569
    %v1609 = vunpack.c.l.b16 %v1570
    %v1610 = vunpack.c.l.b16 %v1571
    %v1611 = vunpack.c.l.b16 %v1572
    %v1612 = vunpack.c.l.b16 %v1573
    %v1613 = vunpack.c.l.b16 %v1574
    %v1614 = vunpack.c.l.b16 %v1575
    %v1615 = vunpack.c.l.b16 %v1576
    %v1616 = vpack.c.b16 %v1601, %v1600
    %v1617 = vpack.c.b16 %v1603, %v1602
    %v1618 = vpack.c.b16 %v1605, %v1604
    %v1619 = vpack.c.b16 %v1607, %v1606
    %v1620 = vpack.c.b16 %v1609, %v1608
    %v1621 = vpack.c.b16 %v1611, %v1610
    %v1622 = vpack.c.b16 %v1613, %v1612
    %v1623 = vpack.c.b16 %v1615, %v1614
    %1632 = vmatprep.subr.bf16.mxu0 0
    %1633 = vmatpush1.bf16.msra.mxu0 %v1623
    %1634 = vmatprep.subr.bf16.mxu0 0
    %1635 = vmatpush1.bf16.msra.mxu0 %v1622
    %1636 = vmatprep.subr.bf16.mxu0 0
    %1637 = vmatpush1.bf16.msra.mxu0 %v1621
    %1638 = vmatprep.subr.bf16.mxu0 0
    %1639 = vmatpush1.bf16.msra.mxu0 %v1620
    %1640 = vmatprep.subr.bf16.mxu0 0
    %1641 = vmatpush1.bf16.msra.mxu0 %v1619
    %1642 = vmatprep.subr.bf16.mxu0 0
    %1643 = vmatpush1.bf16.msra.mxu0 %v1618
    %1644 = vmatprep.subr.bf16.mxu0 0
    %1645 = vmatpush1.bf16.msra.mxu0 %v1617
    %1646 = vmatprep.subr.bf16.mxu0 0
    %1647 = vmatpush1.bf16.msra.mxu0 %v1616
    %1648 = vmatprep.subr.bf16.mxu0 0
    %1649 = vmatpush2.bf16.msra.mxu0 0
    %1650 = vmatprep.subr.bf16.mxu0 0
    %1651 = vmatpush2.bf16.msra.mxu0 0
    %1652 = vmatprep.subr.bf16.mxu0 0
    %1653 = vmatpush2.bf16.msra.mxu0 0
    %1654 = vmatprep.subr.bf16.mxu0 0
    %1655 = vmatpush2.bf16.msra.mxu0 0
    %1656 = vmatprep.subr.bf16.mxu0 0
    %1657 = vmatpush2.bf16.msra.mxu0 0
    %1658 = vmatprep.subr.bf16.mxu0 0
    %1659 = vmatpush2.bf16.msra.mxu0 0
    %1660 = vmatprep.subr.bf16.mxu0 0
    %1661 = vmatpush2.bf16.msra.mxu0 0
    %1662 = vmatprep.subr.bf16.mxu0 0
    %1663 = vmatpush2.bf16.msra.mxu0 0
    %1664 = vmatprep.mubr.bf16.mxu0 0
    %1665 = vmatmul.mubr.bf16.gmra.mxu0 %v1560
    %v1666 = vpop.f32.mrf.mxu0
    %v1667 = vadd.f32 %v1582, %v1666
    %v1668 = vpop.f32.mrf.mxu0
    %v1669 = vpop.f32.mrf.mxu0
    %v1670 = vpop.f32.mrf.mxu0
    %1671 = vdwg.mxu0
    %1672 = vst [vmem:[#allocation13] sm:$0xff] %v1667
    // Predicated region
    $region62: #{tpu_custom_call.1} parent=1 // pred_check
      _
    $region63: #{tpu_custom_call.1} parent=1 // pred_check_branch
      %1674 = sbr.rel (0) target = $region65
    $region64: #{tpu_custom_call.1} parent=1 // pred_region
      %s1676 = ssub.s32 128, 128
      %1677 = vsyncadd [#allocation4], %s1676
      %s1679 = sshll.u32 [#allocation13], 4
      %s1680 = int_to_ptr.vmem [resolvable:$true] %s1679
      %1682 = dma.vmem_to_hbm [thread:$0]  %s1680, 128, %s9, [#allocation4]
    $region65: #{tpu_custom_call.1} parent=1 // pred_fallthru
      _
    // Predicated region
    $region66: #{tpu_custom_call.1} parent=1 // pred_check
      _
    $region67: #{tpu_custom_call.1} parent=1 // pred_check_branch
      %1684 = sbr.rel (0) target = $region69
    $region68: #{tpu_custom_call.1} parent=1 // pred_region
      %1685 = dma.done [#allocation4], 128
    $region69: #{tpu_custom_call.1} parent=1 // pred_fallthru
      _
    %1686 = vsyncpa [#allocation3], 1
    %1687 = vsyncpa [#allocation6], 1
    %1688 = vsyncpa [#allocation9], 1
    %1689 = vsyncpa [#allocation12], 1
    %1690 = vsyncpa [#allocation4], 1

// kernel: tpu_custom_call.1
$region0: #{tpu_custom_call.1}
  #allocation0 [shape = 'u32[]', space=smem, size = 0x4, offset = 0x4, fixed_abs, tag = 'smem constant byte address 0x4 - core index']
  #allocation1 [shape = 'u32[144,128]{1,0:T(1,128)}', space=vmem, size = 0x12000, scoped, tag = 'internal scratch']
  %s0 = inlined_call_operand.hbm [shape: f32[8,32], index: 0, kind: input, shape index: {}]
  %s1 = inlined_call_operand.hbm [shape: bf16[32,1024], index: 1, kind: input, shape index: {}]
  %s2 = inlined_call_operand.hbm [shape: f32[1,1024], index: 2, kind: input, shape index: {}]
  %s3 = inlined_call_operand.hbm [shape: bf16[1024,256], index: 3, kind: input, shape index: {}]
  %s4 = inlined_call_operand.vmem [shape: f32[1,256], index: 4, kind: input, shape index: {}]
  %s5 = inlined_call_operand.hbm [shape: bf16[256,128], index: 5, kind: input, shape index: {}]
  %s6 = inlined_call_operand.vmem [shape: f32[1,128], index: 6, kind: input, shape index: {}]
  %s7 = inlined_call_operand.hbm [shape: bf16[128,128], index: 7, kind: input, shape index: {}]
  %s8 = inlined_call_operand.vmem [shape: f32[1,128], index: 8, kind: input, shape index: {}]
  %s9 = inlined_call_operand.hbm [shape: f32[8,128], index: 9, kind: output, shape index: {}]
  %s10 = sld [smem:[#allocation0]]
  $region70: #{tpu_custom_call.1} parent=0
    _
  %s12 = ssub.s32 1, %s10
  %s13 = scalar_select 0, %s12, %s10
  $region1: #{tpu_custom_call.1} parent=0
    #allocation2 [shape = 'u8[4096]{0}', space=vmem, size = 0x1000, scoped, tag = 'input window, operand 0, single buffered']
    #allocation3 [shape = 's32[1]{0}', space=sflag, size = 0x4, scoped, tag = 'scoped memory for tpu_custom_call.1']
    #allocation4 [shape = 's32[1]{0}', space=sflag, size = 0x4, scoped, tag = 'scoped memory for tpu_custom_call.1']
    #allocation5 [shape = 'u8[65536]{0}', space=vmem, size = 0x10000, scoped, tag = 'input window, operand 1, single buffered']
    #allocation6 [shape = 's32[1]{0}', space=sflag, size = 0x4, scoped, tag = 'scoped memory for tpu_custom_call.1']
    #allocation7 [shape = 'u8[4096]{0}', space=vmem, size = 0x1000, scoped, tag = 'input window, operand 2, single buffered']
    #allocation8 [shape = 'u8[524288]{0}', space=vmem, size = 0x80000, scoped, tag = 'input window, operand 3, single buffered']
    #allocation9 [shape = 's32[1]{0}', space=sflag, size = 0x4, scoped, tag = 'scoped memory for tpu_custom_call.1']
    #allocation10 [shape = 'u8[65536]{0}', space=vmem, size = 0x10000, scoped, tag = 'input window, operand 5, single buffered']
    #allocation11 [shape = 'u8[32768]{0}', space=vmem, size = 0x8000, scoped, tag = 'input window, operand 7, single buffered']
    #allocation12 [shape = 's32[1]{0}', space=sflag, size = 0x4, scoped, tag = 'scoped memory for tpu_custom_call.1']
    #allocation13 [shape = 'u8[4096]{0}', space=vmem, size = 0x1000, scoped, tag = 'output window, operand 0, single buffered']
    %14 = vsyncpa [#allocation3], 0
    %15 = vsyncpa [#allocation6], 0
    %16 = vsyncpa [#allocation9], 0
    %17 = vsyncpa [#allocation12], 0
    %18 = vsyncpa [#allocation4], 0
    // Predicated region
    $region2: #{tpu_custom_call.1} parent=1 // pred_check
      _
    $region3: #{tpu_custom_call.1} parent=1 // pred_check_branch
      %20 = sbr.rel (0) target = $region5
    $region4: #{tpu_custom_call.1} parent=1 // pred_region
      %s22 = ssub.s32 128, 128
      %23 = vsyncadd [#allocation3], %s22
      %s25 = sshll.u32 [#allocation2], 4
      %s26 = int_to_ptr.vmem [resolvable:$true] %s25
      %28 = dma.hbm_to_vmem [thread:$0]  %s0, 128, %s26, [#allocation3]
    $region5: #{tpu_custom_call.1} parent=1 // pred_fallthru
      _
    // Predicated region
    $region6: #{tpu_custom_call.1} parent=1 // pred_check
      _
    $region7: #{tpu_custom_call.1} parent=1 // pred_check_branch
      %30 = sbr.rel (0) target = $region9
    $region8: #{tpu_custom_call.1} parent=1 // pred_region
      %s32 = ssub.s32 2048, 2048
      %33 = vsyncadd [#allocation6], %s32
      %s34 = sshll.u32 [#allocation5], 4
      %s35 = int_to_ptr.vmem [resolvable:$true] %s34
      %40 = dma.hbm_to_vmem [thread:$0]  %s1, 2048, %s35, [#allocation6], 512, 512, 32
    $region9: #{tpu_custom_call.1} parent=1 // pred_fallthru
      _
    // Predicated region
    $region10: #{tpu_custom_call.1} parent=1 // pred_check
      _
    $region11: #{tpu_custom_call.1} parent=1 // pred_check_branch
      %42 = sbr.rel (0) target = $region13
    $region12: #{tpu_custom_call.1} parent=1 // pred_region
      %s44 = ssub.s32 128, 128
      %45 = vsyncadd [#allocation6], %s44
      %s47 = sshll.u32 [#allocation7], 4
      %s48 = int_to_ptr.vmem [resolvable:$true] %s47
      %50 = dma.hbm_to_vmem [thread:$0]  %s2, 128, %s48, [#allocation6]
    $region13: #{tpu_custom_call.1} parent=1 // pred_fallthru
      _
    // Predicated region
    $region14: #{tpu_custom_call.1} parent=1 // pred_check
      _
    $region15: #{tpu_custom_call.1} parent=1 // pred_check_branch
      %52 = sbr.rel (0) target = $region17
    $region16: #{tpu_custom_call.1} parent=1 // pred_region
      %s54 = ssub.s32 16384, 16384
      %55 = vsyncadd [#allocation9], %s54
      %s56 = sshll.u32 [#allocation8], 4
      %s57 = int_to_ptr.vmem [resolvable:$true] %s56
      %62 = dma.hbm_to_vmem [thread:$0]  %s3, 16384, %s57, [#allocation9], 128, 128, 8
    $region17: #{tpu_custom_call.1} parent=1 // pred_fallthru
      _
    // Predicated region
    $region18: #{tpu_custom_call.1} parent=1 // pred_check
      _
    $region19: #{tpu_custom_call.1} parent=1 // pred_check_branch
      %64 = sbr.rel (0) target = $region21
    $region20: #{tpu_custom_call.1} parent=1 // pred_region
      _
    $region21: #{tpu_custom_call.1} parent=1 // pred_fallthru
      _
    // Predicated region
    $region22: #{tpu_custom_call.1} parent=1 // pred_check
      _
    $region23: #{tpu_custom_call.1} parent=1 // pred_check_branch
      %66 = sbr.rel (0) target = $region25
    $region24: #{tpu_custom_call.1} parent=1 // pred_region
      %s68 = ssub.s32 2048, 2048
      %69 = vsyncadd [#allocation9], %s68
      %s70 = sshll.u32 [#allocation10], 4
      %s71 = int_to_ptr.vmem [resolvable:$true] %s70
      %76 = dma.hbm_to_vmem [thread:$0]  %s5, 2048, %s71, [#allocation9], 64, 64, 4
    $region25: #{tpu_custom_call.1} parent=1 // pred_fallthru
      _
    // Predicated region
    $region26: #{tpu_custom_call.1} parent=1 // pred_check
      _
    $region27: #{tpu_custom_call.1} parent=1 // pred_check_branch
      %78 = sbr.rel (0) target = $region29
    $region28: #{tpu_custom_call.1} parent=1 // pred_region
      _
    $region29: #{tpu_custom_call.1} parent=1 // pred_fallthru
      _
    // Predicated region
    $region30: #{tpu_custom_call.1} parent=1 // pred_check
      _
    $region31: #{tpu_custom_call.1} parent=1 // pred_check_branch
      %80 = sbr.rel (0) target = $region33
    $region32: #{tpu_custom_call.1} parent=1 // pred_region
      %s82 = ssub.s32 1024, 1024
      %83 = vsyncadd [#allocation12], %s82
      %s84 = sshll.u32 [#allocation11], 4
      %s85 = int_to_ptr.vmem [resolvable:$true] %s84
      %90 = dma.hbm_to_vmem [thread:$0]  %s7, 1024, %s85, [#allocation12], 64, 64, 4
    $region33: #{tpu_custom_call.1} parent=1 // pred_fallthru
      _
    // Predicated region
    $region34: #{tpu_custom_call.1} parent=1 // pred_check
      _
    $region35: #{tpu_custom_call.1} parent=1 // pred_check_branch
      %92 = sbr.rel (0) target = $region37
    $region36: #{tpu_custom_call.1} parent=1 // pred_region
      _
    $region37: #{tpu_custom_call.1} parent=1 // pred_fallthru
      _
    // Predicated region
    $region38: #{tpu_custom_call.1} parent=1 // pred_check
      _
    $region39: #{tpu_custom_call.1} parent=1 // pred_check_branch
      %94 = sbr.rel (0) target = $region41
    $region40: #{tpu_custom_call.1} parent=1 // pred_region
      %95 = dma.done [#allocation3], 128
    $region41: #{tpu_custom_call.1} parent=1 // pred_fallthru
      _
    // Predicated region
    $region42: #{tpu_custom_call.1} parent=1 // pred_check
      _
    $region43: #{tpu_custom_call.1} parent=1 // pred_check_branch
      %97 = sbr.rel (0) target = $region45
    $region44: #{tpu_custom_call.1} parent=1 // pred_region
      %98 = dma.done [#allocation6], 2048
    $region45: #{tpu_custom_call.1} parent=1 // pred_fallthru
      _
    // Predicated region
    $region46: #{tpu_custom_call.1} parent=1 // pred_check
      _
    $region47: #{tpu_custom_call.1} parent=1 // pred_check_branch
      %100 = sbr.rel (0) target = $region49
    $region48: #{tpu_custom_call.1} parent=1 // pred_region
      %101 = dma.done [#allocation6], 128
    $region49: #{tpu_custom_call.1} parent=1 // pred_fallthru
      _
    // Predicated region
    $region50: #{tpu_custom_call.1} parent=1 // pred_check
      _
    $region51: #{tpu_custom_call.1} parent=1 // pred_check_branch
      %103 = sbr.rel (0) target = $region53
    $region52: #{tpu_custom_call.1} parent=1 // pred_region
      %104 = dma.done [#allocation9], 16384
    $region53: #{tpu_custom_call.1} parent=1 // pred_fallthru
      _
    // Predicated region
    $region54: #{tpu_custom_call.1} parent=1 // pred_check
      _
    $region55: #{tpu_custom_call.1} parent=1 // pred_check_branch
      %106 = sbr.rel (0) target = $region57
    $region56: #{tpu_custom_call.1} parent=1 // pred_region
      %107 = dma.done [#allocation9], 2048
    $region57: #{tpu_custom_call.1} parent=1 // pred_fallthru
      _
    // Predicated region
    $region58: #{tpu_custom_call.1} parent=1 // pred_check
      _
    $region59: #{tpu_custom_call.1} parent=1 // pred_check_branch
      %109 = sbr.rel (0) target = $region61
    $region60: #{tpu_custom_call.1} parent=1 // pred_region
      %110 = dma.done [#allocation12], 1024
    $region61: #{tpu_custom_call.1} parent=1 // pred_fallthru
      _
    %v112 = vld [vmem:[#allocation2] sm:$0xff]
    %v113 = vpack.c.bf16 %v112, %v112
    %v114 = vld [vmem:[#allocation5] sm:$0xff]
    %v115 = vld [vmem:[#allocation5 + $0x8] sm:$0xff]
    %v116 = vld [vmem:[#allocation5 + $0x10] sm:$0xff]
    %v117 = vld [vmem:[#allocation5 + $0x18] sm:$0xff]
    %v118 = vld [vmem:[#allocation5 + $0x20] sm:$0xff]
    %v119 = vld [vmem:[#allocation5 + $0x28] sm:$0xff]
    %v120 = vld [vmem:[#allocation5 + $0x30] sm:$0xff]
    %v121 = vld [vmem:[#allocation5 + $0x38] sm:$0xff]
    %v122 = vld [vmem:[#allocation5 + $0x40] sm:$0xff]
    %v123 = vld [vmem:[#allocation5 + $0x48] sm:$0xff]
    %v124 = vld [vmem:[#allocation5 + $0x50] sm:$0xff]
    %v125 = vld [vmem:[#allocation5 + $0x58] sm:$0xff]
    %v126 = vld [vmem:[#allocation5 + $0x60] sm:$0xff]
    %v127 = vld [vmem:[#allocation5 + $0x68] sm:$0xff]
    %v128 = vld [vmem:[#allocation5 + $0x70] sm:$0xff]
    %v129 = vld [vmem:[#allocation5 + $0x78] sm:$0xff]
    %v130 = vld [vmem:[#allocation7] sm:$0xff]
    %v132 = vlaneseq
    %v133 = vshrl.u32 %v132, 7
    %v134 = vsub.s32 0, %v133
    %v135 = vrot.slane %v130, %v134
    %v136 = vlaneseq
    %v137 = vshrl.u32 %v136, 7
    %v138 = vsub.s32 1, %v137
    %v139 = vrot.slane %v130, %v138
    %v140 = vlaneseq
    %v141 = vshrl.u32 %v140, 7
    %v142 = vsub.s32 2, %v141
    %v143 = vrot.slane %v130, %v142
    %v144 = vlaneseq
    %v145 = vshrl.u32 %v144, 7
    %v146 = vsub.s32 3, %v145
    %v147 = vrot.slane %v130, %v146
    %v148 = vlaneseq
    %v149 = vshrl.u32 %v148, 7
    %v150 = vsub.s32 4, %v149
    %v151 = vrot.slane %v130, %v150
    %v152 = vlaneseq
    %v153 = vshrl.u32 %v152, 7
    %v154 = vsub.s32 5, %v153
    %v155 = vrot.slane %v130, %v154
    %v156 = vlaneseq
    %v157 = vshrl.u32 %v156, 7
    %v158 = vsub.s32 6, %v157
    %v159 = vrot.slane %v130, %v158
    %v160 = vlaneseq
    %v161 = vshrl.u32 %v160, 7
    %v162 = vsub.s32 7, %v161
    %v163 = vrot.slane %v130, %v162
    %v188 = vunpack.c.l.b16 %v114
    %v189 = vunpack.c.h.b16 %v114
    %v190 = vunpack.c.l.b16 %v115
    %v191 = vunpack.c.h.b16 %v115
    %v192 = vunpack.c.l.b16 %v116
    %v193 = vunpack.c.h.b16 %v116
    %v194 = vunpack.c.l.b16 %v117
    %v195 = vunpack.c.h.b16 %v117
    %v196 = vunpack.c.l.b16 %v118
    %v197 = vunpack.c.h.b16 %v118
    %v198 = vunpack.c.l.b16 %v119
    %v199 = vunpack.c.h.b16 %v119
    %v200 = vunpack.c.l.b16 %v120
    %v201 = vunpack.c.h.b16 %v120
    %v202 = vunpack.c.l.b16 %v121
    %v203 = vunpack.c.h.b16 %v121
    %v204 = vunpack.c.l.b16 %v122
    %v205 = vunpack.c.h.b16 %v122
    %v206 = vunpack.c.l.b16 %v123
    %v207 = vunpack.c.h.b16 %v123
    %v208 = vunpack.c.l.b16 %v124
    %v209 = vunpack.c.h.b16 %v124
    %v210 = vunpack.c.l.b16 %v125
    %v211 = vunpack.c.h.b16 %v125
    %v212 = vunpack.c.l.b16 %v126
    %v213 = vunpack.c.h.b16 %v126
    %v214 = vunpack.c.l.b16 %v127
    %v215 = vunpack.c.h.b16 %v127
    %v216 = vunpack.c.l.b16 %v128
    %v217 = vunpack.c.h.b16 %v128
    %v218 = vunpack.c.l.b16 %v129
    %v219 = vunpack.c.h.b16 %v129
    %v220 = vpack.c.b16 %v196, %v188
    %v221 = vpack.c.b16 %v197, %v189
    %v222 = vpack.c.b16 %v198, %v190
    %v223 = vpack.c.b16 %v199, %v191
    %v224 = vpack.c.b16 %v200, %v192
    %v225 = vpack.c.b16 %v201, %v193
    %v226 = vpack.c.b16 %v202, %v194
    %v227 = vpack.c.b16 %v203, %v195
    %v228 = vpack.c.b16 %v212, %v204
    %v229 = vpack.c.b16 %v213, %v205
    %v230 = vpack.c.b16 %v214, %v206
    %v231 = vpack.c.b16 %v215, %v207
    %v232 = vpack.c.b16 %v216, %v208
    %v233 = vpack.c.b16 %v217, %v209
    %v234 = vpack.c.b16 %v218, %v210
    %v235 = vpack.c.b16 %v219, %v211
    %vm252 = vcmask 261120
    %v254 = vsel %vm252, %v113, 0
    %256 = vmatprep.subr.bf16.mxu0 0
    %257 = vmatpush1.bf16.msra.mxu0 0
    %258 = vmatprep.subr.bf16.mxu0 0
    %259 = vmatpush1.bf16.msra.mxu0 0
    %260 = vmatprep.subr.bf16.mxu0 0
    %261 = vmatpush1.bf16.msra.mxu0 0
    %262 = vmatprep.subr.bf16.mxu0 0
    %263 = vmatpush1.bf16.msra.mxu0 0
    %264 = vmatprep.subr.bf16.mxu0 0
    %265 = vmatpush1.bf16.msra.mxu0 0
    %266 = vmatprep.subr.bf16.mxu0 0
    %267 = vmatpush1.bf16.msra.mxu0 0
    %268 = vmatprep.subr.bf16.mxu0 %v229
    %269 = vmatpush1.bf16.msra.mxu0 %v228
    %270 = vmatprep.subr.bf16.mxu0 %v221
    %271 = vmatpush1.bf16.msra.mxu0 %v220
    %272 = vmatprep.subr.bf16.mxu0 0
    %273 = vmatpush2.bf16.msra.mxu0 0
    %274 = vmatprep.subr.bf16.mxu0 0
    %275 = vmatpush2.bf16.msra.mxu0 0
    %276 = vmatprep.subr.bf16.mxu0 0
    %277 = vmatpush2.bf16.msra.mxu0 0
    %278 = vmatprep.subr.bf16.mxu0 0
    %279 = vmatpush2.bf16.msra.mxu0 0
    %280 = vmatprep.subr.bf16.mxu0 0
    %281 = vmatpush2.bf16.msra.mxu0 0
    %282 = vmatprep.subr.bf16.mxu0 0
    %283 = vmatpush2.bf16.msra.mxu0 0
    %284 = vmatprep.subr.bf16.mxu0 0
    %285 = vmatpush2.bf16.msra.mxu0 0
    %286 = vmatprep.subr.bf16.mxu0 0
    %287 = vmatpush2.bf16.msra.mxu0 0
    %288 = vmatprep.mubr.bf16.mxu0 0
    %289 = vmatmul.mubr.bf16.gmra.mxu0 %v254
    %v290 = vpop.f32.mrf.mxu0
    %v291 = vadd.f32 %v135, %v290
    %v292 = vpop.f32.mrf.mxu0
    %v293 = vadd.f32 %v139, %v292
    %v294 = vpop.f32.mrf.mxu0
    %v295 = vpop.f32.mrf.mxu0
    %296 = vdwg.mxu0
    %297 = vmatprep.subr.bf16.mxu0 0
    %298 = vmatpush1.bf16.msra.mxu0 0
    %299 = vmatprep.subr.bf16.mxu0 0
    %300 = vmatpush1.bf16.msra.mxu0 0
    %301 = vmatprep.subr.bf16.mxu0 0
    %302 = vmatpush1.bf16.msra.mxu0 0
    %303 = vmatprep.subr.bf16.mxu0 0
    %304 = vmatpush1.bf16.msra.mxu0 0
    %305 = vmatprep.subr.bf16.mxu0 0
    %306 = vmatpush1.bf16.msra.mxu0 0
    %307 = vmatprep.subr.bf16.mxu0 0
    %308 = vmatpush1.bf16.msra.mxu0 0
    %309 = vmatprep.subr.bf16.mxu0 %v231
    %310 = vmatpush1.bf16.msra.mxu0 %v230
    %311 = vmatprep.subr.bf16.mxu0 %v223
    %312 = vmatpush1.bf16.msra.mxu0 %v222
    %313 = vmatprep.subr.bf16.mxu0 0
    %314 = vmatpush2.bf16.msra.mxu0 0
    %315 = vmatprep.subr.bf16.mxu0 0
    %316 = vmatpush2.bf16.msra.mxu0 0
    %317 = vmatprep.subr.bf16.mxu0 0
    %318 = vmatpush2.bf16.msra.mxu0 0
    %319 = vmatprep.subr.bf16.mxu0 0
    %320 = vmatpush2.bf16.msra.mxu0 0
    %321 = vmatprep.subr.bf16.mxu0 0
    %322 = vmatpush2.bf16.msra.mxu0 0
    %323 = vmatprep.subr.bf16.mxu0 0
    %324 = vmatpush2.bf16.msra.mxu0 0
    %325 = vmatprep.subr.bf16.mxu0 0
    %326 = vmatpush2.bf16.msra.mxu0 0
    %327 = vmatprep.subr.bf16.mxu0 0
    %328 = vmatpush2.bf16.msra.mxu0 0
    %329 = vmatprep.mubr.bf16.mxu0 0
    %330 = vmatmul.mubr.bf16.gmra.mxu0 %v254
    %v331 = vpop.f32.mrf.mxu0
    %v332 = vadd.f32 %v143, %v331
    %v333 = vpop.f32.mrf.mxu0
    %v334 = vadd.f32 %v147, %v333
    %v335 = vpop.f32.mrf.mxu0
    %v336 = vpop.f32.mrf.mxu0
    %337 = vdwg.mxu0
    %338 = vmatprep.subr.bf16.mxu0 0
    %339 = vmatpush1.bf16.msra.mxu0 0
    %340 = vmatprep.subr.bf16.mxu0 0
    %341 = vmatpush1.bf16.msra.mxu0 0
    %342 = vmatprep.subr.bf16.mxu0 0
    %343 = vmatpush1.bf16.msra.mxu0 0
    %344 = vmatprep.subr.bf16.mxu0 0
    %345 = vmatpush1.bf16.msra.mxu0 0
    %346 = vmatprep.subr.bf16.mxu0 0
    %347 = vmatpush1.bf16.msra.mxu0 0
    %348 = vmatprep.subr.bf16.mxu0 0
    %349 = vmatpush1.bf16.msra.mxu0 0
    %350 = vmatprep.subr.bf16.mxu0 %v233
    %351 = vmatpush1.bf16.msra.mxu0 %v232
    %352 = vmatprep.subr.bf16.mxu0 %v225
    %353 = vmatpush1.bf16.msra.mxu0 %v224
    %354 = vmatprep.subr.bf16.mxu0 0
    %355 = vmatpush2.bf16.msra.mxu0 0
    %356 = vmatprep.subr.bf16.mxu0 0
    %357 = vmatpush2.bf16.msra.mxu0 0
    %358 = vmatprep.subr.bf16.mxu0 0
    %359 = vmatpush2.bf16.msra.mxu0 0
    %360 = vmatprep.subr.bf16.mxu0 0
    %361 = vmatpush2.bf16.msra.mxu0 0
    %362 = vmatprep.subr.bf16.mxu0 0
    %363 = vmatpush2.bf16.msra.mxu0 0
    %364 = vmatprep.subr.bf16.mxu0 0
    %365 = vmatpush2.bf16.msra.mxu0 0
    %366 = vmatprep.subr.bf16.mxu0 0
    %367 = vmatpush2.bf16.msra.mxu0 0
    %368 = vmatprep.subr.bf16.mxu0 0
    %369 = vmatpush2.bf16.msra.mxu0 0
    %370 = vmatprep.mubr.bf16.mxu0 0
    %371 = vmatmul.mubr.bf16.gmra.mxu0 %v254
    %v372 = vpop.f32.mrf.mxu0
    %v373 = vadd.f32 %v151, %v372
    %v374 = vpop.f32.mrf.mxu0
    %v375 = vadd.f32 %v155, %v374
    %v376 = vpop.f32.mrf.mxu0
    %v377 = vpop.f32.mrf.mxu0
    %378 = vdwg.mxu0
    %379 = vmatprep.subr.bf16.mxu0 0
    %380 = vmatpush1.bf16.msra.mxu0 0
    %381 = vmatprep.subr.bf16.mxu0 0
    %382 = vmatpush1.bf16.msra.mxu0 0
    %383 = vmatprep.subr.bf16.mxu0 0
    %384 = vmatpush1.bf16.msra.mxu0 0
    %385 = vmatprep.subr.bf16.mxu0 0
    %386 = vmatpush1.bf16.msra.mxu0 0
    %387 = vmatprep.subr.bf16.mxu0 0
    %388 = vmatpush1.bf16.msra.mxu0 0
    %389 = vmatprep.subr.bf16.mxu0 0
    %390 = vmatpush1.bf16.msra.mxu0 0
    %391 = vmatprep.subr.bf16.mxu0 %v235
    %392 = vmatpush1.bf16.msra.mxu0 %v234
    %393 = vmatprep.subr.bf16.mxu0 %v227
    %394 = vmatpush1.bf16.msra.mxu0 %v226
    %395 = vmatprep.subr.bf16.mxu0 0
    %396 = vmatpush2.bf16.msra.mxu0 0
    %397 = vmatprep.subr.bf16.mxu0 0
    %398 = vmatpush2.bf16.msra.mxu0 0
    %399 = vmatprep.subr.bf16.mxu0 0
    %400 = vmatpush2.bf16.msra.mxu0 0
    %401 = vmatprep.subr.bf16.mxu0 0
    %402 = vmatpush2.bf16.msra.mxu0 0
    %403 = vmatprep.subr.bf16.mxu0 0
    %404 = vmatpush2.bf16.msra.mxu0 0
    %405 = vmatprep.subr.bf16.mxu0 0
    %406 = vmatpush2.bf16.msra.mxu0 0
    %407 = vmatprep.subr.bf16.mxu0 0
    %408 = vmatpush2.bf16.msra.mxu0 0
    %409 = vmatprep.subr.bf16.mxu0 0
    %410 = vmatpush2.bf16.msra.mxu0 0
    %411 = vmatprep.mubr.bf16.mxu0 0
    %412 = vmatmul.mubr.bf16.gmra.mxu0 %v254
    %v413 = vpop.f32.mrf.mxu0
    %v414 = vadd.f32 %v159, %v413
    %v415 = vpop.f32.mrf.mxu0
    %v416 = vadd.f32 %v163, %v415
    %v417 = vpop.f32.mrf.mxu0
    %v418 = vpop.f32.mrf.mxu0
    %419 = vdwg.mxu0
    %v420 = vmax.f32 %v291, 0.0
    %v421 = vmax.f32 %v293, 0.0
    %v422 = vmax.f32 %v332, 0.0
    %v423 = vmax.f32 %v334, 0.0
    %v424 = vmax.f32 %v373, 0.0
    %v425 = vmax.f32 %v375, 0.0
    %v426 = vmax.f32 %v414, 0.0
    %v427 = vmax.f32 %v416, 0.0
    %v428 = vpack.c.bf16 %v420, %v420
    %v429 = vpack.c.bf16 %v421, %v421
    %v430 = vpack.c.bf16 %v422, %v422
    %v431 = vpack.c.bf16 %v423, %v423
    %v432 = vpack.c.bf16 %v424, %v424
    %v433 = vpack.c.bf16 %v425, %v425
    %v434 = vpack.c.bf16 %v426, %v426
    %v435 = vpack.c.bf16 %v427, %v427
    %v436 = vld [vmem:[#allocation8] sm:$0xff]
    %v437 = vld [vmem:[#allocation8 + $0x8] sm:$0xff]
    %v438 = vld [vmem:[#allocation8 + $0x10] sm:$0xff]
    %v439 = vld [vmem:[#allocation8 + $0x18] sm:$0xff]
    %v440 = vld [vmem:[#allocation8 + $0x20] sm:$0xff]
    %v441 = vld [vmem:[#allocation8 + $0x28] sm:$0xff]
    %v442 = vld [vmem:[#allocation8 + $0x30] sm:$0xff]
    %v443 = vld [vmem:[#allocation8 + $0x38] sm:$0xff]
    %v444 = vld [vmem:[#allocation8 + $0x40] sm:$0xff]
    %v445 = vld [vmem:[#allocation8 + $0x48] sm:$0xff]
    %v446 = vld [vmem:[#allocation8 + $0x50] sm:$0xff]
    %v447 = vld [vmem:[#allocation8 + $0x58] sm:$0xff]
    %v448 = vld [vmem:[#allocation8 + $0x60] sm:$0xff]
    %v449 = vld [vmem:[#allocation8 + $0x68] sm:$0xff]
    %v450 = vld [vmem:[#allocation8 + $0x70] sm:$0xff]
    %v451 = vld [vmem:[#allocation8 + $0x78] sm:$0xff]
    %v452 = vld [vmem:[#allocation8 + $0x80] sm:$0xff]
    %v453 = vld [vmem:[#allocation8 + $0x88] sm:$0xff]
    %v454 = vld [vmem:[#allocation8 + $0x90] sm:$0xff]
    %v455 = vld [vmem:[#allocation8 + $0x98] sm:$0xff]
    %v456 = vld [vmem:[#allocation8 + $0xa0] sm:$0xff]
    %v457 = vld [vmem:[#allocation8 + $0xa8] sm:$0xff]
    %v458 = vld [vmem:[#allocation8 + $0xb0] sm:$0xff]
    %v459 = vld [vmem:[#allocation8 + $0xb8] sm:$0xff]
    %v460 = vld [vmem:[#allocation8 + $0xc0] sm:$0xff]
    %v461 = vld [vmem:[#allocation8 + $0xc8] sm:$0xff]
    %v462 = vld [vmem:[#allocation8 + $0xd0] sm:$0xff]
    %v463 = vld [vmem:[#allocation8 + $0xd8] sm:$0xff]
    %v464 = vld [vmem:[#allocation8 + $0xe0] sm:$0xff]
    %v465 = vld [vmem:[#allocation8 + $0xe8] sm:$0xff]
    %v466 = vld [vmem:[#allocation8 + $0xf0] sm:$0xff]
    %v467 = vld [vmem:[#allocation8 + $0xf8] sm:$0xff]
    %v468 = vld [vmem:[#allocation8 + $0x100] sm:$0xff]
    %v469 = vld [vmem:[#allocation8 + $0x108] sm:$0xff]
    %v470 = vld [vmem:[#allocation8 + $0x110] sm:$0xff]
    %v471 = vld [vmem:[#allocation8 + $0x118] sm:$0xff]
    %v472 = vld [vmem:[#allocation8 + $0x120] sm:$0xff]
    %v473 = vld [vmem:[#allocation8 + $0x128] sm:$0xff]
    %v474 = vld [vmem:[#allocation8 + $0x130] sm:$0xff]
    %v475 = vld [vmem:[#allocation8 + $0x138] sm:$0xff]
    %v476 = vld [vmem:[#allocation8 + $0x140] sm:$0xff]
    %v477 = vld [vmem:[#allocation8 + $0x148] sm:$0xff]
    %v478 = vld [vmem:[#allocation8 + $0x150] sm:$0xff]
    %v479 = vld [vmem:[#allocation8 + $0x158] sm:$0xff]
    %v480 = vld [vmem:[#allocation8 + $0x160] sm:$0xff]
    %v481 = vld [vmem:[#allocation8 + $0x168] sm:$0xff]
    %v482 = vld [vmem:[#allocation8 + $0x170] sm:$0xff]
    %v483 = vld [vmem:[#allocation8 + $0x178] sm:$0xff]
    %v484 = vld [vmem:[#allocation8 + $0x180] sm:$0xff]
    %v485 = vld [vmem:[#allocation8 + $0x188] sm:$0xff]
    %v486 = vld [vmem:[#allocation8 + $0x190] sm:$0xff]
    %v487 = vld [vmem:[#allocation8 + $0x198] sm:$0xff]
    %v488 = vld [vmem:[#allocation8 + $0x1a0] sm:$0xff]
    %v489 = vld [vmem:[#allocation8 + $0x1a8] sm:$0xff]
    %v490 = vld [vmem:[#allocation8 + $0x1b0] sm:$0xff]
    %v491 = vld [vmem:[#allocation8 + $0x1b8] sm:$0xff]
    %v492 = vld [vmem:[#allocation8 + $0x1c0] sm:$0xff]
    %v493 = vld [vmem:[#allocation8 + $0x1c8] sm:$0xff]
    %v494 = vld [vmem:[#allocation8 + $0x1d0] sm:$0xff]
    %v495 = vld [vmem:[#allocation8 + $0x1d8] sm:$0xff]
    %v496 = vld [vmem:[#allocation8 + $0x1e0] sm:$0xff]
    %v497 = vld [vmem:[#allocation8 + $0x1e8] sm:$0xff]
    %v498 = vld [vmem:[#allocation8 + $0x1f0] sm:$0xff]
    %v499 = vld [vmem:[#allocation8 + $0x1f8] sm:$0xff]
    %v500 = vld [vmem:[#allocation8 + $0x200] sm:$0xff]
    %v501 = vld [vmem:[#allocation8 + $0x208] sm:$0xff]
    %v502 = vld [vmem:[#allocation8 + $0x210] sm:$0xff]
    %v503 = vld [vmem:[#allocation8 + $0x218] sm:$0xff]
    %v504 = vld [vmem:[#allocation8 + $0x220] sm:$0xff]
    %v505 = vld [vmem:[#allocation8 + $0x228] sm:$0xff]
    %v506 = vld [vmem:[#allocation8 + $0x230] sm:$0xff]
    %v507 = vld [vmem:[#allocation8 + $0x238] sm:$0xff]
    %v508 = vld [vmem:[#allocation8 + $0x240] sm:$0xff]
    %v509 = vld [vmem:[#allocation8 + $0x248] sm:$0xff]
    %v510 = vld [vmem:[#allocation8 + $0x250] sm:$0xff]
    %v511 = vld [vmem:[#allocation8 + $0x258] sm:$0xff]
    %v512 = vld [vmem:[#allocation8 + $0x260] sm:$0xff]
    %v513 = vld [vmem:[#allocation8 + $0x268] sm:$0xff]
    %v514 = vld [vmem:[#allocation8 + $0x270] sm:$0xff]
    %v515 = vld [vmem:[#allocation8 + $0x278] sm:$0xff]
    %v516 = vld [vmem:[#allocation8 + $0x280] sm:$0xff]
    %v517 = vld [vmem:[#allocation8 + $0x288] sm:$0xff]
    %v518 = vld [vmem:[#allocation8 + $0x290] sm:$0xff]
    %v519 = vld [vmem:[#allocation8 + $0x298] sm:$0xff]
    %v520 = vld [vmem:[#allocation8 + $0x2a0] sm:$0xff]
    %v521 = vld [vmem:[#allocation8 + $0x2a8] sm:$0xff]
    %v522 = vld [vmem:[#allocation8 + $0x2b0] sm:$0xff]
    %v523 = vld [vmem:[#allocation8 + $0x2b8] sm:$0xff]
    %v524 = vld [vmem:[#allocation8 + $0x2c0] sm:$0xff]
    %v525 = vld [vmem:[#allocation8 + $0x2c8] sm:$0xff]
    %v526 = vld [vmem:[#allocation8 + $0x2d0] sm:$0xff]
    %v527 = vld [vmem:[#allocation8 + $0x2d8] sm:$0xff]
    %v528 = vld [vmem:[#allocation8 + $0x2e0] sm:$0xff]
    %v529 = vld [vmem:[#allocation8 + $0x2e8] sm:$0xff]
    %v530 = vld [vmem:[#allocation8 + $0x2f0] sm:$0xff]
    %v531 = vld [vmem:[#allocation8 + $0x2f8] sm:$0xff]
    %v532 = vld [vmem:[#allocation8 + $0x300] sm:$0xff]
    %v533 = vld [vmem:[#allocation8 + $0x308] sm:$0xff]
    %v534 = vld [vmem:[#allocation8 + $0x310] sm:$0xff]
    %v535 = vld [vmem:[#allocation8 + $0x318] sm:$0xff]
    %v536 = vld [vmem:[#allocation8 + $0x320] sm:$0xff]
    %v537 = vld [vmem:[#allocation8 + $0x328] sm:$0xff]
    %v538 = vld [vmem:[#allocation8 + $0x330] sm:$0xff]
    %v539 = vld [vmem:[#allocation8 + $0x338] sm:$0xff]
    %v540 = vld [vmem:[#allocation8 + $0x340] sm:$0xff]
    %v541 = vld [vmem:[#allocation8 + $0x348] sm:$0xff]
    %v542 = vld [vmem:[#allocation8 + $0x350] sm:$0xff]
    %v543 = vld [vmem:[#allocation8 + $0x358] sm:$0xff]
    %v544 = vld [vmem:[#allocation8 + $0x360] sm:$0xff]
    %v545 = vld [vmem:[#allocation8 + $0x368] sm:$0xff]
    %v546 = vld [vmem:[#allocation8 + $0x370] sm:$0xff]
    %v547 = vld [vmem:[#allocation8 + $0x378] sm:$0xff]
    %v548 = vld [vmem:[#allocation8 + $0x380] sm:$0xff]
    %v549 = vld [vmem:[#allocation8 + $0x388] sm:$0xff]
    %v550 = vld [vmem:[#allocation8 + $0x390] sm:$0xff]
    %v551 = vld [vmem:[#allocation8 + $0x398] sm:$0xff]
    %v552 = vld [vmem:[#allocation8 + $0x3a0] sm:$0xff]
    %v553 = vld [vmem:[#allocation8 + $0x3a8] sm:$0xff]
    %v554 = vld [vmem:[#allocation8 + $0x3b0] sm:$0xff]
    %v555 = vld [vmem:[#allocation8 + $0x3b8] sm:$0xff]
    %v556 = vld [vmem:[#allocation8 + $0x3c0] sm:$0xff]
    %v557 = vld [vmem:[#allocation8 + $0x3c8] sm:$0xff]
    %v558 = vld [vmem:[#allocation8 + $0x3d0] sm:$0xff]
    %v559 = vld [vmem:[#allocation8 + $0x3d8] sm:$0xff]
    %v560 = vld [vmem:[#allocation8 + $0x3e0] sm:$0xff]
    %v561 = vld [vmem:[#allocation8 + $0x3e8] sm:$0xff]
    %v562 = vld [vmem:[#allocation8 + $0x3f0] sm:$0xff]
    %v563 = vld [vmem:[#allocation8 + $0x3f8] sm:$0xff]
    %v564 = vld [vmem:[%s4] sm:$0x3]
    %v566 = vlaneseq
    %v567 = vshrl.u32 %v566, 7
    %v568 = vsub.s32 0, %v567
    %v569 = vrot.slane %v564, %v568
    %v570 = vlaneseq
    %v571 = vshrl.u32 %v570, 7
    %v572 = vsub.s32 1, %v571
    %v573 = vrot.slane %v564, %v572
    %v704 = vunpack.c.l.b16 %v436
    %v705 = vunpack.c.h.b16 %v436
    %v706 = vunpack.c.l.b16 %v437
    %v707 = vunpack.c.h.b16 %v437
    %v708 = vunpack.c.l.b16 %v438
    %v709 = vunpack.c.h.b16 %v438
    %v710 = vunpack.c.l.b16 %v439
    %v711 = vunpack.c.h.b16 %v439
    %v712 = vunpack.c.l.b16 %v440
    %v713 = vunpack.c.h.b16 %v440
    %v714 = vunpack.c.l.b16 %v441
    %v715 = vunpack.c.h.b16 %v441
    %v716 = vunpack.c.l.b16 %v442
    %v717 = vunpack.c.h.b16 %v442
    %v718 = vunpack.c.l.b16 %v443
    %v719 = vunpack.c.h.b16 %v443
    %v720 = vunpack.c.l.b16 %v444
    %v721 = vunpack.c.h.b16 %v444
    %v722 = vunpack.c.l.b16 %v445
    %v723 = vunpack.c.h.b16 %v445
    %v724 = vunpack.c.l.b16 %v446
    %v725 = vunpack.c.h.b16 %v446
    %v726 = vunpack.c.l.b16 %v447
    %v727 = vunpack.c.h.b16 %v447
    %v728 = vunpack.c.l.b16 %v448
    %v729 = vunpack.c.h.b16 %v448
    %v730 = vunpack.c.l.b16 %v449
    %v731 = vunpack.c.h.b16 %v449
    %v732 = vunpack.c.l.b16 %v450
    %v733 = vunpack.c.h.b16 %v450
    %v734 = vunpack.c.l.b16 %v451
    %v735 = vunpack.c.h.b16 %v451
    %v736 = vunpack.c.l.b16 %v452
    %v737 = vunpack.c.h.b16 %v452
    %v738 = vunpack.c.l.b16 %v453
    %v739 = vunpack.c.h.b16 %v453
    %v740 = vunpack.c.l.b16 %v454
    %v741 = vunpack.c.h.b16 %v454
    %v742 = vunpack.c.l.b16 %v455
    %v743 = vunpack.c.h.b16 %v455
    %v744 = vunpack.c.l.b16 %v456
    %v745 = vunpack.c.h.b16 %v456
    %v746 = vunpack.c.l.b16 %v457
    %v747 = vunpack.c.h.b16 %v457
    %v748 = vunpack.c.l.b16 %v458
    %v749 = vunpack.c.h.b16 %v458
    %v750 = vunpack.c.l.b16 %v459
    %v751 = vunpack.c.h.b16 %v459
    %v752 = vunpack.c.l.b16 %v460
    %v753 = vunpack.c.h.b16 %v460
    %v754 = vunpack.c.l.b16 %v461
    %v755 = vunpack.c.h.b16 %v461
    %v756 = vunpack.c.l.b16 %v462
    %v757 = vunpack.c.h.b16 %v462
    %v758 = vunpack.c.l.b16 %v463
    %v759 = vunpack.c.h.b16 %v463
    %v760 = vunpack.c.l.b16 %v464
    %v761 = vunpack.c.h.b16 %v464
    %v762 = vunpack.c.l.b16 %v465
    %v763 = vunpack.c.h.b16 %v465
    %v764 = vunpack.c.l.b16 %v466
    %v765 = vunpack.c.h.b16 %v466
    %v766 = vunpack.c.l.b16 %v467
    %v767 = vunpack.c.h.b16 %v467
    %v768 = vunpack.c.l.b16 %v468
    %v769 = vunpack.c.h.b16 %v468
    %v770 = vunpack.c.l.b16 %v469
    %v771 = vunpack.c.h.b16 %v469
    %v772 = vunpack.c.l.b16 %v470
    %v773 = vunpack.c.h.b16 %v470
    %v774 = vunpack.c.l.b16 %v471
    %v775 = vunpack.c.h.b16 %v471
    %v776 = vunpack.c.l.b16 %v472
    %v777 = vunpack.c.h.b16 %v472
    %v778 = vunpack.c.l.b16 %v473
    %v779 = vunpack.c.h.b16 %v473
    %v780 = vunpack.c.l.b16 %v474
    %v781 = vunpack.c.h.b16 %v474
    %v782 = vunpack.c.l.b16 %v475
    %v783 = vunpack.c.h.b16 %v475
    %v784 = vunpack.c.l.b16 %v476
    %v785 = vunpack.c.h.b16 %v476
    %v786 = vunpack.c.l.b16 %v477
    %v787 = vunpack.c.h.b16 %v477
    %v788 = vunpack.c.l.b16 %v478
    %v789 = vunpack.c.h.b16 %v478
    %v790 = vunpack.c.l.b16 %v479
    %v791 = vunpack.c.h.b16 %v479
    %v792 = vunpack.c.l.b16 %v480
    %v793 = vunpack.c.h.b16 %v480
    %v794 = vunpack.c.l.b16 %v481
    %v795 = vunpack.c.h.b16 %v481
    %v796 = vunpack.c.l.b16 %v482
    %v797 = vunpack.c.h.b16 %v482
    %v798 = vunpack.c.l.b16 %v483
    %v799 = vunpack.c.h.b16 %v483
    %v800 = vunpack.c.l.b16 %v484
    %v801 = vunpack.c.h.b16 %v484
    %v802 = vunpack.c.l.b16 %v485
    %v803 = vunpack.c.h.b16 %v485
    %v804 = vunpack.c.l.b16 %v486
    %v805 = vunpack.c.h.b16 %v486
    %v806 = vunpack.c.l.b16 %v487
    %v807 = vunpack.c.h.b16 %v487
    %v808 = vunpack.c.l.b16 %v488
    %v809 = vunpack.c.h.b16 %v488
    %v810 = vunpack.c.l.b16 %v489
    %v811 = vunpack.c.h.b16 %v489
    %v812 = vunpack.c.l.b16 %v490
    %v813 = vunpack.c.h.b16 %v490
    %v814 = vunpack.c.l.b16 %v491
    %v815 = vunpack.c.h.b16 %v491
    %v816 = vunpack.c.l.b16 %v492
    %v817 = vunpack.c.h.b16 %v492
    %v818 = vunpack.c.l.b16 %v493
    %v819 = vunpack.c.h.b16 %v493
    %v820 = vunpack.c.l.b16 %v494
    %v821 = vunpack.c.h.b16 %v494
    %v822 = vunpack.c.l.b16 %v495
    %v823 = vunpack.c.h.b16 %v495
    %v824 = vunpack.c.l.b16 %v496
    %v825 = vunpack.c.h.b16 %v496
    %v826 = vunpack.c.l.b16 %v497
    %v827 = vunpack.c.h.b16 %v497
    %v828 = vunpack.c.l.b16 %v498
    %v829 = vunpack.c.h.b16 %v498
    %v830 = vunpack.c.l.b16 %v499
    %v831 = vunpack.c.h.b16 %v499
    %v832 = vunpack.c.l.b16 %v500
    %v833 = vunpack.c.h.b16 %v500
    %v834 = vunpack.c.l.b16 %v501
    %v835 = vunpack.c.h.b16 %v501
    %v836 = vunpack.c.l.b16 %v502
    %v837 = vunpack.c.h.b16 %v502
    %v838 = vunpack.c.l.b16 %v503
    %v839 = vunpack.c.h.b16 %v503
    %v840 = vunpack.c.l.b16 %v504
    %v841 = vunpack.c.h.b16 %v504
    %v842 = vunpack.c.l.b16 %v505
    %v843 = vunpack.c.h.b16 %v505
    %v844 = vunpack.c.l.b16 %v506
    %v845 = vunpack.c.h.b16 %v506
    %v846 = vunpack.c.l.b16 %v507
    %v847 = vunpack.c.h.b16 %v507
    %v848 = vunpack.c.l.b16 %v508
    %v849 = vunpack.c.h.b16 %v508
    %v850 = vunpack.c.l.b16 %v509
    %v851 = vunpack.c.h.b16 %v509
    %v852 = vunpack.c.l.b16 %v510
    %v853 = vunpack.c.h.b16 %v510
    %v854 = vunpack.c.l.b16 %v511
    %v855 = vunpack.c.h.b16 %v511
    %v856 = vunpack.c.l.b16 %v512
    %v857 = vunpack.c.h.b16 %v512
    %v858 = vunpack.c.l.b16 %v513
    %v859 = vunpack.c.h.b16 %v513
    %v860 = vunpack.c.l.b16 %v514
    %v861 = vunpack.c.h.b16 %v514
    %v862 = vunpack.c.l.b16 %v515
    %v863 = vunpack.c.h.b16 %v515
    %v864 = vunpack.c.l.b16 %v516
    %v865 = vunpack.c.h.b16 %v516
    %v866 = vunpack.c.l.b16 %v517
    %v867 = vunpack.c.h.b16 %v517
    %v868 = vunpack.c.l.b16 %v518
    %v869 = vunpack.c.h.b16 %v518
    %v870 = vunpack.c.l.b16 %v519
    %v871 = vunpack.c.h.b16 %v519
    %v872 = vunpack.c.l.b16 %v520
    %v873 = vunpack.c.h.b16 %v520
    %v874 = vunpack.c.l.b16 %v521
    %v875 = vunpack.c.h.b16 %v521
    %v876 = vunpack.c.l.b16 %v522
    %v877 = vunpack.c.h.b16 %v522
    %v878 = vunpack.c.l.b16 %v523
    %v879 = vunpack.c.h.b16 %v523
    %v880 = vunpack.c.l.b16 %v524
    %v881 = vunpack.c.h.b16 %v524
    %v882 = vunpack.c.l.b16 %v525
    %v883 = vunpack.c.h.b16 %v525
    %v884 = vunpack.c.l.b16 %v526
    %v885 = vunpack.c.h.b16 %v526
    %v886 = vunpack.c.l.b16 %v527
    %v887 = vunpack.c.h.b16 %v527
    %v888 = vunpack.c.l.b16 %v528
    %v889 = vunpack.c.h.b16 %v528
    %v890 = vunpack.c.l.b16 %v529
    %v891 = vunpack.c.h.b16 %v529
    %v892 = vunpack.c.l.b16 %v530
    %v893 = vunpack.c.h.b16 %v530
    %v894 = vunpack.c.l.b16 %v531
    %v895 = vunpack.c.h.b16 %v531
    %v896 = vunpack.c.l.b16 %v532
    %v897 = vunpack.c.h.b16 %v532
    %v898 = vunpack.c.l.b16 %v533
    %v899 = vunpack.c.h.b16 %v533
    %v900 = vunpack.c.l.b16 %v534
    %v901 = vunpack.c.h.b16 %v534
    %v902 = vunpack.c.l.b16 %v535
    %v903 = vunpack.c.h.b16 %v535
    %v904 = vunpack.c.l.b16 %v536
    %v905 = vunpack.c.h.b16 %v536
    %v906 = vunpack.c.l.b16 %v537
    %v907 = vunpack.c.h.b16 %v537
    %v908 = vunpack.c.l.b16 %v538
    %v909 = vunpack.c.h.b16 %v538
    %v910 = vunpack.c.l.b16 %v539
    %v911 = vunpack.c.h.b16 %v539
    %v912 = vunpack.c.l.b16 %v540
    %v913 = vunpack.c.h.b16 %v540
    %v914 = vunpack.c.l.b16 %v541
    %v915 = vunpack.c.h.b16 %v541
    %v916 = vunpack.c.l.b16 %v542
    %v917 = vunpack.c.h.b16 %v542
    %v918 = vunpack.c.l.b16 %v543
    %v919 = vunpack.c.h.b16 %v543
    %v920 = vunpack.c.l.b16 %v544
    %v921 = vunpack.c.h.b16 %v544
    %v922 = vunpack.c.l.b16 %v545
    %v923 = vunpack.c.h.b16 %v545
    %v924 = vunpack.c.l.b16 %v546
    %v925 = vunpack.c.h.b16 %v546
    %v926 = vunpack.c.l.b16 %v547
    %v927 = vunpack.c.h.b16 %v547
    %v928 = vunpack.c.l.b16 %v548
    %v929 = vunpack.c.h.b16 %v548
    %v930 = vunpack.c.l.b16 %v549
    %v931 = vunpack.c.h.b16 %v549
    %v932 = vunpack.c.l.b16 %v550
    %v933 = vunpack.c.h.b16 %v550
    %v934 = vunpack.c.l.b16 %v551
    %v935 = vunpack.c.h.b16 %v551
    %v936 = vunpack.c.l.b16 %v552
    %v937 = vunpack.c.h.b16 %v552
    %v938 = vunpack.c.l.b16 %v553
    %v939 = vunpack.c.h.b16 %v553
    %v940 = vunpack.c.l.b16 %v554
    %v941 = vunpack.c.h.b16 %v554
    %v942 = vunpack.c.l.b16 %v555
    %v943 = vunpack.c.h.b16 %v555
    %v944 = vunpack.c.l.b16 %v556
    %v945 = vunpack.c.h.b16 %v556
    %v946 = vunpack.c.l.b16 %v557
    %v947 = vunpack.c.h.b16 %v557
    %v948 = vunpack.c.l.b16 %v558
    %v949 = vunpack.c.h.b16 %v558
    %v950 = vunpack.c.l.b16 %v559
    %v951 = vunpack.c.h.b16 %v559
    %v952 = vunpack.c.l.b16 %v560
    %v953 = vunpack.c.h.b16 %v560
    %v954 = vunpack.c.l.b16 %v561
    %v955 = vunpack.c.h.b16 %v561
    %v956 = vunpack.c.l.b16 %v562
    %v957 = vunpack.c.h.b16 %v562
    %v958 = vunpack.c.l.b16 %v563
    %v959 = vunpack.c.h.b16 %v563
    %v960 = vpack.c.b16 %v706, %v704
    %v961 = vpack.c.b16 %v707, %v705
    %v962 = vpack.c.b16 %v710, %v708
    %v963 = vpack.c.b16 %v711, %v709
    %v964 = vpack.c.b16 %v714, %v712
    %v965 = vpack.c.b16 %v715, %v713
    %v966 = vpack.c.b16 %v718, %v716
    %v967 = vpack.c.b16 %v719, %v717
    %v968 = vpack.c.b16 %v722, %v720
    %v969 = vpack.c.b16 %v723, %v721
    %v970 = vpack.c.b16 %v726, %v724
    %v971 = vpack.c.b16 %v727, %v725
    %v972 = vpack.c.b16 %v730, %v728
    %v973 = vpack.c.b16 %v731, %v729
    %v974 = vpack.c.b16 %v734, %v732
    %v975 = vpack.c.b16 %v735, %v733
    %v976 = vpack.c.b16 %v738, %v736
    %v977 = vpack.c.b16 %v739, %v737
    %v978 = vpack.c.b16 %v742, %v740
    %v979 = vpack.c.b16 %v743, %v741
    %v980 = vpack.c.b16 %v746, %v744
    %v981 = vpack.c.b16 %v747, %v745
    %v982 = vpack.c.b16 %v750, %v748
    %v983 = vpack.c.b16 %v751, %v749
    %v984 = vpack.c.b16 %v754, %v752
    %v985 = vpack.c.b16 %v755, %v753
    %v986 = vpack.c.b16 %v758, %v756
    %v987 = vpack.c.b16 %v759, %v757
    %v988 = vpack.c.b16 %v762, %v760
    %v989 = vpack.c.b16 %v763, %v761
    %v990 = vpack.c.b16 %v766, %v764
    %v991 = vpack.c.b16 %v767, %v765
    %v992 = vpack.c.b16 %v770, %v768
    %v993 = vpack.c.b16 %v771, %v769
    %v994 = vpack.c.b16 %v774, %v772
    %v995 = vpack.c.b16 %v775, %v773
    %v996 = vpack.c.b16 %v778, %v776
    %v997 = vpack.c.b16 %v779, %v777
    %v998 = vpack.c.b16 %v782, %v780
    %v999 = vpack.c.b16 %v783, %v781
    %v1000 = vpack.c.b16 %v786, %v784
    %v1001 = vpack.c.b16 %v787, %v785
    %v1002 = vpack.c.b16 %v790, %v788
    %v1003 = vpack.c.b16 %v791, %v789
    %v1004 = vpack.c.b16 %v794, %v792
    %v1005 = vpack.c.b16 %v795, %v793
    %v1006 = vpack.c.b16 %v798, %v796
    %v1007 = vpack.c.b16 %v799, %v797
    %v1008 = vpack.c.b16 %v802, %v800
    %v1009 = vpack.c.b16 %v803, %v801
    %v1010 = vpack.c.b16 %v806, %v804
    %v1011 = vpack.c.b16 %v807, %v805
    %v1012 = vpack.c.b16 %v810, %v808
    %v1013 = vpack.c.b16 %v811, %v809
    %v1014 = vpack.c.b16 %v814, %v812
    %v1015 = vpack.c.b16 %v815, %v813
    %v1016 = vpack.c.b16 %v818, %v816
    %v1017 = vpack.c.b16 %v819, %v817
    %v1018 = vpack.c.b16 %v822, %v820
    %v1019 = vpack.c.b16 %v823, %v821
    %v1020 = vpack.c.b16 %v826, %v824
    %v1021 = vpack.c.b16 %v827, %v825
    %v1022 = vpack.c.b16 %v830, %v828
    %v1023 = vpack.c.b16 %v831, %v829
    %v1024 = vpack.c.b16 %v834, %v832
    %v1025 = vpack.c.b16 %v835, %v833
    %v1026 = vpack.c.b16 %v838, %v836
    %v1027 = vpack.c.b16 %v839, %v837
    %v1028 = vpack.c.b16 %v842, %v840
    %v1029 = vpack.c.b16 %v843, %v841
    %v1030 = vpack.c.b16 %v846, %v844
    %v1031 = vpack.c.b16 %v847, %v845
    %v1032 = vpack.c.b16 %v850, %v848
    %v1033 = vpack.c.b16 %v851, %v849
    %v1034 = vpack.c.b16 %v854, %v852
    %v1035 = vpack.c.b16 %v855, %v853
    %v1036 = vpack.c.b16 %v858, %v856
    %v1037 = vpack.c.b16 %v859, %v857
    %v1038 = vpack.c.b16 %v862, %v860
    %v1039 = vpack.c.b16 %v863, %v861
    %v1040 = vpack.c.b16 %v866, %v864
    %v1041 = vpack.c.b16 %v867, %v865
    %v1042 = vpack.c.b16 %v870, %v868
    %v1043 = vpack.c.b16 %v871, %v869
    %v1044 = vpack.c.b16 %v874, %v872
    %v1045 = vpack.c.b16 %v875, %v873
    %v1046 = vpack.c.b16 %v878, %v876
    %v1047 = vpack.c.b16 %v879, %v877
    %v1048 = vpack.c.b16 %v882, %v880
    %v1049 = vpack.c.b16 %v883, %v881
    %v1050 = vpack.c.b16 %v886, %v884
    %v1051 = vpack.c.b16 %v887, %v885
    %v1052 = vpack.c.b16 %v890, %v888
    %v1053 = vpack.c.b16 %v891, %v889
    %v1054 = vpack.c.b16 %v894, %v892
    %v1055 = vpack.c.b16 %v895, %v893
    %v1056 = vpack.c.b16 %v898, %v896
    %v1057 = vpack.c.b16 %v899, %v897
    %v1058 = vpack.c.b16 %v902, %v900
    %v1059 = vpack.c.b16 %v903, %v901
    %v1060 = vpack.c.b16 %v906, %v904
    %v1061 = vpack.c.b16 %v907, %v905
    %v1062 = vpack.c.b16 %v910, %v908
    %v1063 = vpack.c.b16 %v911, %v909
    %v1064 = vpack.c.b16 %v914, %v912
    %v1065 = vpack.c.b16 %v915, %v913
    %v1066 = vpack.c.b16 %v918, %v916
    %v1067 = vpack.c.b16 %v919, %v917
    %v1068 = vpack.c.b16 %v922, %v920
    %v1069 = vpack.c.b16 %v923, %v921
    %v1070 = vpack.c.b16 %v926, %v924
    %v1071 = vpack.c.b16 %v927, %v925
    %v1072 = vpack.c.b16 %v930, %v928
    %v1073 = vpack.c.b16 %v931, %v929
    %v1074 = vpack.c.b16 %v934, %v932
    %v1075 = vpack.c.b16 %v935, %v933
    %v1076 = vpack.c.b16 %v938, %v936
    %v1077 = vpack.c.b16 %v939, %v937
    %v1078 = vpack.c.b16 %v942, %v940
    %v1079 = vpack.c.b16 %v943, %v941
    %v1080 = vpack.c.b16 %v946, %v944
    %v1081 = vpack.c.b16 %v947, %v945
    %v1082 = vpack.c.b16 %v950, %v948
    %v1083 = vpack.c.b16 %v951, %v949
    %v1084 = vpack.c.b16 %v954, %v952
    %v1085 = vpack.c.b16 %v955, %v953
    %v1086 = vpack.c.b16 %v958, %v956
    %v1087 = vpack.c.b16 %v959, %v957
    %1216 = vmatprep.subr.bf16.mxu0 %v975
    %1217 = vmatpush1.bf16.msra.mxu0 %v974
    %1218 = vmatprep.subr.bf16.mxu0 %v973
    %1219 = vmatpush1.bf16.msra.mxu0 %v972
    %1220 = vmatprep.subr.bf16.mxu0 %v971
    %1221 = vmatpush1.bf16.msra.mxu0 %v970
    %1222 = vmatprep.subr.bf16.mxu0 %v969
    %1223 = vmatpush1.bf16.msra.mxu0 %v968
    %1224 = vmatprep.subr.bf16.mxu0 %v967
    %1225 = vmatpush1.bf16.msra.mxu0 %v966
    %1226 = vmatprep.subr.bf16.mxu0 %v965
    %1227 = vmatpush1.bf16.msra.mxu0 %v964
    %1228 = vmatprep.subr.bf16.mxu0 %v963
    %1229 = vmatpush1.bf16.msra.mxu0 %v962
    %1230 = vmatprep.subr.bf16.mxu0 %v961
    %1231 = vmatpush1.bf16.msra.mxu0 %v960
    %1232 = vmatprep.subr.bf16.mxu0 %v991
    %1233 = vmatpush2.bf16.msra.mxu0 %v990
    %1234 = vmatprep.subr.bf16.mxu0 %v989
    %1235 = vmatpush2.bf16.msra.mxu0 %v988
    %1236 = vmatprep.subr.bf16.mxu0 %v987
    %1237 = vmatpush2.bf16.msra.mxu0 %v986
    %1238 = vmatprep.subr.bf16.mxu0 %v985
    %1239 = vmatpush2.bf16.msra.mxu0 %v984
    %1240 = vmatprep.subr.bf16.mxu0 %v983
    %1241 = vmatpush2.bf16.msra.mxu0 %v982
    %1242 = vmatprep.subr.bf16.mxu0 %v981
    %1243 = vmatpush2.bf16.msra.mxu0 %v980
    %1244 = vmatprep.subr.bf16.mxu0 %v979
    %1245 = vmatpush2.bf16.msra.mxu0 %v978
    %1246 = vmatprep.subr.bf16.mxu0 %v977
    %1247 = vmatpush2.bf16.msra.mxu0 %v976
    %1248 = vmatprep.mubr.bf16.mxu0 %v429
    %1249 = vmatmul.mubr.bf16.gmra.mxu0 %v428
    %v1250 = vpop.f32.mrf.mxu0
    %v1251 = vadd.f32 %v569, %v1250
    %v1252 = vpop.f32.mrf.mxu0
    %v1253 = vadd.f32 %v573, %v1252
    %v1254 = vpop.f32.mrf.mxu0
    %v1255 = vpop.f32.mrf.mxu0
    %1256 = vdwg.mxu0
    %1257 = vmatprep.subr.bf16.mxu0 %v1007
    %1258 = vmatpush1.bf16.msra.mxu0 %v1006
    %1259 = vmatprep.subr.bf16.mxu0 %v1005
    %1260 = vmatpush1.bf16.msra.mxu0 %v1004
    %1261 = vmatprep.subr.bf16.mxu0 %v1003
    %1262 = vmatpush1.bf16.msra.mxu0 %v1002
    %1263 = vmatprep.subr.bf16.mxu0 %v1001
    %1264 = vmatpush1.bf16.msra.mxu0 %v1000
    %1265 = vmatprep.subr.bf16.mxu0 %v999
    %1266 = vmatpush1.bf16.msra.mxu0 %v998
    %1267 = vmatprep.subr.bf16.mxu0 %v997
    %1268 = vmatpush1.bf16.msra.mxu0 %v996
    %1269 = vmatprep.subr.bf16.mxu0 %v995
    %1270 = vmatpush1.bf16.msra.mxu0 %v994
    %1271 = vmatprep.subr.bf16.mxu0 %v993
    %1272 = vmatpush1.bf16.msra.mxu0 %v992
    %1273 = vmatprep.subr.bf16.mxu0 %v1023
    %1274 = vmatpush2.bf16.msra.mxu0 %v1022
    %1275 = vmatprep.subr.bf16.mxu0 %v1021
    %1276 = vmatpush2.bf16.msra.mxu0 %v1020
    %1277 = vmatprep.subr.bf16.mxu0 %v1019
    %1278 = vmatpush2.bf16.msra.mxu0 %v1018
    %1279 = vmatprep.subr.bf16.mxu0 %v1017
    %1280 = vmatpush2.bf16.msra.mxu0 %v1016
    %1281 = vmatprep.subr.bf16.mxu0 %v1015
    %1282 = vmatpush2.bf16.msra.mxu0 %v1014
    %1283 = vmatprep.subr.bf16.mxu0 %v1013
    %1284 = vmatpush2.bf16.msra.mxu0 %v1012
    %1285 = vmatprep.subr.bf16.mxu0 %v1011
    %1286 = vmatpush2.bf16.msra.mxu0 %v1010
    %1287 = vmatprep.subr.bf16.mxu0 %v1009
    %1288 = vmatpush2.bf16.msra.mxu0 %v1008
    %1289 = vmatprep.mubr.bf16.mxu0 %v431
    %1290 = vmatmul.mubr.bf16.gmra.mxu0 %v430
    %v1291 = vpop.f32.mrf.mxu0
    %v1292 = vadd.f32 %v1251, %v1291
    %v1293 = vpop.f32.mrf.mxu0
    %v1294 = vadd.f32 %v1253, %v1293
    %v1295 = vpop.f32.mrf.mxu0
    %v1296 = vpop.f32.mrf.mxu0
    %1297 = vdwg.mxu0
    %1298 = vmatprep.subr.bf16.mxu0 %v1039
    %1299 = vmatpush1.bf16.msra.mxu0 %v1038
    %1300 = vmatprep.subr.bf16.mxu0 %v1037
    %1301 = vmatpush1.bf16.msra.mxu0 %v1036
    %1302 = vmatprep.subr.bf16.mxu0 %v1035
    %1303 = vmatpush1.bf16.msra.mxu0 %v1034
    %1304 = vmatprep.subr.bf16.mxu0 %v1033
    %1305 = vmatpush1.bf16.msra.mxu0 %v1032
    %1306 = vmatprep.subr.bf16.mxu0 %v1031
    %1307 = vmatpush1.bf16.msra.mxu0 %v1030
    %1308 = vmatprep.subr.bf16.mxu0 %v1029
    %1309 = vmatpush1.bf16.msra.mxu0 %v1028
    %1310 = vmatprep.subr.bf16.mxu0 %v1027
    %1311 = vmatpush1.bf16.msra.mxu0 %v1026
    %1312 = vmatprep.subr.bf16.mxu0 %v1025
    %1313 = vmatpush1.bf16.msra.mxu0 %v1024
    %1314 = vmatprep.subr.bf16.mxu0 %v1055
    %1315 = vmatpush2.bf16.msra.mxu0 %v1054
    %1316 = vmatprep.subr.bf16.mxu0 %v1053
    %1317 = vmatpush2.bf16.msra.mxu0 %v1052
    %1318 = vmatprep.subr.bf16.mxu0 %v1051
    %1319 = vmatpush2.bf16.msra.mxu0 %v1050
    %1320 = vmatprep.subr.bf16.mxu0 %v1049
    %1321 = vmatpush2.bf16.msra.mxu0 %v1048
    %1322 = vmatprep.subr.bf16.mxu0 %v1047
    %1323 = vmatpush2.bf16.msra.mxu0 %v1046
    %1324 = vmatprep.subr.bf16.mxu0 %v1045
    %1325 = vmatpush2.bf16.msra.mxu0 %v1044
    %1326 = vmatprep.subr.bf16.mxu0 %v1043
    %1327 = vmatpush2.bf16.msra.mxu0 %v1042
    %1328 = vmatprep.subr.bf16.mxu0 %v1041
    %1329 = vmatpush2.bf16.msra.mxu0 %v1040
    %1330 = vmatprep.mubr.bf16.mxu0 %v433
    %1331 = vmatmul.mubr.bf16.gmra.mxu0 %v432
    %v1332 = vpop.f32.mrf.mxu0
    %v1333 = vadd.f32 %v1292, %v1332
    %v1334 = vpop.f32.mrf.mxu0
    %v1335 = vadd.f32 %v1294, %v1334
    %v1336 = vpop.f32.mrf.mxu0
    %v1337 = vpop.f32.mrf.mxu0
    %1338 = vdwg.mxu0
    %1339 = vmatprep.subr.bf16.mxu0 %v1071
    %1340 = vmatpush1.bf16.msra.mxu0 %v1070
    %1341 = vmatprep.subr.bf16.mxu0 %v1069
    %1342 = vmatpush1.bf16.msra.mxu0 %v1068
    %1343 = vmatprep.subr.bf16.mxu0 %v1067
    %1344 = vmatpush1.bf16.msra.mxu0 %v1066
    %1345 = vmatprep.subr.bf16.mxu0 %v1065
    %1346 = vmatpush1.bf16.msra.mxu0 %v1064
    %1347 = vmatprep.subr.bf16.mxu0 %v1063
    %1348 = vmatpush1.bf16.msra.mxu0 %v1062
    %1349 = vmatprep.subr.bf16.mxu0 %v1061
    %1350 = vmatpush1.bf16.msra.mxu0 %v1060
    %1351 = vmatprep.subr.bf16.mxu0 %v1059
    %1352 = vmatpush1.bf16.msra.mxu0 %v1058
    %1353 = vmatprep.subr.bf16.mxu0 %v1057
    %1354 = vmatpush1.bf16.msra.mxu0 %v1056
    %1355 = vmatprep.subr.bf16.mxu0 %v1087
    %1356 = vmatpush2.bf16.msra.mxu0 %v1086
    %1357 = vmatprep.subr.bf16.mxu0 %v1085
    %1358 = vmatpush2.bf16.msra.mxu0 %v1084
    %1359 = vmatprep.subr.bf16.mxu0 %v1083
    %1360 = vmatpush2.bf16.msra.mxu0 %v1082
    %1361 = vmatprep.subr.bf16.mxu0 %v1081
    %1362 = vmatpush2.bf16.msra.mxu0 %v1080
    %1363 = vmatprep.subr.bf16.mxu0 %v1079
    %1364 = vmatpush2.bf16.msra.mxu0 %v1078
    %1365 = vmatprep.subr.bf16.mxu0 %v1077
    %1366 = vmatpush2.bf16.msra.mxu0 %v1076
    %1367 = vmatprep.subr.bf16.mxu0 %v1075
    %1368 = vmatpush2.bf16.msra.mxu0 %v1074
    %1369 = vmatprep.subr.bf16.mxu0 %v1073
    %1370 = vmatpush2.bf16.msra.mxu0 %v1072
    %1371 = vmatprep.mubr.bf16.mxu0 %v435
    %1372 = vmatmul.mubr.bf16.gmra.mxu0 %v434
    %v1373 = vpop.f32.mrf.mxu0
    %v1374 = vadd.f32 %v1333, %v1373
    %v1375 = vpop.f32.mrf.mxu0
    %v1376 = vadd.f32 %v1335, %v1375
    %v1377 = vpop.f32.mrf.mxu0
    %v1378 = vpop.f32.mrf.mxu0
    %1379 = vdwg.mxu0
    %v1380 = vmax.f32 %v1374, 0.0
    %v1381 = vmax.f32 %v1376, 0.0
    %v1382 = vpack.c.bf16 %v1380, %v1380
    %v1383 = vpack.c.bf16 %v1381, %v1381
    %v1384 = vld [vmem:[#allocation10] sm:$0xf]
    %v1385 = vld [vmem:[#allocation10 + $0x4] sm:$0xf]
    %v1386 = vld [vmem:[#allocation10 + $0x8] sm:$0xf]
    %v1387 = vld [vmem:[#allocation10 + $0xc] sm:$0xf]
    %v1388 = vld [vmem:[#allocation10 + $0x10] sm:$0xf]
    %v1389 = vld [vmem:[#allocation10 + $0x14] sm:$0xf]
    %v1390 = vld [vmem:[#allocation10 + $0x18] sm:$0xf]
    %v1391 = vld [vmem:[#allocation10 + $0x1c] sm:$0xf]
    %v1392 = vld [vmem:[#allocation10 + $0x20] sm:$0xf]
    %v1393 = vld [vmem:[#allocation10 + $0x24] sm:$0xf]
    %v1394 = vld [vmem:[#allocation10 + $0x28] sm:$0xf]
    %v1395 = vld [vmem:[#allocation10 + $0x2c] sm:$0xf]
    %v1396 = vld [vmem:[#allocation10 + $0x30] sm:$0xf]
    %v1397 = vld [vmem:[#allocation10 + $0x34] sm:$0xf]
    %v1398 = vld [vmem:[#allocation10 + $0x38] sm:$0xf]
    %v1399 = vld [vmem:[#allocation10 + $0x3c] sm:$0xf]
    %v1400 = vld [vmem:[#allocation10 + $0x40] sm:$0xf]
    %v1401 = vld [vmem:[#allocation10 + $0x44] sm:$0xf]
    %v1402 = vld [vmem:[#allocation10 + $0x48] sm:$0xf]
    %v1403 = vld [vmem:[#allocation10 + $0x4c] sm:$0xf]
    %v1404 = vld [vmem:[#allocation10 + $0x50] sm:$0xf]
    %v1405 = vld [vmem:[#allocation10 + $0x54] sm:$0xf]
    %v1406 = vld [vmem:[#allocation10 + $0x58] sm:$0xf]
    %v1407 = vld [vmem:[#allocation10 + $0x5c] sm:$0xf]
    %v1408 = vld [vmem:[#allocation10 + $0x60] sm:$0xf]
    %v1409 = vld [vmem:[#allocation10 + $0x64] sm:$0xf]
    %v1410 = vld [vmem:[#allocation10 + $0x68] sm:$0xf]
    %v1411 = vld [vmem:[#allocation10 + $0x6c] sm:$0xf]
    %v1412 = vld [vmem:[#allocation10 + $0x70] sm:$0xf]
    %v1413 = vld [vmem:[#allocation10 + $0x74] sm:$0xf]
    %v1414 = vld [vmem:[#allocation10 + $0x78] sm:$0xf]
    %v1415 = vld [vmem:[#allocation10 + $0x7c] sm:$0xf]
    %v1416 = vld [vmem:[%s6] sm:$0x1]
    %v1418 = vlaneseq
    %v1419 = vshrl.u32 %v1418, 7
    %v1420 = vsub.s32 0, %v1419
    %v1421 = vrot.slane %v1416, %v1420
    %v1455 = vunpack.c.l.b16 %v1384
    %v1456 = vunpack.c.l.b16 %v1385
    %v1457 = vunpack.c.l.b16 %v1386
    %v1458 = vunpack.c.l.b16 %v1387
    %v1459 = vunpack.c.l.b16 %v1388
    %v1460 = vunpack.c.l.b16 %v1389
    %v1461 = vunpack.c.l.b16 %v1390
    %v1462 = vunpack.c.l.b16 %v1391
    %v1463 = vunpack.c.l.b16 %v1392
    %v1464 = vunpack.c.l.b16 %v1393
    %v1465 = vunpack.c.l.b16 %v1394
    %v1466 = vunpack.c.l.b16 %v1395
    %v1467 = vunpack.c.l.b16 %v1396
    %v1468 = vunpack.c.l.b16 %v1397
    %v1469 = vunpack.c.l.b16 %v1398
    %v1470 = vunpack.c.l.b16 %v1399
    %v1471 = vunpack.c.l.b16 %v1400
    %v1472 = vunpack.c.l.b16 %v1401
    %v1473 = vunpack.c.l.b16 %v1402
    %v1474 = vunpack.c.l.b16 %v1403
    %v1475 = vunpack.c.l.b16 %v1404
    %v1476 = vunpack.c.l.b16 %v1405
    %v1477 = vunpack.c.l.b16 %v1406
    %v1478 = vunpack.c.l.b16 %v1407
    %v1479 = vunpack.c.l.b16 %v1408
    %v1480 = vunpack.c.l.b16 %v1409
    %v1481 = vunpack.c.l.b16 %v1410
    %v1482 = vunpack.c.l.b16 %v1411
    %v1483 = vunpack.c.l.b16 %v1412
    %v1484 = vunpack.c.l.b16 %v1413
    %v1485 = vunpack.c.l.b16 %v1414
    %v1486 = vunpack.c.l.b16 %v1415
    %v1487 = vpack.c.b16 %v1456, %v1455
    %v1488 = vpack.c.b16 %v1458, %v1457
    %v1489 = vpack.c.b16 %v1460, %v1459
    %v1490 = vpack.c.b16 %v1462, %v1461
    %v1491 = vpack.c.b16 %v1464, %v1463
    %v1492 = vpack.c.b16 %v1466, %v1465
    %v1493 = vpack.c.b16 %v1468, %v1467
    %v1494 = vpack.c.b16 %v1470, %v1469
    %v1495 = vpack.c.b16 %v1472, %v1471
    %v1496 = vpack.c.b16 %v1474, %v1473
    %v1497 = vpack.c.b16 %v1476, %v1475
    %v1498 = vpack.c.b16 %v1478, %v1477
    %v1499 = vpack.c.b16 %v1480, %v1479
    %v1500 = vpack.c.b16 %v1482, %v1481
    %v1501 = vpack.c.b16 %v1484, %v1483
    %v1502 = vpack.c.b16 %v1486, %v1485
    %1519 = vmatprep.subr.bf16.mxu0 0
    %1520 = vmatpush1.bf16.msra.mxu0 %v1494
    %1521 = vmatprep.subr.bf16.mxu0 0
    %1522 = vmatpush1.bf16.msra.mxu0 %v1493
    %1523 = vmatprep.subr.bf16.mxu0 0
    %1524 = vmatpush1.bf16.msra.mxu0 %v1492
    %1525 = vmatprep.subr.bf16.mxu0 0
    %1526 = vmatpush1.bf16.msra.mxu0 %v1491
    %1527 = vmatprep.subr.bf16.mxu0 0
    %1528 = vmatpush1.bf16.msra.mxu0 %v1490
    %1529 = vmatprep.subr.bf16.mxu0 0
    %1530 = vmatpush1.bf16.msra.mxu0 %v1489
    %1531 = vmatprep.subr.bf16.mxu0 0
    %1532 = vmatpush1.bf16.msra.mxu0 %v1488
    %1533 = vmatprep.subr.bf16.mxu0 0
    %1534 = vmatpush1.bf16.msra.mxu0 %v1487
    %1535 = vmatprep.subr.bf16.mxu0 0
    %1536 = vmatpush2.bf16.msra.mxu0 %v1502
    %1537 = vmatprep.subr.bf16.mxu0 0
    %1538 = vmatpush2.bf16.msra.mxu0 %v1501
    %1539 = vmatprep.subr.bf16.mxu0 0
    %1540 = vmatpush2.bf16.msra.mxu0 %v1500
    %1541 = vmatprep.subr.bf16.mxu0 0
    %1542 = vmatpush2.bf16.msra.mxu0 %v1499
    %1543 = vmatprep.subr.bf16.mxu0 0
    %1544 = vmatpush2.bf16.msra.mxu0 %v1498
    %1545 = vmatprep.subr.bf16.mxu0 0
    %1546 = vmatpush2.bf16.msra.mxu0 %v1497
    %1547 = vmatprep.subr.bf16.mxu0 0
    %1548 = vmatpush2.bf16.msra.mxu0 %v1496
    %1549 = vmatprep.subr.bf16.mxu0 0
    %1550 = vmatpush2.bf16.msra.mxu0 %v1495
    %1551 = vmatprep.mubr.bf16.mxu0 %v1383
    %1552 = vmatmul.mubr.bf16.gmra.mxu0 %v1382
    %v1553 = vpop.f32.mrf.mxu0
    %v1554 = vadd.f32 %v1421, %v1553
    %v1555 = vpop.f32.mrf.mxu0
    %v1556 = vpop.f32.mrf.mxu0
    %v1557 = vpop.f32.mrf.mxu0
    %1558 = vdwg.mxu0
    %v1559 = vmax.f32 %v1554, 0.0
    %v1560 = vpack.c.bf16 %v1559, %v1559
    %v1561 = vld [vmem:[#allocation11] sm:$0xf]
    %v1562 = vld [vmem:[#allocation11 + $0x4] sm:$0xf]
    %v1563 = vld [vmem:[#allocation11 + $0x8] sm:$0xf]
    %v1564 = vld [vmem:[#allocation11 + $0xc] sm:$0xf]
    %v1565 = vld [vmem:[#allocation11 + $0x10] sm:$0xf]
    %v1566 = vld [vmem:[#allocation11 + $0x14] sm:$0xf]
    %v1567 = vld [vmem:[#allocation11 + $0x18] sm:$0xf]
    %v1568 = vld [vmem:[#allocation11 + $0x1c] sm:$0xf]
    %v1569 = vld [vmem:[#allocation11 + $0x20] sm:$0xf]
    %v1570 = vld [vmem:[#allocation11 + $0x24] sm:$0xf]
    %v1571 = vld [vmem:[#allocation11 + $0x28] sm:$0xf]
    %v1572 = vld [vmem:[#allocation11 + $0x2c] sm:$0xf]
    %v1573 = vld [vmem:[#allocation11 + $0x30] sm:$0xf]
    %v1574 = vld [vmem:[#allocation11 + $0x34] sm:$0xf]
    %v1575 = vld [vmem:[#allocation11 + $0x38] sm:$0xf]
    %v1576 = vld [vmem:[#allocation11 + $0x3c] sm:$0xf]
    %v1577 = vld [vmem:[%s8] sm:$0x1]
    %v1579 = vlaneseq
    %v1580 = vshrl.u32 %v1579, 7
    %v1581 = vsub.s32 0, %v1580
    %v1582 = vrot.slane %v1577, %v1581
    %v1600 = vunpack.c.l.b16 %v1561
    %v1601 = vunpack.c.l.b16 %v1562
    %v1602 = vunpack.c.l.b16 %v1563
    %v1603 = vunpack.c.l.b16 %v1564
    %v1604 = vunpack.c.l.b16 %v1565
    %v1605 = vunpack.c.l.b16 %v1566
    %v1606 = vunpack.c.l.b16 %v1567
    %v1607 = vunpack.c.l.b16 %v1568
    %v1608 = vunpack.c.l.b16 %v1569
    %v1609 = vunpack.c.l.b16 %v1570
    %v1610 = vunpack.c.l.b16 %v1571
    %v1611 = vunpack.c.l.b16 %v1572
    %v1612 = vunpack.c.l.b16 %v1573
    %v1613 = vunpack.c.l.b16 %v1574
    %v1614 = vunpack.c.l.b16 %v1575
    %v1615 = vunpack.c.l.b16 %v1576
    %v1616 = vpack.c.b16 %v1601, %v1600
    %v1617 = vpack.c.b16 %v1603, %v1602
    %v1618 = vpack.c.b16 %v1605, %v1604
    %v1619 = vpack.c.b16 %v1607, %v1606
    %v1620 = vpack.c.b16 %v1609, %v1608
    %v1621 = vpack.c.b16 %v1611, %v1610
    %v1622 = vpack.c.b16 %v1613, %v1612
    %v1623 = vpack.c.b16 %v1615, %v1614
    %1632 = vmatprep.subr.bf16.mxu0 0
    %1633 = vmatpush1.bf16.msra.mxu0 %v1623
    %1634 = vmatprep.subr.bf16.mxu0 0
    %1635 = vmatpush1.bf16.msra.mxu0 %v1622
    %1636 = vmatprep.subr.bf16.mxu0 0
    %1637 = vmatpush1.bf16.msra.mxu0 %v1621
    %1638 = vmatprep.subr.bf16.mxu0 0
    %1639 = vmatpush1.bf16.msra.mxu0 %v1620
    %1640 = vmatprep.subr.bf16.mxu0 0
    %1641 = vmatpush1.bf16.msra.mxu0 %v1619
    %1642 = vmatprep.subr.bf16.mxu0 0
    %1643 = vmatpush1.bf16.msra.mxu0 %v1618
    %1644 = vmatprep.subr.bf16.mxu0 0
    %1645 = vmatpush1.bf16.msra.mxu0 %v1617
    %1646 = vmatprep.subr.bf16.mxu0 0
    %1647 = vmatpush1.bf16.msra.mxu0 %v1616
    %1648 = vmatprep.subr.bf16.mxu0 0
    %1649 = vmatpush2.bf16.msra.mxu0 0
    %1650 = vmatprep.subr.bf16.mxu0 0
    %1651 = vmatpush2.bf16.msra.mxu0 0
    %1652 = vmatprep.subr.bf16.mxu0 0
    %1653 = vmatpush2.bf16.msra.mxu0 0
    %1654 = vmatprep.subr.bf16.mxu0 0
    %1655 = vmatpush2.bf16.msra.mxu0 0
    %1656 = vmatprep.subr.bf16.mxu0 0
    %1657 = vmatpush2.bf16.msra.mxu0 0
    %1658 = vmatprep.subr.bf16.mxu0 0
    %1659 = vmatpush2.bf16.msra.mxu0 0
    %1660 = vmatprep.subr.bf16.mxu0 0
    %1661 = vmatpush2.bf16.msra.mxu0 0
    %1662 = vmatprep.subr.bf16.mxu0 0
    %1663 = vmatpush2.bf16.msra.mxu0 0
    %1664 = vmatprep.mubr.bf16.mxu0 0
    %1665 = vmatmul.mubr.bf16.gmra.mxu0 %v1560
    %v1666 = vpop.f32.mrf.mxu0
    %v1667 = vadd.f32 %v1582, %v1666
    %v1668 = vpop.f32.mrf.mxu0
    %v1669 = vpop.f32.mrf.mxu0
    %v1670 = vpop.f32.mrf.mxu0
    %1671 = vdwg.mxu0
    %1672 = vst [vmem:[#allocation13] sm:$0xff] %v1667
    // Predicated region
    $region62: #{tpu_custom_call.1} parent=1 // pred_check
      _
    $region63: #{tpu_custom_call.1} parent=1 // pred_check_branch
      %1674 = sbr.rel (0) target = $region65
    $region64: #{tpu_custom_call.1} parent=1 // pred_region
      %s1676 = ssub.s32 128, 128
      %1677 = vsyncadd [#allocation4], %s1676
      %s1679 = sshll.u32 [#allocation13], 4
      %s1680 = int_to_ptr.vmem [resolvable:$true] %s1679
      %1682 = dma.vmem_to_hbm [thread:$0]  %s1680, 128, %s9, [#allocation4]
    $region65: #{tpu_custom_call.1} parent=1 // pred_fallthru
      _
    // Predicated region
    $region66: #{tpu_custom_call.1} parent=1 // pred_check
      _
    $region67: #{tpu_custom_call.1} parent=1 // pred_check_branch
      %1684 = sbr.rel (0) target = $region69
    $region68: #{tpu_custom_call.1} parent=1 // pred_region
      %1685 = dma.done [#allocation4], 128
    $region69: #{tpu_custom_call.1} parent=1 // pred_fallthru
      _
    %1686 = vsyncpa [#allocation3], 1
    %1687 = vsyncpa [#allocation6], 1
    %1688 = vsyncpa [#allocation9], 1
    %1689 = vsyncpa [#allocation12], 1
    %1690 = vsyncpa [#allocation4], 1

</llo_original>
